<compile_context>
chip_gen: v5e
topology: v5e:2x2
jax: 0.10.0
libtpu: 0.0.40
codegen_flags: <defaults>
</compile_context>

<pallas_src>
import functools

import jax
import jax.numpy as jnp
from jax.experimental import pallas as pl
from jax.experimental.pallas import tpu as pltpu

VMEM_LIMIT = 32 * 1024 * 1024  # safe scoped-VMEM budget on v5e/v6e/v7x


# ----------------------------------------------------------------------------
# Pallas kernels
# ----------------------------------------------------------------------------

def _encoder_kernel(x_ref, w_ref, b_ref, o_ref):
    # node encoder: h = x @ W + b    (bf16 operands, f32 accumulation)
    y = jnp.dot(x_ref[...], w_ref[...], preferred_element_type=jnp.float32)
    y = y + b_ref[...]
    o_ref[...] = y.astype(o_ref.dtype)


def node_encoder(x, w, b, *, tile_m=128):
    N, K = x.shape
    K2, D = w.shape
    assert K == K2 and N % tile_m == 0
    return pl.pallas_call(
        _encoder_kernel,
        out_shape=jax.ShapeDtypeStruct((N, D), jnp.bfloat16),
        grid=(N // tile_m,),
        in_specs=[
            pl.BlockSpec((tile_m, K), lambda i: (i, 0)),
            pl.BlockSpec((K, D), lambda i: (0, 0)),
            pl.BlockSpec((1, D), lambda i: (0, 0)),
        ],
        out_specs=pl.BlockSpec((tile_m, D), lambda i: (i, 0)),
        compiler_params=pltpu.CompilerParams(
            dimension_semantics=("parallel",),
            vmem_limit_bytes=VMEM_LIMIT),
    )(x, w, b)


def _gin_layer_kernel(a_ref, hk_ref, hres_ref, eps1_ref,
                      w0_ref, b0_ref, w1_ref, b1_ref,
                      bn_s_ref, bn_b_ref, o_ref, acc_ref):
    # Fused GIN layer.
    # grid = (row tiles of h [parallel], column tiles of A [arbitrary])
    k = pl.program_id(1)

    @pl.when(k == 0)
    def _():
        acc_ref[...] = jnp.zeros_like(acc_ref)

    # neighbor 'sum' aggregation: acc += A[i, k] @ h[k]
    acc_ref[...] += jnp.dot(a_ref[...], hk_ref[...],
                            preferred_element_type=jnp.float32)

    @pl.when(k == pl.num_programs(1) - 1)
    def _():
        h_res = hres_ref[...].astype(jnp.float32)
        # GIN combine: (1 + eps) * h + sum_j A_ij h_j
        agg = acc_ref[...] + eps1_ref[...] * h_res
        # MLP layer 0: Linear (+BN folded into w0/b0) + ReLU
        y = jnp.dot(agg.astype(jnp.bfloat16), w0_ref[...],
                    preferred_element_type=jnp.float32) + b0_ref[...]
        y = jnp.maximum(y, 0.0)
        # MLP layer 1: plain Linear
        y = jnp.dot(y.astype(jnp.bfloat16), w1_ref[...],
                    preferred_element_type=jnp.float32) + b1_ref[...]
        # GINLayer epilogue: BN -> ReLU -> residual (dropout identity in eval)
        y = y * bn_s_ref[...] + bn_b_ref[...]
        y = jnp.maximum(y, 0.0) + h_res
        o_ref[...] = y.astype(o_ref.dtype)


def gin_layer(adj, h, layer, *, tile_m=128, tile_k=128):
    N, D = h.shape
    assert adj.shape == (N, N) and N % tile_m == 0 and N % tile_k == 0
    return pl.pallas_call(
        _gin_layer_kernel,
        out_shape=jax.ShapeDtypeStruct((N, D), jnp.bfloat16),
        grid=(N // tile_m, N // tile_k),
        in_specs=[
            pl.BlockSpec((tile_m, tile_k), lambda i, k: (i, k)),  # A tile
            pl.BlockSpec((tile_k, D), lambda i, k: (k, 0)),       # h (reduction view)
            pl.BlockSpec((tile_m, D), lambda i, k: (i, 0)),       # h (residual view)
            pl.BlockSpec((1, D), lambda i, k: (0, 0)),            # (1 + eps) vector
            pl.BlockSpec((D, D), lambda i, k: (0, 0)),            # W0 (BN folded)
            pl.BlockSpec((1, D), lambda i, k: (0, 0)),            # b0
            pl.BlockSpec((D, D), lambda i, k: (0, 0)),            # W1
            pl.BlockSpec((1, D), lambda i, k: (0, 0)),            # b1
            pl.BlockSpec((1, D), lambda i, k: (0, 0)),            # bn scale
            pl.BlockSpec((1, D), lambda i, k: (0, 0)),            # bn shift
        ],
        out_specs=pl.BlockSpec((tile_m, D), lambda i, k: (i, 0)),
        scratch_shapes=[pltpu.VMEM((tile_m, D), jnp.float32)],
        compiler_params=pltpu.CompilerParams(
            dimension_semantics=("parallel", "arbitrary"),
            vmem_limit_bytes=VMEM_LIMIT),
    )(adj, h, h, layer["one_plus_eps"],
      layer["w0"], layer["b0"], layer["w1"], layer["b1"],
      layer["bn_scale"], layer["bn_shift"])


def _head_kernel(p_ref, hcat_ref, w_ref, b_ref, o_ref):
    # score = (P @ [h_0 | ... | h_L]) @ [W_0; ...; W_L] + sum_i b_i
    pooled = jnp.dot(p_ref[...], hcat_ref[...],
                     preferred_element_type=jnp.float32)
    score = jnp.dot(pooled.astype(jnp.bfloat16), w_ref[...],
                    preferred_element_type=jnp.float32)
    o_ref[...] = score + b_ref[...]


def prediction_head(pool_mat, h_cat, w_stack, b_sum):
    G, N = pool_mat.shape
    N2, DC = h_cat.shape
    DC2, C = w_stack.shape
    assert N == N2 and DC == DC2
    return pl.pallas_call(
        _head_kernel,
        out_shape=jax.ShapeDtypeStruct((G, C), jnp.float32),
        in_specs=[
            pl.BlockSpec((G, N), lambda: (0, 0)),
            pl.BlockSpec((N, DC), lambda: (0, 0)),
            pl.BlockSpec((DC, C), lambda: (0, 0)),
            pl.BlockSpec((1, C), lambda: (0, 0)),
        ],
        out_specs=pl.BlockSpec((G, C), lambda: (0, 0)),
        compiler_params=pltpu.CompilerParams(vmem_limit_bytes=VMEM_LIMIT),
    )(pool_mat, h_cat, w_stack, b_sum)


# ----------------------------------------------------------------------------
# Parameter construction (deterministic, synthetic; BN folded in f32)
# ----------------------------------------------------------------------------

def _fold_bn(gamma, beta, running_mean, running_var, eps=1e-5):
    scale = gamma / jnp.sqrt(running_var + eps)
    shift = beta - running_mean * scale
    return scale, shift


def init_params(key, in_dim, hid_dim, n_classes, n_classes_pad, n_layers):
    keys = iter(jax.random.split(key, 128))
    f32, bf16 = jnp.float32, jnp.bfloat16

    def lin(k, fan_in, fan_out):
        kw, kb = jax.random.split(k)
        w = jax.random.normal(kw, (fan_in, fan_out), f32) / jnp.sqrt(float(fan_in))
        b = 0.01 * jax.random.normal(kb, (fan_out,), f32)
        return w, b

    def bn_stats(k):
        k1, k2, k3, k4 = jax.random.split(k, 4)
        g = 1.0 + 0.05 * jax.random.normal(k1, (hid_dim,), f32)
        b = 0.05 * jax.random.normal(k2, (hid_dim,), f32)
        rm = 0.05 * jax.random.normal(k3, (hid_dim,), f32)
        rv = jnp.abs(1.0 + 0.05 * jax.random.normal(k4, (hid_dim,), f32))
        return _fold_bn(g, b, rm, rv)

    p = {}
    w, b = lin(next(keys), in_dim, hid_dim)
    p["enc_w"] = w.astype(bf16)
    p["enc_b"] = b[None, :]

    p["gin_layers"] = []
    for _ in range(n_layers):
        eps0 = 0.0                                    # learn_eps init = 0
        lyr = {"one_plus_eps": jnp.full((1, hid_dim), 1.0 + eps0, f32)}
        # MultiLinearLayer with mlp_layers=2: [Linear+BN+ReLU, Linear]
        w0, b0 = lin(next(keys), hid_dim, hid_dim)
        s0, t0 = bn_stats(next(keys))
        lyr["w0"] = (w0 * s0[None, :]).astype(bf16)   # BN folded into Linear
        lyr["b0"] = (b0 * s0 + t0)[None, :]
        w1, b1 = lin(next(keys), hid_dim, hid_dim)
        lyr["w1"] = w1.astype(bf16)
        lyr["b1"] = b1[None, :]
        s, t = bn_stats(next(keys))                   # GINLayer's own BatchNorm
        lyr["bn_scale"] = s[None, :]
        lyr["bn_shift"] = t[None, :]
        p["gin_layers"].append(lyr)

    # prediction head: vertically stacked weights + summed bias, lane-padded
    ws, bs = [], []
    for _ in range(n_layers + 1):
        w, b = lin(next(keys), hid_dim, n_classes)
        ws.append(w)
        bs.append(b)
    w_stack = jnp.concatenate(ws, axis=0)             # [(L+1)*hid, n_classes]
    w_stack = jnp.pad(w_stack, ((0, 0), (0, n_classes_pad - n_classes)))
    b_sum = jnp.pad(sum(bs), (0, n_classes_pad - n_classes))
    p["pred_w_stack"] = w_stack.astype(bf16)
    p["pred_b_sum"] = b_sum[None, :].astype(f32)
    return p


# ----------------------------------------------------------------------------
# GINNet forward
# ----------------------------------------------------------------------------

@functools.partial(jax.jit, static_argnames=("n_classes", "n_graphs"))
def gin_net_forward(params, adj, pool_mat, x, *, n_classes, n_graphs):
    h = node_encoder(x, params["enc_w"], params["enc_b"])
    hidden_rep = [h]
    for layer in params["gin_layers"]:
        h = gin_layer(adj, h, layer)
        hidden_rep.append(h)
    # collapsed prediction head: one pooled matmul + one stacked matmul
    h_cat = jnp.concatenate(hidden_rep, axis=1)       # [N, (L+1)*hid], bf16
    score_pad = prediction_head(pool_mat, h_cat,
                                params["pred_w_stack"], params["pred_b_sum"])
    return score_pad[:n_graphs, :n_classes]


# ----------------------------------------------------------------------------
# Driver
# ----------------------------------------------------------------------------

if __name__ == "__main__":
    IN_DIM, HID_DIM, N_CLASSES, C_PAD = 16, 128, 8, 128
    N_LAYERS = 2
    NODES_PER_GRAPH, N_GRAPHS, G_PAD = 128, 2, 8
    N = NODES_PER_GRAPH * N_GRAPHS  # 256 nodes (batched block-diagonal graph)

    key = jax.random.PRNGKey(0)
    k_feat, k_adj, k_param = jax.random.split(key, 3)

    # node features [N, in_dim] (bf16 MXU operand)
    x = jax.random.normal(k_feat, (N, IN_DIM), jnp.float32).astype(jnp.bfloat16)

    # block-diagonal symmetric binary adjacency (exact in bf16)
    blocks = []
    akeys = jax.random.split(k_adj, N_GRAPHS)
    for g in range(N_GRAPHS):
        m = (jax.random.uniform(akeys[g], (NODES_PER_GRAPH, NODES_PER_GRAPH))
             < 0.2).astype(jnp.float32)
        m = jnp.triu(m, 1)
        blocks.append(m + m.T)
    adj = jax.scipy.linalg.block_diag(*blocks).astype(jnp.bfloat16)

    # mean-pool matrix [G, N] (1/128 exact in bf16), rows padded to 8 sublanes
    pool_mat = jax.scipy.linalg.block_diag(
        *[jnp.full((1, NODES_PER_GRAPH), 1.0 / NODES_PER_GRAPH)
          for _ in range(N_GRAPHS)])
    pool_mat = jnp.pad(pool_mat, ((0, G_PAD - N_GRAPHS), (0, 0))).astype(jnp.bfloat16)

    params = init_params(k_param, IN_DIM, HID_DIM, N_CLASSES, C_PAD, N_LAYERS)

    out = gin_net_forward(params, adj, pool_mat, x,
                          n_classes=N_CLASSES, n_graphs=N_GRAPHS)
    out = jax.block_until_ready(out)
    assert out.shape == (N_GRAPHS, N_CLASSES)
    assert bool(jnp.all(jnp.isfinite(out)))
    print("KERNEL_OK")
</pallas_src>

<mosaic_0001>
module attributes {stable_mosaic.version = 11 : i64} {
  func.func @_gin_layer_kernel(%arg0: i32, %arg1: i32, %arg2: memref<128x128xbf16, #tpu.memory_space<vmem>>, %arg3: memref<128x128xbf16, #tpu.memory_space<vmem>>, %arg4: memref<128x128xbf16, #tpu.memory_space<vmem>>, %arg5: memref<1x128xf32, #tpu.memory_space<vmem>>, %arg6: memref<128x128xbf16, #tpu.memory_space<vmem>>, %arg7: memref<1x128xf32, #tpu.memory_space<vmem>>, %arg8: memref<128x128xbf16, #tpu.memory_space<vmem>>, %arg9: memref<1x128xf32, #tpu.memory_space<vmem>>, %arg10: memref<1x128xf32, #tpu.memory_space<vmem>>, %arg11: memref<1x128xf32, #tpu.memory_space<vmem>>, %arg12: memref<128x128xbf16, #tpu.memory_space<vmem>>, %arg13: memref<128x128xf32, #tpu.memory_space<vmem>>) attributes {dimension_semantics = [#tpu.dimension_semantics<parallel>, #tpu.dimension_semantics<arbitrary>], iteration_bounds = array<i64: 2, 2>, scalar_prefetch = 0 : i64, scratch_operands = 1 : i64, tpu.core_type = #tpu.core_type<tc>, window_params = [{transform_indices = @transform_0, window_bounds = array<i64: 128, 128>}, {transform_indices = @transform_1, window_bounds = array<i64: 128, 128>}, {transform_indices = @transform_2, window_bounds = array<i64: 128, 128>}, {pipeline_mode = #tpu.pipeline_mode<synchronous>, transform_indices = @transform_3, window_bounds = array<i64: 1, 128>}, {pipeline_mode = #tpu.pipeline_mode<synchronous>, transform_indices = @transform_4, window_bounds = array<i64: 128, 128>}, {pipeline_mode = #tpu.pipeline_mode<synchronous>, transform_indices = @transform_5, window_bounds = array<i64: 1, 128>}, {pipeline_mode = #tpu.pipeline_mode<synchronous>, transform_indices = @transform_6, window_bounds = array<i64: 128, 128>}, {pipeline_mode = #tpu.pipeline_mode<synchronous>, transform_indices = @transform_7, window_bounds = array<i64: 1, 128>}, {pipeline_mode = #tpu.pipeline_mode<synchronous>, transform_indices = @transform_8, window_bounds = array<i64: 1, 128>}, {pipeline_mode = #tpu.pipeline_mode<synchronous>, transform_indices = @transform_9, window_bounds = array<i64: 1, 128>}, {transform_indices = @transform_10, window_bounds = array<i64: 128, 128>}]} {
    %c0_i32 = arith.constant 0 : i32
    %0 = arith.cmpi eq, %arg1, %c0_i32 : i32
    %1 = arith.extui %0 : i1 to i32
    %c0_i32_0 = arith.constant 0 : i32
    %2 = arith.cmpi ne, %1, %c0_i32_0 : i32
    scf.if %2 {
      %cst_9 = arith.constant 0.000000e+00 : f32
      %12 = vector.broadcast %cst_9 : f32 to vector<128x128xf32>
      %c0_10 = arith.constant 0 : index
      %c0_11 = arith.constant 0 : index
      %13 = vector.load %arg13[%c0_10, %c0_11] : memref<128x128xf32, #tpu.memory_space<vmem>>, vector<128x128xf32>
      tpu.vector_store %arg13[%c0_10, %c0_11], %12 {strides = array<i32>} : memref<128x128xf32, #tpu.memory_space<vmem>>, vector<128x128xf32>,
    } else {
    }
    %c0 = arith.constant 0 : index
    %c0_1 = arith.constant 0 : index
    %3 = vector.load %arg13[%c0, %c0_1] : memref<128x128xf32, #tpu.memory_space<vmem>>, vector<128x128xf32>
    %c0_2 = arith.constant 0 : index
    %c0_3 = arith.constant 0 : index
    %4 = vector.load %arg2[%c0_2, %c0_3] : memref<128x128xbf16, #tpu.memory_space<vmem>>, vector<128x128xbf16>
    %c0_4 = arith.constant 0 : index
    %c0_5 = arith.constant 0 : index
    %5 = vector.load %arg3[%c0_4, %c0_5] : memref<128x128xbf16, #tpu.memory_space<vmem>>, vector<128x128xbf16>
    %cst = arith.constant dense<0.000000e+00> : vector<128x128xf32>
    %6 = tpu.matmul %4, %5, %cst {dimension_numbers = #tpu.dot_dimension_numbers<[1], [0], [0], [1], [0, 0, 1, 1], [], []>} : vector<128x128xbf16>, vector<128x128xbf16>, vector<128x128xf32> -> vector<128x128xf32>
    %7 = arith.addf %3, %6 : vector<128x128xf32>
    %c0_6 = arith.constant 0 : index
    %c0_7 = arith.constant 0 : index
    %8 = vector.load %arg13[%c0_6, %c0_7] : memref<128x128xf32, #tpu.memory_space<vmem>>, vector<128x128xf32>
    tpu.vector_store %arg13[%c0_6, %c0_7], %7 {strides = array<i32>} : memref<128x128xf32, #tpu.memory_space<vmem>>, vector<128x128xf32>,
    %c1_i32 = arith.constant 1 : i32
    %9 = arith.cmpi eq, %arg1, %c1_i32 : i32
    %10 = arith.extui %9 : i1 to i32
    %c0_i32_8 = arith.constant 0 : i32
    %11 = arith.cmpi ne, %10, %c0_i32_8 : i32
    scf.if %11 {
      %c0_9 = arith.constant 0 : index
      %c0_10 = arith.constant 0 : index
      %12 = vector.load %arg4[%c0_9, %c0_10] : memref<128x128xbf16, #tpu.memory_space<vmem>>, vector<128x128xbf16>
      %13 = arith.extf %12 : vector<128x128xbf16> to vector<128x128xf32>
      %c0_11 = arith.constant 0 : index
      %c0_12 = arith.constant 0 : index
      %14 = vector.load %arg13[%c0_11, %c0_12] : memref<128x128xf32, #tpu.memory_space<vmem>>, vector<128x128xf32>
      %c0_13 = arith.constant 0 : index
      %c0_14 = arith.constant 0 : index
      %15 = vector.load %arg5[%c0_13, %c0_14] : memref<1x128xf32, #tpu.memory_space<vmem>>, vector<1x128xf32>
      %16 = vector.broadcast %15 : vector<1x128xf32> to vector<128x128xf32>
      %17 = arith.mulf %16, %13 : vector<128x128xf32>
      %18 = arith.addf %14, %17 : vector<128x128xf32>
      %19 = arith.truncf %18 : vector<128x128xf32> to vector<128x128xbf16>
      %c0_15 = arith.constant 0 : index
      %c0_16 = arith.constant 0 : index
      %20 = vector.load %arg6[%c0_15, %c0_16] : memref<128x128xbf16, #tpu.memory_space<vmem>>, vector<128x128xbf16>
      %cst_17 = arith.constant dense<0.000000e+00> : vector<128x128xf32>
      %21 = tpu.matmul %19, %20, %cst_17 {dimension_numbers = #tpu.dot_dimension_numbers<[1], [0], [0], [1], [0, 0, 1, 1], [], []>} : vector<128x128xbf16>, vector<128x128xbf16>, vector<128x128xf32> -> vector<128x128xf32>
      %c0_18 = arith.constant 0 : index
      %c0_19 = arith.constant 0 : index
      %22 = vector.load %arg7[%c0_18, %c0_19] : memref<1x128xf32, #tpu.memory_space<vmem>>, vector<1x128xf32>
      %23 = vector.broadcast %22 : vector<1x128xf32> to vector<128x128xf32>
      %24 = arith.addf %21, %23 : vector<128x128xf32>
      %cst_20 = arith.constant 0.000000e+00 : f32
      %25 = vector.broadcast %cst_20 : f32 to vector<128x128xf32>
      %26 = arith.maximumf %24, %25 : vector<128x128xf32>
      %27 = arith.truncf %26 : vector<128x128xf32> to vector<128x128xbf16>
      %c0_21 = arith.constant 0 : index
      %c0_22 = arith.constant 0 : index
      %28 = vector.load %arg8[%c0_21, %c0_22] : memref<128x128xbf16, #tpu.memory_space<vmem>>, vector<128x128xbf16>
      %cst_23 = arith.constant dense<0.000000e+00> : vector<128x128xf32>
      %29 = tpu.matmul %27, %28, %cst_23 {dimension_numbers = #tpu.dot_dimension_numbers<[1], [0], [0], [1], [0, 0, 1, 1], [], []>} : vector<128x128xbf16>, vector<128x128xbf16>, vector<128x128xf32> -> vector<128x128xf32>
      %c0_24 = arith.constant 0 : index
      %c0_25 = arith.constant 0 : index
      %30 = vector.load %arg9[%c0_24, %c0_25] : memref<1x128xf32, #tpu.memory_space<vmem>>, vector<1x128xf32>
      %31 = vector.broadcast %30 : vector<1x128xf32> to vector<128x128xf32>
      %32 = arith.addf %29, %31 : vector<128x128xf32>
      %c0_26 = arith.constant 0 : index
      %c0_27 = arith.constant 0 : index
      %33 = vector.load %arg10[%c0_26, %c0_27] : memref<1x128xf32, #tpu.memory_space<vmem>>, vector<1x128xf32>
      %34 = vector.broadcast %33 : vector<1x128xf32> to vector<128x128xf32>
      %35 = arith.mulf %32, %34 : vector<128x128xf32>
      %c0_28 = arith.constant 0 : index
      %c0_29 = arith.constant 0 : index
      %36 = vector.load %arg11[%c0_28, %c0_29] : memref<1x128xf32, #tpu.memory_space<vmem>>, vector<1x128xf32>
      %37 = vector.broadcast %36 : vector<1x128xf32> to vector<128x128xf32>
      %38 = arith.addf %35, %37 : vector<128x128xf32>
      %cst_30 = arith.constant 0.000000e+00 : f32
      %39 = vector.broadcast %cst_30 : f32 to vector<128x128xf32>
      %40 = arith.maximumf %38, %39 : vector<128x128xf32>
      %41 = arith.addf %40, %13 : vector<128x128xf32>
      %42 = arith.truncf %41 : vector<128x128xf32> to vector<128x128xbf16>
      %c0_31 = arith.constant 0 : index
      %c0_32 = arith.constant 0 : index
      %43 = vector.load %arg12[%c0_31, %c0_32] : memref<128x128xbf16, #tpu.memory_space<vmem>>, vector<128x128xbf16>
      tpu.vector_store %arg12[%c0_31, %c0_32], %42 {strides = array<i32>} : memref<128x128xbf16, #tpu.memory_space<vmem>>, vector<128x128xbf16>,
    } else {
    }
    return
  }
  func.func @transform_0(%arg0: i32, %arg1: i32) -> (i32, i32) {
    %c0_i32 = arith.constant 0 : i32
    return %arg0, %arg1 : i32, i32
  }
  func.func @transform_1(%arg0: i32, %arg1: i32) -> (i32, i32) {
    %c0_i32 = arith.constant 0 : i32
    %c0_i32_0 = arith.constant 0 : i32
    return %arg1, %c0_i32 : i32, i32
  }
  func.func @transform_2(%arg0: i32, %arg1: i32) -> (i32, i32) {
    %c0_i32 = arith.constant 0 : i32
    %c0_i32_0 = arith.constant 0 : i32
    return %arg0, %c0_i32 : i32, i32
  }
  func.func @transform_3(%arg0: i32, %arg1: i32) -> (i32, i32) {
    %c0_i32 = arith.constant 0 : i32
    %c0_i32_0 = arith.constant 0 : i32
    %c0_i32_1 = arith.constant 0 : i32
    return %c0_i32, %c0_i32_0 : i32, i32
  }
  func.func @transform_4(%arg0: i32, %arg1: i32) -> (i32, i32) {
    %c0_i32 = arith.constant 0 : i32
    %c0_i32_0 = arith.constant 0 : i32
    %c0_i32_1 = arith.constant 0 : i32
    return %c0_i32, %c0_i32_0 : i32, i32
  }
  func.func @transform_5(%arg0: i32, %arg1: i32) -> (i32, i32) {
    %c0_i32 = arith.constant 0 : i32
    %c0_i32_0 = arith.constant 0 : i32
    %c0_i32_1 = arith.constant 0 : i32
    return %c0_i32, %c0_i32_0 : i32, i32
  }
  func.func @transform_6(%arg0: i32, %arg1: i32) -> (i32, i32) {
    %c0_i32 = arith.constant 0 : i32
    %c0_i32_0 = arith.constant 0 : i32
    %c0_i32_1 = arith.constant 0 : i32
    return %c0_i32, %c0_i32_0 : i32, i32
  }
  func.func @transform_7(%arg0: i32, %arg1: i32) -> (i32, i32) {
    %c0_i32 = arith.constant 0 : i32
    %c0_i32_0 = arith.constant 0 : i32
    %c0_i32_1 = arith.constant 0 : i32
    return %c0_i32, %c0_i32_0 : i32, i32
  }
  func.func @transform_8(%arg0: i32, %arg1: i32) -> (i32, i32) {
    %c0_i32 = arith.constant 0 : i32
    %c0_i32_0 = arith.constant 0 : i32
    %c0_i32_1 = arith.constant 0 : i32
    return %c0_i32, %c0_i32_0 : i32, i32
  }
  func.func @transform_9(%arg0: i32, %arg1: i32) -> (i32, i32) {
    %c0_i32 = arith.constant 0 : i32
    %c0_i32_0 = arith.constant 0 : i32
    %c0_i32_1 = arith.constant 0 : i32
    return %c0_i32, %c0_i32_0 : i32, i32
  }
  func.func @transform_10(%arg0: i32, %arg1: i32) -> (i32, i32) {
    %c0_i32 = arith.constant 0 : i32
    %c0_i32_0 = arith.constant 0 : i32
    return %arg0, %c0_i32 : i32, i32
  }
}

module attributes {stable_mosaic.version = 11 : i64} {
  func.func @_gin_layer_kernel(%arg0: i32, %arg1: i32, %arg2: memref<128x128xbf16, #tpu.memory_space<vmem>>, %arg3: memref<128x128xbf16, #tpu.memory_space<vmem>>, %arg4: memref<128x128xbf16, #tpu.memory_space<vmem>>, %arg5: memref<1x128xf32, #tpu.memory_space<vmem>>, %arg6: memref<128x128xbf16, #tpu.memory_space<vmem>>, %arg7: memref<1x128xf32, #tpu.memory_space<vmem>>, %arg8: memref<128x128xbf16, #tpu.memory_space<vmem>>, %arg9: memref<1x128xf32, #tpu.memory_space<vmem>>, %arg10: memref<1x128xf32, #tpu.memory_space<vmem>>, %arg11: memref<1x128xf32, #tpu.memory_space<vmem>>, %arg12: memref<128x128xbf16, #tpu.memory_space<vmem>>, %arg13: memref<128x128xf32, #tpu.memory_space<vmem>>) attributes {dimension_semantics = [#tpu.dimension_semantics<parallel>, #tpu.dimension_semantics<arbitrary>], iteration_bounds = array<i64: 2, 2>, scalar_prefetch = 0 : i64, scratch_operands = 1 : i64, tpu.core_type = #tpu.core_type<tc>, window_params = [{transform_indices = @transform_0, window_bounds = array<i64: 128, 128>}, {transform_indices = @transform_1, window_bounds = array<i64: 128, 128>}, {transform_indices = @transform_2, window_bounds = array<i64: 128, 128>}, {pipeline_mode = #tpu.pipeline_mode<synchronous>, transform_indices = @transform_3, window_bounds = array<i64: 1, 128>}, {pipeline_mode = #tpu.pipeline_mode<synchronous>, transform_indices = @transform_4, window_bounds = array<i64: 128, 128>}, {pipeline_mode = #tpu.pipeline_mode<synchronous>, transform_indices = @transform_5, window_bounds = array<i64: 1, 128>}, {pipeline_mode = #tpu.pipeline_mode<synchronous>, transform_indices = @transform_6, window_bounds = array<i64: 128, 128>}, {pipeline_mode = #tpu.pipeline_mode<synchronous>, transform_indices = @transform_7, window_bounds = array<i64: 1, 128>}, {pipeline_mode = #tpu.pipeline_mode<synchronous>, transform_indices = @transform_8, window_bounds = array<i64: 1, 128>}, {pipeline_mode = #tpu.pipeline_mode<synchronous>, transform_indices = @transform_9, window_bounds = array<i64: 1, 128>}, {transform_indices = @transform_10, window_bounds = array<i64: 128, 128>}]} {
    %c0_i32 = arith.constant 0 : i32
    %0 = arith.cmpi eq, %arg1, %c0_i32 : i32
    %1 = arith.extui %0 : i1 to i32
    %c0_i32_0 = arith.constant 0 : i32
    %2 = arith.cmpi ne, %1, %c0_i32_0 : i32
    scf.if %2 {
      %cst_9 = arith.constant 0.000000e+00 : f32
      %12 = vector.broadcast %cst_9 : f32 to vector<128x128xf32>
      %c0_10 = arith.constant 0 : index
      %c0_11 = arith.constant 0 : index
      %13 = vector.load %arg13[%c0_10, %c0_11] : memref<128x128xf32, #tpu.memory_space<vmem>>, vector<128x128xf32>
      tpu.vector_store %arg13[%c0_10, %c0_11], %12 {strides = array<i32>} : memref<128x128xf32, #tpu.memory_space<vmem>>, vector<128x128xf32>,
    } else {
    }
    %c0 = arith.constant 0 : index
    %c0_1 = arith.constant 0 : index
    %3 = vector.load %arg13[%c0, %c0_1] : memref<128x128xf32, #tpu.memory_space<vmem>>, vector<128x128xf32>
    %c0_2 = arith.constant 0 : index
    %c0_3 = arith.constant 0 : index
    %4 = vector.load %arg2[%c0_2, %c0_3] : memref<128x128xbf16, #tpu.memory_space<vmem>>, vector<128x128xbf16>
    %c0_4 = arith.constant 0 : index
    %c0_5 = arith.constant 0 : index
    %5 = vector.load %arg3[%c0_4, %c0_5] : memref<128x128xbf16, #tpu.memory_space<vmem>>, vector<128x128xbf16>
    %cst = arith.constant dense<0.000000e+00> : vector<128x128xf32>
    %6 = tpu.matmul %4, %5, %cst {dimension_numbers = #tpu.dot_dimension_numbers<[1], [0], [0], [1], [0, 0, 1, 1], [], []>} : vector<128x128xbf16>, vector<128x128xbf16>, vector<128x128xf32> -> vector<128x128xf32>
    %7 = arith.addf %3, %6 : vector<128x128xf32>
    %c0_6 = arith.constant 0 : index
    %c0_7 = arith.constant 0 : index
    %8 = vector.load %arg13[%c0_6, %c0_7] : memref<128x128xf32, #tpu.memory_space<vmem>>, vector<128x128xf32>
    tpu.vector_store %arg13[%c0_6, %c0_7], %7 {strides = array<i32>} : memref<128x128xf32, #tpu.memory_space<vmem>>, vector<128x128xf32>,
    %c1_i32 = arith.constant 1 : i32
    %9 = arith.cmpi eq, %arg1, %c1_i32 : i32
    %10 = arith.extui %9 : i1 to i32
    %c0_i32_8 = arith.constant 0 : i32
    %11 = arith.cmpi ne, %10, %c0_i32_8 : i32
    scf.if %11 {
      %c0_9 = arith.constant 0 : index
      %c0_10 = arith.constant 0 : index
      %12 = vector.load %arg4[%c0_9, %c0_10] : memref<128x128xbf16, #tpu.memory_space<vmem>>, vector<128x128xbf16>
      %13 = arith.extf %12 : vector<128x128xbf16> to vector<128x128xf32>
      %c0_11 = arith.constant 0 : index
      %c0_12 = arith.constant 0 : index
      %14 = vector.load %arg13[%c0_11, %c0_12] : memref<128x128xf32, #tpu.memory_space<vmem>>, vector<128x128xf32>
      %c0_13 = arith.constant 0 : index
      %c0_14 = arith.constant 0 : index
      %15 = vector.load %arg5[%c0_13, %c0_14] : memref<1x128xf32, #tpu.memory_space<vmem>>, vector<1x128xf32>
      %16 = vector.broadcast %15 : vector<1x128xf32> to vector<128x128xf32>
      %17 = arith.mulf %16, %13 : vector<128x128xf32>
      %18 = arith.addf %14, %17 : vector<128x128xf32>
      %19 = arith.truncf %18 : vector<128x128xf32> to vector<128x128xbf16>
      %c0_15 = arith.constant 0 : index
      %c0_16 = arith.constant 0 : index
      %20 = vector.load %arg6[%c0_15, %c0_16] : memref<128x128xbf16, #tpu.memory_space<vmem>>, vector<128x128xbf16>
      %cst_17 = arith.constant dense<0.000000e+00> : vector<128x128xf32>
      %21 = tpu.matmul %19, %20, %cst_17 {dimension_numbers = #tpu.dot_dimension_numbers<[1], [0], [0], [1], [0, 0, 1, 1], [], []>} : vector<128x128xbf16>, vector<128x128xbf16>, vector<128x128xf32> -> vector<128x128xf32>
      %c0_18 = arith.constant 0 : index
      %c0_19 = arith.constant 0 : index
      %22 = vector.load %arg7[%c0_18, %c0_19] : memref<1x128xf32, #tpu.memory_space<vmem>>, vector<1x128xf32>
      %23 = vector.broadcast %22 : vector<1x128xf32> to vector<128x128xf32>
      %24 = arith.addf %21, %23 : vector<128x128xf32>
      %cst_20 = arith.constant 0.000000e+00 : f32
      %25 = vector.broadcast %cst_20 : f32 to vector<128x128xf32>
      %26 = arith.maximumf %24, %25 : vector<128x128xf32>
      %27 = arith.truncf %26 : vector<128x128xf32> to vector<128x128xbf16>
      %c0_21 = arith.constant 0 : index
      %c0_22 = arith.constant 0 : index
      %28 = vector.load %arg8[%c0_21, %c0_22] : memref<128x128xbf16, #tpu.memory_space<vmem>>, vector<128x128xbf16>
      %cst_23 = arith.constant dense<0.000000e+00> : vector<128x128xf32>
      %29 = tpu.matmul %27, %28, %cst_23 {dimension_numbers = #tpu.dot_dimension_numbers<[1], [0], [0], [1], [0, 0, 1, 1], [], []>} : vector<128x128xbf16>, vector<128x128xbf16>, vector<128x128xf32> -> vector<128x128xf32>
      %c0_24 = arith.constant 0 : index
      %c0_25 = arith.constant 0 : index
      %30 = vector.load %arg9[%c0_24, %c0_25] : memref<1x128xf32, #tpu.memory_space<vmem>>, vector<1x128xf32>
      %31 = vector.broadcast %30 : vector<1x128xf32> to vector<128x128xf32>
      %32 = arith.addf %29, %31 : vector<128x128xf32>
      %c0_26 = arith.constant 0 : index
      %c0_27 = arith.constant 0 : index
      %33 = vector.load %arg10[%c0_26, %c0_27] : memref<1x128xf32, #tpu.memory_space<vmem>>, vector<1x128xf32>
      %34 = vector.broadcast %33 : vector<1x128xf32> to vector<128x128xf32>
      %35 = arith.mulf %32, %34 : vector<128x128xf32>
      %c0_28 = arith.constant 0 : index
      %c0_29 = arith.constant 0 : index
      %36 = vector.load %arg11[%c0_28, %c0_29] : memref<1x128xf32, #tpu.memory_space<vmem>>, vector<1x128xf32>
      %37 = vector.broadcast %36 : vector<1x128xf32> to vector<128x128xf32>
      %38 = arith.addf %35, %37 : vector<128x128xf32>
      %cst_30 = arith.constant 0.000000e+00 : f32
      %39 = vector.broadcast %cst_30 : f32 to vector<128x128xf32>
      %40 = arith.maximumf %38, %39 : vector<128x128xf32>
      %41 = arith.addf %40, %13 : vector<128x128xf32>
      %42 = arith.truncf %41 : vector<128x128xf32> to vector<128x128xbf16>
      %c0_31 = arith.constant 0 : index
      %c0_32 = arith.constant 0 : index
      %43 = vector.load %arg12[%c0_31, %c0_32] : memref<128x128xbf16, #tpu.memory_space<vmem>>, vector<128x128xbf16>
      tpu.vector_store %arg12[%c0_31, %c0_32], %42 {strides = array<i32>} : memref<128x128xbf16, #tpu.memory_space<vmem>>, vector<128x128xbf16>,
    } else {
    }
    return
  }
  func.func @transform_0(%arg0: i32, %arg1: i32) -> (i32, i32) {
    %c0_i32 = arith.constant 0 : i32
    return %arg0, %arg1 : i32, i32
  }
  func.func @transform_1(%arg0: i32, %arg1: i32) -> (i32, i32) {
    %c0_i32 = arith.constant 0 : i32
    %c0_i32_0 = arith.constant 0 : i32
    return %arg1, %c0_i32 : i32, i32
  }
  func.func @transform_2(%arg0: i32, %arg1: i32) -> (i32, i32) {
    %c0_i32 = arith.constant 0 : i32
    %c0_i32_0 = arith.constant 0 : i32
    return %arg0, %c0_i32 : i32, i32
  }
  func.func @transform_3(%arg0: i32, %arg1: i32) -> (i32, i32) {
    %c0_i32 = arith.constant 0 : i32
    %c0_i32_0 = arith.constant 0 : i32
    %c0_i32_1 = arith.constant 0 : i32
    return %c0_i32, %c0_i32_0 : i32, i32
  }
  func.func @transform_4(%arg0: i32, %arg1: i32) -> (i32, i32) {
    %c0_i32 = arith.constant 0 : i32
    %c0_i32_0 = arith.constant 0 : i32
    %c0_i32_1 = arith.constant 0 : i32
    return %c0_i32, %c0_i32_0 : i32, i32
  }
  func.func @transform_5(%arg0: i32, %arg1: i32) -> (i32, i32) {
    %c0_i32 = arith.constant 0 : i32
    %c0_i32_0 = arith.constant 0 : i32
    %c0_i32_1 = arith.constant 0 : i32
    return %c0_i32, %c0_i32_0 : i32, i32
  }
  func.func @transform_6(%arg0: i32, %arg1: i32) -> (i32, i32) {
    %c0_i32 = arith.constant 0 : i32
    %c0_i32_0 = arith.constant 0 : i32
    %c0_i32_1 = arith.constant 0 : i32
    return %c0_i32, %c0_i32_0 : i32, i32
  }
  func.func @transform_7(%arg0: i32, %arg1: i32) -> (i32, i32) {
    %c0_i32 = arith.constant 0 : i32
    %c0_i32_0 = arith.constant 0 : i32
    %c0_i32_1 = arith.constant 0 : i32
    return %c0_i32, %c0_i32_0 : i32, i32
  }
  func.func @transform_8(%arg0: i32, %arg1: i32) -> (i32, i32) {
    %c0_i32 = arith.constant 0 : i32
    %c0_i32_0 = arith.constant 0 : i32
    %c0_i32_1 = arith.constant 0 : i32
    return %c0_i32, %c0_i32_0 : i32, i32
  }
  func.func @transform_9(%arg0: i32, %arg1: i32) -> (i32, i32) {
    %c0_i32 = arith.constant 0 : i32
    %c0_i32_0 = arith.constant 0 : i32
    %c0_i32_1 = arith.constant 0 : i32
    return %c0_i32, %c0_i32_0 : i32, i32
  }
  func.func @transform_10(%arg0: i32, %arg1: i32) -> (i32, i32) {
    %c0_i32 = arith.constant 0 : i32
    %c0_i32_0 = arith.constant 0 : i32
    return %arg0, %c0_i32 : i32, i32
  }
}

module attributes {stable_mosaic.version = 11 : i64} {
  func.func @_encoder_kernel(%arg0: i32, %arg1: memref<128x16xbf16, #tpu.memory_space<vmem>>, %arg2: memref<16x128xbf16, #tpu.memory_space<vmem>>, %arg3: memref<1x128xf32, #tpu.memory_space<vmem>>, %arg4: memref<128x128xbf16, #tpu.memory_space<vmem>>) attributes {dimension_semantics = [#tpu.dimension_semantics<parallel>], iteration_bounds = array<i64: 2>, scalar_prefetch = 0 : i64, scratch_operands = 0 : i64, tpu.core_type = #tpu.core_type<tc>, window_params = [{transform_indices = @transform_0, window_bounds = array<i64: 128, 16>}, {pipeline_mode = #tpu.pipeline_mode<synchronous>, transform_indices = @transform_1, window_bounds = array<i64: 16, 128>}, {pipeline_mode = #tpu.pipeline_mode<synchronous>, transform_indices = @transform_2, window_bounds = array<i64: 1, 128>}, {transform_indices = @transform_3, window_bounds = array<i64: 128, 128>}]} {
    %c0 = arith.constant 0 : index
    %c0_0 = arith.constant 0 : index
    %0 = vector.load %arg1[%c0, %c0_0] : memref<128x16xbf16, #tpu.memory_space<vmem>>, vector<128x16xbf16>
    %c0_1 = arith.constant 0 : index
    %c0_2 = arith.constant 0 : index
    %1 = vector.load %arg2[%c0_1, %c0_2] : memref<16x128xbf16, #tpu.memory_space<vmem>>, vector<16x128xbf16>
    %cst = arith.constant dense<0.000000e+00> : vector<128x128xf32>
    %2 = tpu.matmul %0, %1, %cst {dimension_numbers = #tpu.dot_dimension_numbers<[1], [0], [0], [1], [0, 0, 1, 1], [], []>} : vector<128x16xbf16>, vector<16x128xbf16>, vector<128x128xf32> -> vector<128x128xf32>
    %c0_3 = arith.constant 0 : index
    %c0_4 = arith.constant 0 : index
    %3 = vector.load %arg3[%c0_3, %c0_4] : memref<1x128xf32, #tpu.memory_space<vmem>>, vector<1x128xf32>
    %4 = vector.broadcast %3 : vector<1x128xf32> to vector<128x128xf32>
    %5 = arith.addf %2, %4 : vector<128x128xf32>
    %6 = arith.truncf %5 : vector<128x128xf32> to vector<128x128xbf16>
    %c0_5 = arith.constant 0 : index
    %c0_6 = arith.constant 0 : index
    %7 = vector.load %arg4[%c0_5, %c0_6] : memref<128x128xbf16, #tpu.memory_space<vmem>>, vector<128x128xbf16>
    tpu.vector_store %arg4[%c0_5, %c0_6], %6 {strides = array<i32>} : memref<128x128xbf16, #tpu.memory_space<vmem>>, vector<128x128xbf16>,
    return
  }
  func.func @transform_0(%arg0: i32) -> (i32, i32) {
    %c0_i32 = arith.constant 0 : i32
    %c0_i32_0 = arith.constant 0 : i32
    return %arg0, %c0_i32 : i32, i32
  }
  func.func @transform_1(%arg0: i32) -> (i32, i32) {
    %c0_i32 = arith.constant 0 : i32
    %c0_i32_0 = arith.constant 0 : i32
    %c0_i32_1 = arith.constant 0 : i32
    return %c0_i32, %c0_i32_0 : i32, i32
  }
  func.func @transform_2(%arg0: i32) -> (i32, i32) {
    %c0_i32 = arith.constant 0 : i32
    %c0_i32_0 = arith.constant 0 : i32
    %c0_i32_1 = arith.constant 0 : i32
    return %c0_i32, %c0_i32_0 : i32, i32
  }
  func.func @transform_3(%arg0: i32) -> (i32, i32) {
    %c0_i32 = arith.constant 0 : i32
    %c0_i32_0 = arith.constant 0 : i32
    return %arg0, %c0_i32 : i32, i32
  }
}

module attributes {stable_mosaic.version = 11 : i64} {
  func.func @_head_kernel(%arg0: memref<8x256xbf16, #tpu.memory_space<vmem>>, %arg1: memref<256x384xbf16, #tpu.memory_space<vmem>>, %arg2: memref<384x128xbf16, #tpu.memory_space<vmem>>, %arg3: memref<1x128xf32, #tpu.memory_space<vmem>>, %arg4: memref<8x128xf32, #tpu.memory_space<vmem>>) attributes {dimension_semantics = [], scalar_prefetch = 0 : i64, scratch_operands = 0 : i64, tpu.core_type = #tpu.core_type<tc>} {
    %c0 = arith.constant 0 : index
    %c0_0 = arith.constant 0 : index
    %0 = vector.load %arg0[%c0, %c0_0] : memref<8x256xbf16, #tpu.memory_space<vmem>>, vector<8x256xbf16>
    %c0_1 = arith.constant 0 : index
    %c0_2 = arith.constant 0 : index
    %1 = vector.load %arg1[%c0_1, %c0_2] : memref<256x384xbf16, #tpu.memory_space<vmem>>, vector<256x384xbf16>
    %cst = arith.constant dense<0.000000e+00> : vector<8x384xf32>
    %2 = tpu.matmul %0, %1, %cst {dimension_numbers = #tpu.dot_dimension_numbers<[1], [0], [0], [1], [0, 0, 1, 1], [], []>} : vector<8x256xbf16>, vector<256x384xbf16>, vector<8x384xf32> -> vector<8x384xf32>
    %3 = arith.truncf %2 : vector<8x384xf32> to vector<8x384xbf16>
    %c0_3 = arith.constant 0 : index
    %c0_4 = arith.constant 0 : index
    %4 = vector.load %arg2[%c0_3, %c0_4] : memref<384x128xbf16, #tpu.memory_space<vmem>>, vector<384x128xbf16>
    %cst_5 = arith.constant dense<0.000000e+00> : vector<8x128xf32>
    %5 = tpu.matmul %3, %4, %cst_5 {dimension_numbers = #tpu.dot_dimension_numbers<[1], [0], [0], [1], [0, 0, 1, 1], [], []>} : vector<8x384xbf16>, vector<384x128xbf16>, vector<8x128xf32> -> vector<8x128xf32>
    %c0_6 = arith.constant 0 : index
    %c0_7 = arith.constant 0 : index
    %6 = vector.load %arg3[%c0_6, %c0_7] : memref<1x128xf32, #tpu.memory_space<vmem>>, vector<1x128xf32>
    %7 = vector.broadcast %6 : vector<1x128xf32> to vector<8x128xf32>
    %8 = arith.addf %5, %7 : vector<8x128xf32>
    %c0_8 = arith.constant 0 : index
    %c0_9 = arith.constant 0 : index
    %9 = vector.load %arg4[%c0_8, %c0_9] : memref<8x128xf32, #tpu.memory_space<vmem>>, vector<8x128xf32>
    tpu.vector_store %arg4[%c0_8, %c0_9], %8 {strides = array<i32>} : memref<8x128xf32, #tpu.memory_space<vmem>>, vector<8x128xf32>,
    return
  }
}

</mosaic_0001>

<llo_original>
// kernel: gin_net_forward.4
$region0: #{gin_net_forward.4}
  #allocation0 [shape = 'u32[]', space=smem, size = 0x4, offset = 0x4, fixed_abs, tag = 'smem constant byte address 0x4 - core index']
  #allocation1 [shape = 'u32[72,128]{1,0:T(1,128)}', space=vmem, size = 0x9000, scoped, tag = 'internal scratch']
  %s0 = inlined_call_operand.vmem [shape: bf16[256,16], index: 0, kind: input, shape index: {}]
  %s1 = inlined_call_operand.vmem [shape: bf16[16,128], index: 1, kind: input, shape index: {}]
  %s2 = inlined_call_operand.vmem [shape: f32[1,128], index: 2, kind: input, shape index: {}]
  %s3 = inlined_call_operand.vmem [shape: bf16[256,128], index: 3, kind: output, shape index: {}]
  %s4 = sld [smem:[#allocation0]]
  $region45: #{gin_net_forward.4} parent=0
    _
  %s6 = ssub.s32 1, %s4
  %s7 = scalar_select 0, %s6, %s4
  loop: start=0, step=1, limit=4
  $region2: #{gin_net_forward.4} parent=0 // loop_pre_header
    _
  $region3: #{gin_net_forward.4} parent=0 // loop_header
    %s9 = sphi 0, %s13
    %p10 = scmp.ge.s32.totalorder %s9, 4
    %s19 = sphi 0, %s21
    %s22 = sphi 0, %s19
    %s23 = sphi 0, %s22
    %s39 = sphi 0, %s23
    %s43 = sphi 0, %s43
    %s45 = sphi 0, %s43
    %s46 = sphi 0, %s45
    %s60 = sphi 0, %s46
    %s64 = sphi 0, %s64
    %s66 = sphi 0, %s64
    %s67 = sphi 0, %s66
    %s81 = sphi 0, %s67
    %s87 = sphi 0, %s89
    %s90 = sphi 0, %s87
    %s91 = sphi 0, %s90
    %s107 = sphi 0, %s91
  $region4: #{gin_net_forward.4} parent=0 // loop_header_branch
    %12 = sbr.rel (%p10) target = $region8
  $region5: #{gin_net_forward.4} parent=0 // loop_body
    %s14 = ssub.s32 %s9, 1
    %s15 = ssub.s32 %s9, 2
    %s16 = sadd.s32 %s9, 1
    %s17 = ssub.s32 %s9, %s16
    %p18 = scmp.eq.s32.totalorder %s17, 0
    %s20 = sadd.s32 %s19, 1
    %s21 = scalar_select %p18, %s19, %s20
    %p24 = pneg %p18
    %p25 = scmp.eq.s32.totalorder %s9, 1
    %p26 = por %p24, %p25
    %p27 = scmp.ne.s32.totalorder %s19, %s22
    %p28 = scmp.eq.s32.totalorder %s9, 0
    %p29 = por %p27, %p28
    %p30 = scmp.ne.s32.totalorder %s19, %s22
    %p31 = scmp.eq.s32.totalorder %s14, 1
    %p32 = por %p30, %p31
    %p33 = scmp.ne.s32.totalorder %s22, %s23
    %p34 = scmp.eq.s32.totalorder %s14, 0
    %p35 = por %p33, %p34
    %p36 = scmp.ne.s32.totalorder %s22, %s23
    %p37 = scmp.eq.s32.totalorder %s15, 1
    %p38 = por %p36, %p37
    %p40 = scmp.ne.s32.totalorder %s23, %s39
    %p41 = scmp.eq.s32.totalorder %s15, 0
    %p42 = por %p40, %p41
    %s44 = sadd.s32 %s43, 1
    %p47 = scmp.eq.s32.totalorder %s9, 1
    %p48 = scmp.ne.s32.totalorder %s43, %s45
    %p49 = scmp.eq.s32.totalorder %s9, 0
    %p50 = por %p48, %p49
    %p51 = scmp.ne.s32.totalorder %s43, %s45
    %p52 = scmp.eq.s32.totalorder %s14, 1
    %p53 = por %p51, %p52
    %p54 = scmp.ne.s32.totalorder %s45, %s46
    %p55 = scmp.eq.s32.totalorder %s14, 0
    %p56 = por %p54, %p55
    %p57 = scmp.ne.s32.totalorder %s45, %s46
    %p58 = scmp.eq.s32.totalorder %s15, 1
    %p59 = por %p57, %p58
    %p61 = scmp.ne.s32.totalorder %s46, %s60
    %p62 = scmp.eq.s32.totalorder %s15, 0
    %p63 = por %p61, %p62
    %s65 = sadd.s32 %s64, 1
    %p68 = scmp.eq.s32.totalorder %s9, 1
    %p69 = scmp.ne.s32.totalorder %s64, %s66
    %p70 = scmp.eq.s32.totalorder %s9, 0
    %p71 = por %p69, %p70
    %p72 = scmp.ne.s32.totalorder %s64, %s66
    %p73 = scmp.eq.s32.totalorder %s14, 1
    %p74 = por %p72, %p73
    %p75 = scmp.ne.s32.totalorder %s66, %s67
    %p76 = scmp.eq.s32.totalorder %s14, 0
    %p77 = por %p75, %p76
    %p78 = scmp.ne.s32.totalorder %s66, %s67
    %p79 = scmp.eq.s32.totalorder %s15, 1
    %p80 = por %p78, %p79
    %p82 = scmp.ne.s32.totalorder %s67, %s81
    %p83 = scmp.eq.s32.totalorder %s15, 0
    %p84 = por %p82, %p83
    %s85 = ssub.s32 %s9, %s16
    %p86 = scmp.eq.s32.totalorder %s85, 0
    %s88 = sadd.s32 %s87, 1
    %s89 = scalar_select %p86, %s87, %s88
    %p92 = pneg %p86
    %p93 = scmp.eq.s32.totalorder %s9, 1
    %p94 = por %p92, %p93
    %p95 = scmp.ne.s32.totalorder %s87, %s90
    %p96 = scmp.eq.s32.totalorder %s9, 0
    %p97 = por %p95, %p96
    %p98 = scmp.ne.s32.totalorder %s87, %s90
    %p99 = scmp.eq.s32.totalorder %s14, 1
    %p100 = por %p98, %p99
    %p101 = scmp.ne.s32.totalorder %s90, %s91
    %p102 = scmp.eq.s32.totalorder %s14, 0
    %p103 = por %p101, %p102
    %p104 = scmp.ne.s32.totalorder %s90, %s91
    %p105 = scmp.eq.s32.totalorder %s15, 1
    %p106 = por %p104, %p105
    %p108 = scmp.ne.s32.totalorder %s91, %s107
    %p109 = scmp.eq.s32.totalorder %s15, 0
    %p110 = por %p108, %p109
    %p111 = scmp.le.s32.totalorder 1, %s9
    %p112 = scmp.lt.s32.totalorder %s9, 3
    %p113 = pnand %p111, %p112
    %p114 = pneg %p113
    // Predicated region
    $region9: #{gin_net_forward.4} parent=5 // pred_check
      _
    $region10: #{gin_net_forward.4} parent=5 // pred_check_branch
      %116 = sbr.rel (%p113) target = $region12
    $region11: #{gin_net_forward.4} parent=5 // pred_region
      %s117 = ssub.s32 %s9, 1
      // Predicated region
      $region13: #{gin_net_forward.4} parent=11 // pred_check
        %p118 = pneg %p56
      $region14: #{gin_net_forward.4} parent=11 // pred_check_branch
        %120 = sbr.rel (%p118) target = $region16
      $region15: #{gin_net_forward.4} parent=11 // pred_region
        _
      $region16: #{gin_net_forward.4} parent=11 // pred_fallthru
        _
      // Predicated region
      $region17: #{gin_net_forward.4} parent=11 // pred_check
        %p121 = pneg %p77
      $region18: #{gin_net_forward.4} parent=11 // pred_check_branch
        %123 = sbr.rel (%p121) target = $region20
      $region19: #{gin_net_forward.4} parent=11 // pred_region
        _
      $region20: #{gin_net_forward.4} parent=11 // pred_fallthru
        _
    $region12: #{gin_net_forward.4} parent=5 // pred_fallthru
      _
    %p124 = scmp.lt.s32.totalorder %s9, 2
    // Predicated region
    $region21: #{gin_net_forward.4} parent=5 // pred_check
      %p125 = pneg %p124
    $region22: #{gin_net_forward.4} parent=5 // pred_check_branch
      %127 = sbr.rel (%p125) target = $region24
    $region23: #{gin_net_forward.4} parent=5 // pred_region
      // Predicated region
      $region25: #{gin_net_forward.4} parent=23 // pred_check
        %p128 = pneg %p29
      $region26: #{gin_net_forward.4} parent=23 // pred_check_branch
        %130 = sbr.rel (%p128) target = $region28
      $region27: #{gin_net_forward.4} parent=23 // pred_region
        %s131 = smul.u32 16, %s9
        %p132 = scmp.lt.s32.totalorder %s131, 31
        %s133 = scalar_select %p132, %s131, 31
        %s134 = smul.addr %s133, 4
        %s135 = scalar_lea.vmem %s0, %s134
        %s136 = smul.u32 16, %s9
      $region28: #{gin_net_forward.4} parent=23 // pred_fallthru
        _
    $region24: #{gin_net_forward.4} parent=5 // pred_fallthru
      _
    %p137 = scmp.le.s32.totalorder 1, %s9
    %p138 = scmp.lt.s32.totalorder %s9, 3
    %p139 = pnand %p137, %p138
    %p140 = pneg %p139
    // Predicated region
    $region29: #{gin_net_forward.4} parent=5 // pred_check
      _
    $region30: #{gin_net_forward.4} parent=5 // pred_check_branch
      %142 = sbr.rel (%p139) target = $region32
    $region31: #{gin_net_forward.4} parent=5 // pred_region
      %s143 = ssub.s32 %s9, 1
      %s144 = smul.u32 16, %s14
      %p145 = scmp.lt.s32.totalorder %s144, 31
      %s146 = scalar_select %p145, %s144, 31
      %s147 = smul.addr %s146, 4
      %s148 = scalar_lea.vmem %s0, %s147
      %p149 = pneg %p35
      %p150 = pneg %p32
      %p151 = pneg %p56
      %p152 = pneg %p53
      %p153 = pneg %p77
      %p154 = pneg %p74
      %p155 = pneg %p103
      %p156 = pneg %p100
      %s157 = smul.u32 16, %s14
      %p158 = scmp.lt.s32.totalorder %s157, 31
      %s159 = scalar_select %p158, %s157, 31
      %s160 = smul.addr %s159, 4
      %s161 = scalar_lea.vmem %s3, %s160
      %s162 = smul.u32 16, %s14
      %p163 = scmp.lt.s32.totalorder %s162, 31
      %s164 = scalar_select %p163, %s162, 31
      %s165 = smul.addr %s164, 4
      %s166 = scalar_lea.vmem %s0, %s165
      %s167 = smul.u32 16, %s14
      %s168 = smul.u32 16, %s14
      %p169 = scmp.lt.s32.totalorder %s168, 31
      %s170 = scalar_select %p169, %s168, 31
      %s171 = smul.addr %s170, 4
      %s172 = scalar_lea.vmem %s3, %s171
      %s173 = smul.u32 16, %s14
      %v175 = vld [vmem:[%s166] sm:$0xf]
      %v176 = vld [vmem:[%s166 + $0x4] sm:$0xf]
      %v177 = vld [vmem:[%s166 + $0x8] sm:$0xf]
      %v178 = vld [vmem:[%s166 + $0xc] sm:$0xf]
      %v179 = vld [vmem:[%s166 + $0x10] sm:$0xf]
      %v180 = vld [vmem:[%s166 + $0x14] sm:$0xf]
      %v181 = vld [vmem:[%s166 + $0x18] sm:$0xf]
      %v182 = vld [vmem:[%s166 + $0x1c] sm:$0xf]
      %v183 = vld [vmem:[%s166 + $0x20] sm:$0xf]
      %v184 = vld [vmem:[%s166 + $0x24] sm:$0xf]
      %v185 = vld [vmem:[%s166 + $0x28] sm:$0xf]
      %v186 = vld [vmem:[%s166 + $0x2c] sm:$0xf]
      %v187 = vld [vmem:[%s166 + $0x30] sm:$0xf]
      %v188 = vld [vmem:[%s166 + $0x34] sm:$0xf]
      %v189 = vld [vmem:[%s166 + $0x38] sm:$0xf]
      %v190 = vld [vmem:[%s166 + $0x3c] sm:$0xf]
      %v191 = vld [vmem:[%s1] sm:$0xf]
      %v192 = vld [vmem:[%s1 + $0x4] sm:$0xf]
      %v193 = vld [vmem:[%s2] sm:$0x1]
      %v195 = vperm.slane %v193, 0
      %v213 = vunpack.c.l.b16 %v175
      %v214 = vunpack.c.l.b16 %v176
      %v215 = vunpack.c.l.b16 %v177
      %v216 = vunpack.c.l.b16 %v178
      %v217 = vunpack.c.l.b16 %v179
      %v218 = vunpack.c.l.b16 %v180
      %v219 = vunpack.c.l.b16 %v181
      %v220 = vunpack.c.l.b16 %v182
      %v221 = vunpack.c.l.b16 %v183
      %v222 = vunpack.c.l.b16 %v184
      %v223 = vunpack.c.l.b16 %v185
      %v224 = vunpack.c.l.b16 %v186
      %v225 = vunpack.c.l.b16 %v187
      %v226 = vunpack.c.l.b16 %v188
      %v227 = vunpack.c.l.b16 %v189
      %v228 = vunpack.c.l.b16 %v190
      %v229 = vpack.c.b16 %v214, %v213
      %v230 = vpack.c.b16 %v216, %v215
      %v231 = vpack.c.b16 %v218, %v217
      %v232 = vpack.c.b16 %v220, %v219
      %v233 = vpack.c.b16 %v222, %v221
      %v234 = vpack.c.b16 %v224, %v223
      %v235 = vpack.c.b16 %v226, %v225
      %v236 = vpack.c.b16 %v228, %v227
      %v239 = vunpack.c.l.b16 %v191
      %v240 = vunpack.c.l.b16 %v192
      %v241 = vpack.c.b16 %v240, %v239
      %vm243 = vcmask 130048
      %v245 = vsel %vm243, %v229, 0
      %v248 = vsel %vm243, %v230, 0
      %v251 = vsel %vm243, %v231, 0
      %v254 = vsel %vm243, %v232, 0
      %v257 = vsel %vm243, %v233, 0
      %v260 = vsel %vm243, %v234, 0
      %v263 = vsel %vm243, %v235, 0
      %v266 = vsel %vm243, %v236, 0
      %268 = vmatpush.bf16.msra.mxu0 0
      %269 = vmatpush.bf16.msra.mxu0 0
      %270 = vmatpush.bf16.msra.mxu0 0
      %271 = vmatpush.bf16.msra.mxu0 0
      %272 = vmatpush.bf16.msra.mxu0 0
      %273 = vmatpush.bf16.msra.mxu0 0
      %274 = vmatpush.bf16.msra.mxu0 0
      %275 = vmatpush.bf16.msra.mxu0 %v241
      %276 = vmatmul.bf16.gmra.mxu0 %v245
      %v277 = vpop.f32.mrf.mxu0
      %v278 = vadd.f32 %v195, %v277
      %v279 = vpop.f32.mrf.mxu0
      %v280 = vadd.f32 %v195, %v279
      %281 = vmatmul.bf16.gmra.mxu0 %v248
      %v282 = vpop.f32.mrf.mxu0
      %v283 = vadd.f32 %v195, %v282
      %v284 = vpop.f32.mrf.mxu0
      %v285 = vadd.f32 %v195, %v284
      %286 = vmatmul.bf16.gmra.mxu0 %v251
      %v287 = vpop.f32.mrf.mxu0
      %v288 = vadd.f32 %v195, %v287
      %v289 = vpop.f32.mrf.mxu0
      %v290 = vadd.f32 %v195, %v289
      %291 = vmatmul.bf16.gmra.mxu0 %v254
      %v292 = vpop.f32.mrf.mxu0
      %v293 = vadd.f32 %v195, %v292
      %v294 = vpop.f32.mrf.mxu0
      %v295 = vadd.f32 %v195, %v294
      %296 = vmatmul.bf16.gmra.mxu0 %v257
      %v297 = vpop.f32.mrf.mxu0
      %v298 = vadd.f32 %v195, %v297
      %v299 = vpop.f32.mrf.mxu0
      %v300 = vadd.f32 %v195, %v299
      %301 = vmatmul.bf16.gmra.mxu0 %v260
      %v302 = vpop.f32.mrf.mxu0
      %v303 = vadd.f32 %v195, %v302
      %v304 = vpop.f32.mrf.mxu0
      %v305 = vadd.f32 %v195, %v304
      %306 = vmatmul.bf16.gmra.mxu0 %v263
      %v307 = vpop.f32.mrf.mxu0
      %v308 = vadd.f32 %v195, %v307
      %v309 = vpop.f32.mrf.mxu0
      %v310 = vadd.f32 %v195, %v309
      %311 = vmatmul.bf16.gmra.mxu0 %v266
      %v312 = vpop.f32.mrf.mxu0
      %v313 = vadd.f32 %v195, %v312
      %v314 = vpop.f32.mrf.mxu0
      %v315 = vadd.f32 %v195, %v314
      %316 = vdwg.mxu0
      %v317 = vpack.c.bf16 %v278, %v278
      %v318 = vpack.c.bf16 %v280, %v280
      %v319 = vpack.c.bf16 %v283, %v283
      %v320 = vpack.c.bf16 %v285, %v285
      %v321 = vpack.c.bf16 %v288, %v288
      %v322 = vpack.c.bf16 %v290, %v290
      %v323 = vpack.c.bf16 %v293, %v293
      %v324 = vpack.c.bf16 %v295, %v295
      %v325 = vpack.c.bf16 %v298, %v298
      %v326 = vpack.c.bf16 %v300, %v300
      %v327 = vpack.c.bf16 %v303, %v303
      %v328 = vpack.c.bf16 %v305, %v305
      %v329 = vpack.c.bf16 %v308, %v308
      %v330 = vpack.c.bf16 %v310, %v310
      %v331 = vpack.c.bf16 %v313, %v313
      %v332 = vpack.c.bf16 %v315, %v315
      %333 = vst [vmem:[%s172] sm:$0xf] %v317
      %334 = vst [vmem:[%s172 + $0x4] sm:$0xf] %v318
      %335 = vst [vmem:[%s172 + $0x8] sm:$0xf] %v319
      %336 = vst [vmem:[%s172 + $0xc] sm:$0xf] %v320
      %337 = vst [vmem:[%s172 + $0x10] sm:$0xf] %v321
      %338 = vst [vmem:[%s172 + $0x14] sm:$0xf] %v322
      %339 = vst [vmem:[%s172 + $0x18] sm:$0xf] %v323
      %340 = vst [vmem:[%s172 + $0x1c] sm:$0xf] %v324
      %341 = vst [vmem:[%s172 + $0x20] sm:$0xf] %v325
      %342 = vst [vmem:[%s172 + $0x24] sm:$0xf] %v326
      %343 = vst [vmem:[%s172 + $0x28] sm:$0xf] %v327
      %344 = vst [vmem:[%s172 + $0x2c] sm:$0xf] %v328
      %345 = vst [vmem:[%s172 + $0x30] sm:$0xf] %v329
      %346 = vst [vmem:[%s172 + $0x34] sm:$0xf] %v330
      %347 = vst [vmem:[%s172 + $0x38] sm:$0xf] %v331
      %348 = vst [vmem:[%s172 + $0x3c] sm:$0xf] %v332
      %s349 = smul.u32 16, %s14
      %p350 = scmp.lt.s32.totalorder %s349, 31
      %s351 = scalar_select %p350, %s349, 31
      %s352 = smul.addr %s351, 4
      %s353 = scalar_lea.vmem %s3, %s352
      // Predicated region
      $region33: #{gin_net_forward.4} parent=31 // pred_check
        %p354 = pneg %p100
      $region34: #{gin_net_forward.4} parent=31 // pred_check_branch
        %356 = sbr.rel (%p354) target = $region36
      $region35: #{gin_net_forward.4} parent=31 // pred_region
        %s357 = smul.u32 16, %s14
      $region36: #{gin_net_forward.4} parent=31 // pred_fallthru
        _
    $region32: #{gin_net_forward.4} parent=5 // pred_fallthru
      _
    %p358 = scmp.le.s32.totalorder 2, %s9
    // Predicated region
    $region37: #{gin_net_forward.4} parent=5 // pred_check
      %p359 = pneg %p358
    $region38: #{gin_net_forward.4} parent=5 // pred_check_branch
      %361 = sbr.rel (%p359) target = $region40
    $region39: #{gin_net_forward.4} parent=5 // pred_region
      %s362 = ssub.s32 %s9, 2
      // Predicated region
      $region41: #{gin_net_forward.4} parent=39 // pred_check
        %p363 = pneg %p106
      $region42: #{gin_net_forward.4} parent=39 // pred_check_branch
        %365 = sbr.rel (%p363) target = $region44
      $region43: #{gin_net_forward.4} parent=39 // pred_region
        %s366 = smul.u32 16, %s15
        %p367 = scmp.lt.s32.totalorder %s366, 31
        %s368 = scalar_select %p367, %s366, 31
        %s369 = smul.addr %s368, 4
        %s370 = scalar_lea.vmem %s3, %s369
      $region44: #{gin_net_forward.4} parent=39 // pred_fallthru
        _
    $region40: #{gin_net_forward.4} parent=5 // pred_fallthru
      _
  $region6: #{gin_net_forward.4} parent=0 // loop_footer
    %s13 = sadd.s32 1, %s9
  $region7: #{gin_net_forward.4} parent=0 // loop_footer_branch
    %8 = sbr.rel target = $region3
  $region8: #{gin_net_forward.4} parent=0 // loop_exit
    _

// kernel: gin_net_forward.6
$region0: #{gin_net_forward.6}
  #allocation0 [shape = 'u32[]', space=smem, size = 0x4, offset = 0x4, fixed_abs, tag = 'smem constant byte address 0x4 - core index']
  #allocation1 [shape = 'u32[72,128]{1,0:T(1,128)}', space=vmem, size = 0x9000, scoped, tag = 'internal scratch']
  #allocation2 [shape = 'f32[128,128]{1,0:T(8,128)}', space=vmem, size = 0x10000, scoped, tag = 'scratch operand']
  %s0 = inlined_call_operand.hbm [shape: bf16[256,256], index: 0, kind: input, shape index: {}]
  %s1 = inlined_call_operand.vmem [shape: bf16[256,128], index: 1, kind: input, shape index: {}, may-alias: {1,2}]
  %s2 = inlined_call_operand.vmem [shape: bf16[256,128], index: 2, kind: input, shape index: {}, may-alias: {1,2}]
  %s3 = inlined_call_operand.vmem [shape: f32[1,128], index: 3, kind: input, shape index: {}]
  %s4 = inlined_call_operand.hbm [shape: bf16[128,128], index: 4, kind: input, shape index: {}]
  %s5 = inlined_call_operand.vmem [shape: f32[1,128], index: 5, kind: input, shape index: {}]
  %s6 = inlined_call_operand.hbm [shape: bf16[128,128], index: 6, kind: input, shape index: {}]
  %s7 = inlined_call_operand.vmem [shape: f32[1,128], index: 7, kind: input, shape index: {}]
  %s8 = inlined_call_operand.vmem [shape: f32[1,128], index: 8, kind: input, shape index: {}]
  %s9 = inlined_call_operand.vmem [shape: f32[1,128], index: 9, kind: input, shape index: {}]
  %s10 = inlined_call_operand.vmem [shape: bf16[256,128], index: 10, kind: output, shape index: {}]
  %s11 = sld [smem:[#allocation0]]
  $region93: #{gin_net_forward.6} parent=0
    _
  %s13 = ssub.s32 1, %s11
  %s14 = scalar_select 0, %s13, %s11
  $region1: #{gin_net_forward.6} parent=0
    #allocation3 [shape = 'u8[65536]{0}', space=vmem, size = 0x10000, scoped, tag = 'input window, operand 0']
    #allocation4 [shape = 's32[2]{0}', space=sflag, size = 0x8, scoped, tag = 'scoped memory for gin_net_forward.6']
    #allocation5 [shape = 'u8[32768]{0}', space=vmem, size = 0x8000, scoped, tag = 'input window, operand 4, single buffered']
    #allocation6 [shape = 's32[1]{0}', space=sflag, size = 0x4, scoped, tag = 'scoped memory for gin_net_forward.6']
    #allocation7 [shape = 'u8[32768]{0}', space=vmem, size = 0x8000, scoped, tag = 'input window, operand 6, single buffered']
    %15 = vsyncpa [#allocation4], 0
    %s16 = scalar_lea.sflag [#allocation4], 1
    %17 = vsyncpa %s16, 0
    %18 = vsyncpa [#allocation6], 0
    loop: start=0, step=1, limit=6
    $region2: #{gin_net_forward.6} parent=1 // loop_pre_header
      _
    $region3: #{gin_net_forward.6} parent=1 // loop_header
      %s20 = sphi 0, %s24
      %p21 = scmp.ge.s32.totalorder %s20, 6
      %s27 = sphi 0, %s39
      %s28 = sphi 0, %s35
      %s29 = sphi 0, %s27
      %s30 = sphi 0, %s28
      %s31 = sphi 0, %s29
      %s32 = sphi 0, %s30
      %s44 = sphi 0, %s46
      %s47 = sphi 0, %s44
      %s48 = sphi 0, %s47
      %s64 = sphi 0, %s48
      %s70 = sphi 0, %s72
      %s73 = sphi 0, %s70
      %s74 = sphi 0, %s73
      %s90 = sphi 0, %s74
      %s96 = sphi 0, %s98
      %s99 = sphi 0, %s96
      %s100 = sphi 0, %s99
      %s116 = sphi 0, %s100
      %s120 = sphi 0, %s120
      %s122 = sphi 0, %s120
      %s123 = sphi 0, %s122
      %s137 = sphi 0, %s123
      %s141 = sphi 0, %s141
      %s143 = sphi 0, %s141
      %s144 = sphi 0, %s143
      %s158 = sphi 0, %s144
      %s162 = sphi 0, %s162
      %s164 = sphi 0, %s162
      %s165 = sphi 0, %s164
      %s179 = sphi 0, %s165
      %s183 = sphi 0, %s183
      %s185 = sphi 0, %s183
      %s186 = sphi 0, %s185
      %s200 = sphi 0, %s186
      %s204 = sphi 0, %s204
      %s206 = sphi 0, %s204
      %s207 = sphi 0, %s206
      %s221 = sphi 0, %s207
      %s225 = sphi 0, %s225
      %s227 = sphi 0, %s225
      %s228 = sphi 0, %s227
      %s242 = sphi 0, %s228
      %s246 = sphi 0, %s246
      %s248 = sphi 0, %s246
      %s249 = sphi 0, %s248
      %s263 = sphi 0, %s249
      %s269 = sphi 0, %s271
      %s272 = sphi 0, %s269
      %s273 = sphi 0, %s272
      %s289 = sphi 0, %s273
    $region4: #{gin_net_forward.6} parent=1 // loop_header_branch
      %23 = sbr.rel (%p21) target = $region8
    $region5: #{gin_net_forward.6} parent=1 // loop_body
      %s25 = ssub.s32 %s20, 1
      %s26 = ssub.s32 %s20, 2
      %s33 = sadd.s32 1, %s28
      %p34 = scmp.ge.s32.totalorder %s33, 2
      %s35 = scalar_select %p34, 0, %s33
      %s36 = sadd.s32 1, %s27
      %s37 = scalar_select %p34, %s36, %s27
      %p38 = scmp.ge.s32.totalorder %s37, 2
      %s39 = scalar_select %p38, 0, %s37
      %s40 = ssub.s32 %s27, %s39
      %s41 = ssub.s32 %s28, %s35
      %s42 = sor.u32 %s40, %s41
      %p43 = scmp.eq.s32.totalorder %s42, 0
      %s45 = sadd.s32 %s44, 1
      %s46 = scalar_select %p43, %s44, %s45
      %p49 = pneg %p43
      %p50 = scmp.eq.s32.totalorder %s20, 3
      %p51 = por %p49, %p50
      %p52 = scmp.ne.s32.totalorder %s44, %s47
      %p53 = scmp.eq.s32.totalorder %s20, 0
      %p54 = por %p52, %p53
      %p55 = scmp.ne.s32.totalorder %s44, %s47
      %p56 = scmp.eq.s32.totalorder %s25, 3
      %p57 = por %p55, %p56
      %p58 = scmp.ne.s32.totalorder %s47, %s48
      %p59 = scmp.eq.s32.totalorder %s25, 0
      %p60 = por %p58, %p59
      %p61 = scmp.ne.s32.totalorder %s47, %s48
      %p62 = scmp.eq.s32.totalorder %s26, 3
      %p63 = por %p61, %p62
      %p65 = scmp.ne.s32.totalorder %s48, %s64
      %p66 = scmp.eq.s32.totalorder %s26, 0
      %p67 = por %p65, %p66
      %s68 = ssub.s32 %s28, %s35
      %p69 = scmp.eq.s32.totalorder %s68, 0
      %s71 = sadd.s32 %s70, 1
      %s72 = scalar_select %p69, %s70, %s71
      %p75 = pneg %p69
      %p76 = scmp.eq.s32.totalorder %s20, 3
      %p77 = por %p75, %p76
      %p78 = scmp.ne.s32.totalorder %s70, %s73
      %p79 = scmp.eq.s32.totalorder %s20, 0
      %p80 = por %p78, %p79
      %p81 = scmp.ne.s32.totalorder %s70, %s73
      %p82 = scmp.eq.s32.totalorder %s25, 3
      %p83 = por %p81, %p82
      %p84 = scmp.ne.s32.totalorder %s73, %s74
      %p85 = scmp.eq.s32.totalorder %s25, 0
      %p86 = por %p84, %p85
      %p87 = scmp.ne.s32.totalorder %s73, %s74
      %p88 = scmp.eq.s32.totalorder %s26, 3
      %p89 = por %p87, %p88
      %p91 = scmp.ne.s32.totalorder %s74, %s90
      %p92 = scmp.eq.s32.totalorder %s26, 0
      %p93 = por %p91, %p92
      %s94 = ssub.s32 %s27, %s39
      %p95 = scmp.eq.s32.totalorder %s94, 0
      %s97 = sadd.s32 %s96, 1
      %s98 = scalar_select %p95, %s96, %s97
      %p101 = pneg %p95
      %p102 = scmp.eq.s32.totalorder %s20, 3
      %p103 = por %p101, %p102
      %p104 = scmp.ne.s32.totalorder %s96, %s99
      %p105 = scmp.eq.s32.totalorder %s20, 0
      %p106 = por %p104, %p105
      %p107 = scmp.ne.s32.totalorder %s96, %s99
      %p108 = scmp.eq.s32.totalorder %s25, 3
      %p109 = por %p107, %p108
      %p110 = scmp.ne.s32.totalorder %s99, %s100
      %p111 = scmp.eq.s32.totalorder %s25, 0
      %p112 = por %p110, %p111
      %p113 = scmp.ne.s32.totalorder %s99, %s100
      %p114 = scmp.eq.s32.totalorder %s26, 3
      %p115 = por %p113, %p114
      %p117 = scmp.ne.s32.totalorder %s100, %s116
      %p118 = scmp.eq.s32.totalorder %s26, 0
      %p119 = por %p117, %p118
      %s121 = sadd.s32 %s120, 1
      %p124 = scmp.eq.s32.totalorder %s20, 3
      %p125 = scmp.ne.s32.totalorder %s120, %s122
      %p126 = scmp.eq.s32.totalorder %s20, 0
      %p127 = por %p125, %p126
      %p128 = scmp.ne.s32.totalorder %s120, %s122
      %p129 = scmp.eq.s32.totalorder %s25, 3
      %p130 = por %p128, %p129
      %p131 = scmp.ne.s32.totalorder %s122, %s123
      %p132 = scmp.eq.s32.totalorder %s25, 0
      %p133 = por %p131, %p132
      %p134 = scmp.ne.s32.totalorder %s122, %s123
      %p135 = scmp.eq.s32.totalorder %s26, 3
      %p136 = por %p134, %p135
      %p138 = scmp.ne.s32.totalorder %s123, %s137
      %p139 = scmp.eq.s32.totalorder %s26, 0
      %p140 = por %p138, %p139
      %s142 = sadd.s32 %s141, 1
      %p145 = scmp.eq.s32.totalorder %s20, 3
      %p146 = scmp.ne.s32.totalorder %s141, %s143
      %p147 = scmp.eq.s32.totalorder %s20, 0
      %p148 = por %p146, %p147
      %p149 = scmp.ne.s32.totalorder %s141, %s143
      %p150 = scmp.eq.s32.totalorder %s25, 3
      %p151 = por %p149, %p150
      %p152 = scmp.ne.s32.totalorder %s143, %s144
      %p153 = scmp.eq.s32.totalorder %s25, 0
      %p154 = por %p152, %p153
      %p155 = scmp.ne.s32.totalorder %s143, %s144
      %p156 = scmp.eq.s32.totalorder %s26, 3
      %p157 = por %p155, %p156
      %p159 = scmp.ne.s32.totalorder %s144, %s158
      %p160 = scmp.eq.s32.totalorder %s26, 0
      %p161 = por %p159, %p160
      %s163 = sadd.s32 %s162, 1
      %p166 = scmp.eq.s32.totalorder %s20, 3
      %p167 = scmp.ne.s32.totalorder %s162, %s164
      %p168 = scmp.eq.s32.totalorder %s20, 0
      %p169 = por %p167, %p168
      %p170 = scmp.ne.s32.totalorder %s162, %s164
      %p171 = scmp.eq.s32.totalorder %s25, 3
      %p172 = por %p170, %p171
      %p173 = scmp.ne.s32.totalorder %s164, %s165
      %p174 = scmp.eq.s32.totalorder %s25, 0
      %p175 = por %p173, %p174
      %p176 = scmp.ne.s32.totalorder %s164, %s165
      %p177 = scmp.eq.s32.totalorder %s26, 3
      %p178 = por %p176, %p177
      %p180 = scmp.ne.s32.totalorder %s165, %s179
      %p181 = scmp.eq.s32.totalorder %s26, 0
      %p182 = por %p180, %p181
      %s184 = sadd.s32 %s183, 1
      %p187 = scmp.eq.s32.totalorder %s20, 3
      %p188 = scmp.ne.s32.totalorder %s183, %s185
      %p189 = scmp.eq.s32.totalorder %s20, 0
      %p190 = por %p188, %p189
      %p191 = scmp.ne.s32.totalorder %s183, %s185
      %p192 = scmp.eq.s32.totalorder %s25, 3
      %p193 = por %p191, %p192
      %p194 = scmp.ne.s32.totalorder %s185, %s186
      %p195 = scmp.eq.s32.totalorder %s25, 0
      %p196 = por %p194, %p195
      %p197 = scmp.ne.s32.totalorder %s185, %s186
      %p198 = scmp.eq.s32.totalorder %s26, 3
      %p199 = por %p197, %p198
      %p201 = scmp.ne.s32.totalorder %s186, %s200
      %p202 = scmp.eq.s32.totalorder %s26, 0
      %p203 = por %p201, %p202
      %s205 = sadd.s32 %s204, 1
      %p208 = scmp.eq.s32.totalorder %s20, 3
      %p209 = scmp.ne.s32.totalorder %s204, %s206
      %p210 = scmp.eq.s32.totalorder %s20, 0
      %p211 = por %p209, %p210
      %p212 = scmp.ne.s32.totalorder %s204, %s206
      %p213 = scmp.eq.s32.totalorder %s25, 3
      %p214 = por %p212, %p213
      %p215 = scmp.ne.s32.totalorder %s206, %s207
      %p216 = scmp.eq.s32.totalorder %s25, 0
      %p217 = por %p215, %p216
      %p218 = scmp.ne.s32.totalorder %s206, %s207
      %p219 = scmp.eq.s32.totalorder %s26, 3
      %p220 = por %p218, %p219
      %p222 = scmp.ne.s32.totalorder %s207, %s221
      %p223 = scmp.eq.s32.totalorder %s26, 0
      %p224 = por %p222, %p223
      %s226 = sadd.s32 %s225, 1
      %p229 = scmp.eq.s32.totalorder %s20, 3
      %p230 = scmp.ne.s32.totalorder %s225, %s227
      %p231 = scmp.eq.s32.totalorder %s20, 0
      %p232 = por %p230, %p231
      %p233 = scmp.ne.s32.totalorder %s225, %s227
      %p234 = scmp.eq.s32.totalorder %s25, 3
      %p235 = por %p233, %p234
      %p236 = scmp.ne.s32.totalorder %s227, %s228
      %p237 = scmp.eq.s32.totalorder %s25, 0
      %p238 = por %p236, %p237
      %p239 = scmp.ne.s32.totalorder %s227, %s228
      %p240 = scmp.eq.s32.totalorder %s26, 3
      %p241 = por %p239, %p240
      %p243 = scmp.ne.s32.totalorder %s228, %s242
      %p244 = scmp.eq.s32.totalorder %s26, 0
      %p245 = por %p243, %p244
      %s247 = sadd.s32 %s246, 1
      %p250 = scmp.eq.s32.totalorder %s20, 3
      %p251 = scmp.ne.s32.totalorder %s246, %s248
      %p252 = scmp.eq.s32.totalorder %s20, 0
      %p253 = por %p251, %p252
      %p254 = scmp.ne.s32.totalorder %s246, %s248
      %p255 = scmp.eq.s32.totalorder %s25, 3
      %p256 = por %p254, %p255
      %p257 = scmp.ne.s32.totalorder %s248, %s249
      %p258 = scmp.eq.s32.totalorder %s25, 0
      %p259 = por %p257, %p258
      %p260 = scmp.ne.s32.totalorder %s248, %s249
      %p261 = scmp.eq.s32.totalorder %s26, 3
      %p262 = por %p260, %p261
      %p264 = scmp.ne.s32.totalorder %s249, %s263
      %p265 = scmp.eq.s32.totalorder %s26, 0
      %p266 = por %p264, %p265
      %s267 = ssub.s32 %s27, %s39
      %p268 = scmp.eq.s32.totalorder %s267, 0
      %s270 = sadd.s32 %s269, 1
      %s271 = scalar_select %p268, %s269, %s270
      %p274 = pneg %p268
      %p275 = scmp.eq.s32.totalorder %s20, 3
      %p276 = por %p274, %p275
      %p277 = scmp.ne.s32.totalorder %s269, %s272
      %p278 = scmp.eq.s32.totalorder %s20, 0
      %p279 = por %p277, %p278
      %p280 = scmp.ne.s32.totalorder %s269, %s272
      %p281 = scmp.eq.s32.totalorder %s25, 3
      %p282 = por %p280, %p281
      %p283 = scmp.ne.s32.totalorder %s272, %s273
      %p284 = scmp.eq.s32.totalorder %s25, 0
      %p285 = por %p283, %p284
      %p286 = scmp.ne.s32.totalorder %s272, %s273
      %p287 = scmp.eq.s32.totalorder %s26, 3
      %p288 = por %p286, %p287
      %p290 = scmp.ne.s32.totalorder %s273, %s289
      %p291 = scmp.eq.s32.totalorder %s26, 0
      %p292 = por %p290, %p291
      %p293 = scmp.le.s32.totalorder 1, %s20
      %p294 = scmp.lt.s32.totalorder %s20, 5
      %p295 = pnand %p293, %p294
      %p296 = pneg %p295
      // Predicated region
      $region9: #{gin_net_forward.6} parent=5 // pred_check
        _
      $region10: #{gin_net_forward.6} parent=5 // pred_check_branch
        %298 = sbr.rel (%p295) target = $region12
      $region11: #{gin_net_forward.6} parent=5 // pred_region
        %s299 = ssub.s32 %s20, 1
        // Predicated region
        $region13: #{gin_net_forward.6} parent=11 // pred_check
          %p300 = pneg %p133
        $region14: #{gin_net_forward.6} parent=11 // pred_check_branch
          %302 = sbr.rel (%p300) target = $region16
        $region15: #{gin_net_forward.6} parent=11 // pred_region
          _
        $region16: #{gin_net_forward.6} parent=11 // pred_fallthru
          _
        // Predicated region
        $region17: #{gin_net_forward.6} parent=11 // pred_check
          %p303 = pneg %p154
        $region18: #{gin_net_forward.6} parent=11 // pred_check_branch
          %305 = sbr.rel (%p303) target = $region20
        $region19: #{gin_net_forward.6} parent=11 // pred_region
          %307 = vsyncadd [#allocation6], 0
          %s308 = sshll.u32 %s4, 4
          %s309 = int_to_ptr.hbm [resolvable:$true] %s308
          %s310 = sshll.u32 [#allocation5], 4
          %s311 = int_to_ptr.vmem [resolvable:$true] %s310
          %316 = dma.hbm_to_vmem [thread:$0]  %s309, 1024, %s311, [#allocation6], 64, 64, 4
        $region20: #{gin_net_forward.6} parent=11 // pred_fallthru
          _
        // Predicated region
        $region21: #{gin_net_forward.6} parent=11 // pred_check
          %p317 = pneg %p175
        $region22: #{gin_net_forward.6} parent=11 // pred_check_branch
          %319 = sbr.rel (%p317) target = $region24
        $region23: #{gin_net_forward.6} parent=11 // pred_region
          _
        $region24: #{gin_net_forward.6} parent=11 // pred_fallthru
          _
        // Predicated region
        $region25: #{gin_net_forward.6} parent=11 // pred_check
          %p320 = pneg %p196
        $region26: #{gin_net_forward.6} parent=11 // pred_check_branch
          %322 = sbr.rel (%p320) target = $region28
        $region27: #{gin_net_forward.6} parent=11 // pred_region
          %324 = vsyncadd [#allocation6], 0
          %s325 = sshll.u32 %s6, 4
          %s326 = int_to_ptr.hbm [resolvable:$true] %s325
          %s327 = sshll.u32 [#allocation7], 4
          %s328 = int_to_ptr.vmem [resolvable:$true] %s327
          %333 = dma.hbm_to_vmem [thread:$0]  %s326, 1024, %s328, [#allocation6], 64, 64, 4
        $region28: #{gin_net_forward.6} parent=11 // pred_fallthru
          _
        // Predicated region
        $region29: #{gin_net_forward.6} parent=11 // pred_check
          %p334 = pneg %p217
        $region30: #{gin_net_forward.6} parent=11 // pred_check_branch
          %336 = sbr.rel (%p334) target = $region32
        $region31: #{gin_net_forward.6} parent=11 // pred_region
          _
        $region32: #{gin_net_forward.6} parent=11 // pred_fallthru
          _
        // Predicated region
        $region33: #{gin_net_forward.6} parent=11 // pred_check
          %p337 = pneg %p238
        $region34: #{gin_net_forward.6} parent=11 // pred_check_branch
          %339 = sbr.rel (%p337) target = $region36
        $region35: #{gin_net_forward.6} parent=11 // pred_region
          _
        $region36: #{gin_net_forward.6} parent=11 // pred_fallthru
          _
        // Predicated region
        $region37: #{gin_net_forward.6} parent=11 // pred_check
          %p340 = pneg %p259
        $region38: #{gin_net_forward.6} parent=11 // pred_check_branch
          %342 = sbr.rel (%p340) target = $region40
        $region39: #{gin_net_forward.6} parent=11 // pred_region
          _
        $region40: #{gin_net_forward.6} parent=11 // pred_fallthru
          _
      $region12: #{gin_net_forward.6} parent=5 // pred_fallthru
        _
      %p343 = scmp.lt.s32.totalorder %s20, 4
      // Predicated region
      $region41: #{gin_net_forward.6} parent=5 // pred_check
        %p344 = pneg %p343
      $region42: #{gin_net_forward.6} parent=5 // pred_check_branch
        %346 = sbr.rel (%p344) target = $region44
      $region43: #{gin_net_forward.6} parent=5 // pred_region
        // Predicated region
        $region45: #{gin_net_forward.6} parent=43 // pred_check
          %p347 = pneg %p54
        $region46: #{gin_net_forward.6} parent=43 // pred_check_branch
          %349 = sbr.rel (%p347) target = $region48
        $region47: #{gin_net_forward.6} parent=43 // pred_region
          %s350 = sand.u32 %s44, 1
          %s351 = scalar_lea.sflag [#allocation4], %s350
          %s352 = sand.u32 %s44, 1
          %s353 = smul.addr %s352, 64
          %s354 = scalar_lea.vmem [#allocation3], %s353
          %s355 = smul.u32 16, %s27
          %357 = vsyncadd %s351, 0
          %s358 = smul.addr %s355, 2
          %s359 = sadd.s32 %s28, %s358
          %s360 = smul.addr %s359, 4
          %s361 = scalar_lea.hbm %s0, %s360
          %s362 = sshll.u32 %s361, 4
          %s363 = int_to_ptr.hbm [resolvable:$true] %s362
          %s364 = sshll.u32 %s354, 4
          %s365 = int_to_ptr.vmem [resolvable:$true] %s364
          %370 = dma.hbm_to_vmem [thread:$0]  %s363, 1024, %s365, %s351, 128, 64, 4
        $region48: #{gin_net_forward.6} parent=43 // pred_fallthru
          _
        // Predicated region
        $region49: #{gin_net_forward.6} parent=43 // pred_check
          %p371 = pneg %p80
        $region50: #{gin_net_forward.6} parent=43 // pred_check_branch
          %373 = sbr.rel (%p371) target = $region52
        $region51: #{gin_net_forward.6} parent=43 // pred_region
          %s374 = smul.u32 16, %s28
          %p375 = scmp.lt.s32.totalorder %s374, 31
          %s376 = scalar_select %p375, %s374, 31
          %s377 = smul.addr %s376, 4
          %s378 = scalar_lea.vmem %s1, %s377
          %s379 = smul.u32 16, %s28
        $region52: #{gin_net_forward.6} parent=43 // pred_fallthru
          _
        // Predicated region
        $region53: #{gin_net_forward.6} parent=43 // pred_check
          %p380 = pneg %p106
        $region54: #{gin_net_forward.6} parent=43 // pred_check_branch
          %382 = sbr.rel (%p380) target = $region56
        $region55: #{gin_net_forward.6} parent=43 // pred_region
          %s383 = smul.u32 16, %s27
          %p384 = scmp.lt.s32.totalorder %s383, 31
          %s385 = scalar_select %p384, %s383, 31
          %s386 = smul.addr %s385, 4
          %s387 = scalar_lea.vmem %s2, %s386
          %s388 = smul.u32 16, %s27
        $region56: #{gin_net_forward.6} parent=43 // pred_fallthru
          _
      $region44: #{gin_net_forward.6} parent=5 // pred_fallthru
        _
      %p389 = scmp.le.s32.totalorder 1, %s20
      %p390 = scmp.lt.s32.totalorder %s20, 5
      %p391 = pnand %p389, %p390
      %p392 = pneg %p391
      // Predicated region
      $region57: #{gin_net_forward.6} parent=5 // pred_check
        _
      $region58: #{gin_net_forward.6} parent=5 // pred_check_branch
        %394 = sbr.rel (%p391) target = $region60
      $region59: #{gin_net_forward.6} parent=5 // pred_region
        %s395 = ssub.s32 %s20, 1
        %s396 = sand.u32 %s47, 1
        %s397 = scalar_lea.sflag [#allocation4], %s396
        %s398 = sand.u32 %s47, 1
        %s399 = smul.addr %s398, 64
        %s400 = scalar_lea.vmem [#allocation3], %s399
        // Predicated region
        $region61: #{gin_net_forward.6} parent=59 // pred_check
          %p401 = pneg %p60
        $region62: #{gin_net_forward.6} parent=59 // pred_check_branch
          %403 = sbr.rel (%p401) target = $region64
        $region63: #{gin_net_forward.6} parent=59 // pred_region
          %405 = dma.done %s397, 1024
        $region64: #{gin_net_forward.6} parent=59 // pred_fallthru
          _
        // Predicated region
        $region65: #{gin_net_forward.6} parent=59 // pred_check
          %p406 = pneg %p154
        $region66: #{gin_net_forward.6} parent=59 // pred_check_branch
          %408 = sbr.rel (%p406) target = $region68
        $region67: #{gin_net_forward.6} parent=59 // pred_region
          %410 = dma.done [#allocation6], 1024
        $region68: #{gin_net_forward.6} parent=59 // pred_fallthru
          _
        // Predicated region
        $region69: #{gin_net_forward.6} parent=59 // pred_check
          %p411 = pneg %p196
        $region70: #{gin_net_forward.6} parent=59 // pred_check_branch
          %413 = sbr.rel (%p411) target = $region72
        $region71: #{gin_net_forward.6} parent=59 // pred_region
          %415 = dma.done [#allocation6], 1024
        $region72: #{gin_net_forward.6} parent=59 // pred_fallthru
          _
        %s416 = sand.u32 %s47, 1
        %s417 = scalar_lea.sflag [#allocation4], %s416
        %s418 = sand.u32 %s47, 1
        %s419 = smul.addr %s418, 64
        %s420 = scalar_lea.vmem [#allocation3], %s419
        %p421 = pneg %p60
        %p422 = pneg %p57
        %s423 = smul.u32 16, %s30
        %p424 = scmp.lt.s32.totalorder %s423, 31
        %s425 = scalar_select %p424, %s423, 31
        %s426 = smul.addr %s425, 4
        %s427 = scalar_lea.vmem %s1, %s426
        %p428 = pneg %p86
        %p429 = pneg %p83
        %s430 = smul.u32 16, %s29
        %p431 = scmp.lt.s32.totalorder %s430, 31
        %s432 = scalar_select %p431, %s430, 31
        %s433 = smul.addr %s432, 4
        %s434 = scalar_lea.vmem %s2, %s433
        %p435 = pneg %p112
        %p436 = pneg %p109
        %p437 = pneg %p133
        %p438 = pneg %p130
        %p439 = pneg %p154
        %p440 = pneg %p151
        %p441 = pneg %p175
        %p442 = pneg %p172
        %p443 = pneg %p196
        %p444 = pneg %p193
        %p445 = pneg %p217
        %p446 = pneg %p214
        %p447 = pneg %p238
        %p448 = pneg %p235
        %p449 = pneg %p259
        %p450 = pneg %p256
        %p451 = pneg %p285
        %p452 = pneg %p282
        %s453 = smul.u32 16, %s29
        %p454 = scmp.lt.s32.totalorder %s453, 31
        %s455 = scalar_select %p454, %s453, 31
        %s456 = smul.addr %s455, 4
        %s457 = scalar_lea.vmem %s10, %s456
        %s458 = smul.u32 16, %s29
        %s459 = smul.u32 16, %s30
        %p460 = scmp.lt.s32.totalorder %s459, 31
        %s461 = scalar_select %p460, %s459, 31
        %s462 = smul.addr %s461, 4
        %s463 = scalar_lea.vmem %s1, %s462
        %s464 = smul.u32 16, %s30
        %s465 = smul.u32 16, %s29
        %p466 = scmp.lt.s32.totalorder %s465, 31
        %s467 = scalar_select %p466, %s465, 31
        %s468 = smul.addr %s467, 4
        %s469 = scalar_lea.vmem %s2, %s468
        %s470 = smul.u32 16, %s29
        %s471 = smul.u32 16, %s29
        %p472 = scmp.lt.s32.totalorder %s471, 31
        %s473 = scalar_select %p472, %s471, 31
        %s474 = smul.addr %s473, 4
        %s475 = scalar_lea.vmem %s10, %s474
        %s476 = smul.u32 16, %s29
        %p477 = scmp.eq.s32.totalorder %s30, 0
        // Predicated region
        $region73: #{gin_net_forward.6} parent=59 // pred_check
          %p478 = pneg %p477
        $region74: #{gin_net_forward.6} parent=59 // pred_check_branch
          %480 = sbr.rel (%p478) target = $region76
        $region75: #{gin_net_forward.6} parent=59 // pred_region
          %481 = vst [vmem:[#allocation2] sm:$0xff] 0.0
          %482 = vst [vmem:[#allocation2 + $0x8] sm:$0xff] 0.0
          %483 = vst [vmem:[#allocation2 + $0x10] sm:$0xff] 0.0
          %484 = vst [vmem:[#allocation2 + $0x18] sm:$0xff] 0.0
          %485 = vst [vmem:[#allocation2 + $0x20] sm:$0xff] 0.0
          %486 = vst [vmem:[#allocation2 + $0x28] sm:$0xff] 0.0
          %487 = vst [vmem:[#allocation2 + $0x30] sm:$0xff] 0.0
          %488 = vst [vmem:[#allocation2 + $0x38] sm:$0xff] 0.0
          %489 = vst [vmem:[#allocation2 + $0x40] sm:$0xff] 0.0
          %490 = vst [vmem:[#allocation2 + $0x48] sm:$0xff] 0.0
          %491 = vst [vmem:[#allocation2 + $0x50] sm:$0xff] 0.0
          %492 = vst [vmem:[#allocation2 + $0x58] sm:$0xff] 0.0
          %493 = vst [vmem:[#allocation2 + $0x60] sm:$0xff] 0.0
          %494 = vst [vmem:[#allocation2 + $0x68] sm:$0xff] 0.0
          %495 = vst [vmem:[#allocation2 + $0x70] sm:$0xff] 0.0
          %496 = vst [vmem:[#allocation2 + $0x78] sm:$0xff] 0.0
        $region76: #{gin_net_forward.6} parent=59 // pred_fallthru
          _
        %v497 = vld [vmem:[#allocation2] sm:$0xff]
        %v498 = vld [vmem:[#allocation2 + $0x8] sm:$0xff]
        %v499 = vld [vmem:[#allocation2 + $0x10] sm:$0xff]
        %v500 = vld [vmem:[#allocation2 + $0x18] sm:$0xff]
        %v501 = vld [vmem:[#allocation2 + $0x20] sm:$0xff]
        %v502 = vld [vmem:[#allocation2 + $0x28] sm:$0xff]
        %v503 = vld [vmem:[#allocation2 + $0x30] sm:$0xff]
        %v504 = vld [vmem:[#allocation2 + $0x38] sm:$0xff]
        %v505 = vld [vmem:[#allocation2 + $0x40] sm:$0xff]
        %v506 = vld [vmem:[#allocation2 + $0x48] sm:$0xff]
        %v507 = vld [vmem:[#allocation2 + $0x50] sm:$0xff]
        %v508 = vld [vmem:[#allocation2 + $0x58] sm:$0xff]
        %v509 = vld [vmem:[#allocation2 + $0x60] sm:$0xff]
        %v510 = vld [vmem:[#allocation2 + $0x68] sm:$0xff]
        %v511 = vld [vmem:[#allocation2 + $0x70] sm:$0xff]
        %v512 = vld [vmem:[#allocation2 + $0x78] sm:$0xff]
        %v513 = vld [vmem:[%s400] sm:$0xf]
        %v514 = vld [vmem:[%s400 + $0x4] sm:$0xf]
        %v515 = vld [vmem:[%s400 + $0x8] sm:$0xf]
        %v516 = vld [vmem:[%s400 + $0xc] sm:$0xf]
        %v517 = vld [vmem:[%s400 + $0x10] sm:$0xf]
        %v518 = vld [vmem:[%s400 + $0x14] sm:$0xf]
        %v519 = vld [vmem:[%s400 + $0x18] sm:$0xf]
        %v520 = vld [vmem:[%s400 + $0x1c] sm:$0xf]
        %v521 = vld [vmem:[%s400 + $0x20] sm:$0xf]
        %v522 = vld [vmem:[%s400 + $0x24] sm:$0xf]
        %v523 = vld [vmem:[%s400 + $0x28] sm:$0xf]
        %v524 = vld [vmem:[%s400 + $0x2c] sm:$0xf]
        %v525 = vld [vmem:[%s400 + $0x30] sm:$0xf]
        %v526 = vld [vmem:[%s400 + $0x34] sm:$0xf]
        %v527 = vld [vmem:[%s400 + $0x38] sm:$0xf]
        %v528 = vld [vmem:[%s400 + $0x3c] sm:$0xf]
        %v529 = vld [vmem:[%s463] sm:$0xf]
        %v530 = vld [vmem:[%s463 + $0x4] sm:$0xf]
        %v531 = vld [vmem:[%s463 + $0x8] sm:$0xf]
        %v532 = vld [vmem:[%s463 + $0xc] sm:$0xf]
        %v533 = vld [vmem:[%s463 + $0x10] sm:$0xf]
        %v534 = vld [vmem:[%s463 + $0x14] sm:$0xf]
        %v535 = vld [vmem:[%s463 + $0x18] sm:$0xf]
        %v536 = vld [vmem:[%s463 + $0x1c] sm:$0xf]
        %v537 = vld [vmem:[%s463 + $0x20] sm:$0xf]
        %v538 = vld [vmem:[%s463 + $0x24] sm:$0xf]
        %v539 = vld [vmem:[%s463 + $0x28] sm:$0xf]
        %v540 = vld [vmem:[%s463 + $0x2c] sm:$0xf]
        %v541 = vld [vmem:[%s463 + $0x30] sm:$0xf]
        %v542 = vld [vmem:[%s463 + $0x34] sm:$0xf]
        %v543 = vld [vmem:[%s463 + $0x38] sm:$0xf]
        %v544 = vld [vmem:[%s463 + $0x3c] sm:$0xf]
        %v561 = vunpack.c.l.b16 %v513
        %v562 = vunpack.c.l.b16 %v514
        %v563 = vunpack.c.l.b16 %v515
        %v564 = vunpack.c.l.b16 %v516
        %v565 = vunpack.c.l.b16 %v517
        %v566 = vunpack.c.l.b16 %v518
        %v567 = vunpack.c.l.b16 %v519
        %v568 = vunpack.c.l.b16 %v520
        %v569 = vunpack.c.l.b16 %v521
        %v570 = vunpack.c.l.b16 %v522
        %v571 = vunpack.c.l.b16 %v523
        %v572 = vunpack.c.l.b16 %v524
        %v573 = vunpack.c.l.b16 %v525
        %v574 = vunpack.c.l.b16 %v526
        %v575 = vunpack.c.l.b16 %v527
        %v576 = vunpack.c.l.b16 %v528
        %v577 = vpack.c.b16 %v562, %v561
        %v578 = vpack.c.b16 %v564, %v563
        %v579 = vpack.c.b16 %v566, %v565
        %v580 = vpack.c.b16 %v568, %v567
        %v581 = vpack.c.b16 %v570, %v569
        %v582 = vpack.c.b16 %v572, %v571
        %v583 = vpack.c.b16 %v574, %v573
        %v584 = vpack.c.b16 %v576, %v575
        %v609 = vunpack.c.l.b16 %v529
        %v610 = vunpack.c.l.b16 %v530
        %v611 = vunpack.c.l.b16 %v531
        %v612 = vunpack.c.l.b16 %v532
        %v613 = vunpack.c.l.b16 %v533
        %v614 = vunpack.c.l.b16 %v534
        %v615 = vunpack.c.l.b16 %v535
        %v616 = vunpack.c.l.b16 %v536
        %v617 = vunpack.c.l.b16 %v537
        %v618 = vunpack.c.l.b16 %v538
        %v619 = vunpack.c.l.b16 %v539
        %v620 = vunpack.c.l.b16 %v540
        %v621 = vunpack.c.l.b16 %v541
        %v622 = vunpack.c.l.b16 %v542
        %v623 = vunpack.c.l.b16 %v543
        %v624 = vunpack.c.l.b16 %v544
        %v625 = vpack.c.b16 %v610, %v609
        %v626 = vpack.c.b16 %v612, %v611
        %v627 = vpack.c.b16 %v614, %v613
        %v628 = vpack.c.b16 %v616, %v615
        %v629 = vpack.c.b16 %v618, %v617
        %v630 = vpack.c.b16 %v620, %v619
        %v631 = vpack.c.b16 %v622, %v621
        %v632 = vpack.c.b16 %v624, %v623
        %641 = vmatpush.bf16.msra.mxu0 %v632
        %642 = vmatpush.bf16.msra.mxu0 %v631
        %643 = vmatpush.bf16.msra.mxu0 %v630
        %644 = vmatpush.bf16.msra.mxu0 %v629
        %645 = vmatpush.bf16.msra.mxu0 %v628
        %646 = vmatpush.bf16.msra.mxu0 %v627
        %647 = vmatpush.bf16.msra.mxu0 %v626
        %648 = vmatpush.bf16.msra.mxu0 %v625
        %649 = vmatmul.bf16.gmra.mxu0 %v577
        %v650 = vpop.f32.mrf.mxu0
        %v651 = vadd.f32 0.0, %v650
        %v652 = vpop.f32.mrf.mxu0
        %v653 = vadd.f32 0.0, %v652
        %654 = vmatmul.bf16.gmra.mxu0 %v578
        %v655 = vpop.f32.mrf.mxu0
        %v656 = vadd.f32 0.0, %v655
        %v657 = vpop.f32.mrf.mxu0
        %v658 = vadd.f32 0.0, %v657
        %659 = vmatmul.bf16.gmra.mxu0 %v579
        %v660 = vpop.f32.mrf.mxu0
        %v661 = vadd.f32 0.0, %v660
        %v662 = vpop.f32.mrf.mxu0
        %v663 = vadd.f32 0.0, %v662
        %664 = vmatmul.bf16.gmra.mxu0 %v580
        %v665 = vpop.f32.mrf.mxu0
        %v666 = vadd.f32 0.0, %v665
        %v667 = vpop.f32.mrf.mxu0
        %v668 = vadd.f32 0.0, %v667
        %669 = vmatmul.bf16.gmra.mxu0 %v581
        %v670 = vpop.f32.mrf.mxu0
        %v671 = vadd.f32 0.0, %v670
        %v672 = vpop.f32.mrf.mxu0
        %v673 = vadd.f32 0.0, %v672
        %674 = vmatmul.bf16.gmra.mxu0 %v582
        %v675 = vpop.f32.mrf.mxu0
        %v676 = vadd.f32 0.0, %v675
        %v677 = vpop.f32.mrf.mxu0
        %v678 = vadd.f32 0.0, %v677
        %679 = vmatmul.bf16.gmra.mxu0 %v583
        %v680 = vpop.f32.mrf.mxu0
        %v681 = vadd.f32 0.0, %v680
        %v682 = vpop.f32.mrf.mxu0
        %v683 = vadd.f32 0.0, %v682
        %684 = vmatmul.bf16.gmra.mxu0 %v584
        %v685 = vpop.f32.mrf.mxu0
        %v686 = vadd.f32 0.0, %v685
        %v687 = vpop.f32.mrf.mxu0
        %v688 = vadd.f32 0.0, %v687
        %689 = vdwg.mxu0
        %v690 = vadd.f32 %v497, %v651
        %v691 = vadd.f32 %v498, %v653
        %v692 = vadd.f32 %v499, %v656
        %v693 = vadd.f32 %v500, %v658
        %v694 = vadd.f32 %v501, %v661
        %v695 = vadd.f32 %v502, %v663
        %v696 = vadd.f32 %v503, %v666
        %v697 = vadd.f32 %v504, %v668
        %v698 = vadd.f32 %v505, %v671
        %v699 = vadd.f32 %v506, %v673
        %v700 = vadd.f32 %v507, %v676
        %v701 = vadd.f32 %v508, %v678
        %v702 = vadd.f32 %v509, %v681
        %v703 = vadd.f32 %v510, %v683
        %v704 = vadd.f32 %v511, %v686
        %v705 = vadd.f32 %v512, %v688
        %706 = vst [vmem:[#allocation2] sm:$0xff] %v690
        %707 = vst [vmem:[#allocation2 + $0x8] sm:$0xff] %v691
        %708 = vst [vmem:[#allocation2 + $0x10] sm:$0xff] %v692
        %709 = vst [vmem:[#allocation2 + $0x18] sm:$0xff] %v693
        %710 = vst [vmem:[#allocation2 + $0x20] sm:$0xff] %v694
        %711 = vst [vmem:[#allocation2 + $0x28] sm:$0xff] %v695
        %712 = vst [vmem:[#allocation2 + $0x30] sm:$0xff] %v696
        %713 = vst [vmem:[#allocation2 + $0x38] sm:$0xff] %v697
        %714 = vst [vmem:[#allocation2 + $0x40] sm:$0xff] %v698
        %715 = vst [vmem:[#allocation2 + $0x48] sm:$0xff] %v699
        %716 = vst [vmem:[#allocation2 + $0x50] sm:$0xff] %v700
        %717 = vst [vmem:[#allocation2 + $0x58] sm:$0xff] %v701
        %718 = vst [vmem:[#allocation2 + $0x60] sm:$0xff] %v702
        %719 = vst [vmem:[#allocation2 + $0x68] sm:$0xff] %v703
        %720 = vst [vmem:[#allocation2 + $0x70] sm:$0xff] %v704
        %721 = vst [vmem:[#allocation2 + $0x78] sm:$0xff] %v705
        %p722 = scmp.eq.s32.totalorder %s30, 1
        // Predicated region
        $region77: #{gin_net_forward.6} parent=59 // pred_check
          %p723 = pneg %p722
        $region78: #{gin_net_forward.6} parent=59 // pred_check_branch
          %725 = sbr.rel (%p723) target = $region80
        $region79: #{gin_net_forward.6} parent=59 // pred_region
          %v726 = vld [vmem:[%s469] sm:$0xf]
          %v727 = vld [vmem:[%s469 + $0x4] sm:$0xf]
          %v728 = vld [vmem:[%s469 + $0x8] sm:$0xf]
          %v729 = vld [vmem:[%s469 + $0xc] sm:$0xf]
          %v730 = vld [vmem:[%s469 + $0x10] sm:$0xf]
          %v731 = vld [vmem:[%s469 + $0x14] sm:$0xf]
          %v732 = vld [vmem:[%s469 + $0x18] sm:$0xf]
          %v733 = vld [vmem:[%s469 + $0x1c] sm:$0xf]
          %v734 = vld [vmem:[%s469 + $0x20] sm:$0xf]
          %v735 = vld [vmem:[%s469 + $0x24] sm:$0xf]
          %v736 = vld [vmem:[%s469 + $0x28] sm:$0xf]
          %v737 = vld [vmem:[%s469 + $0x2c] sm:$0xf]
          %v738 = vld [vmem:[%s469 + $0x30] sm:$0xf]
          %v739 = vld [vmem:[%s469 + $0x34] sm:$0xf]
          %v740 = vld [vmem:[%s469 + $0x38] sm:$0xf]
          %v741 = vld [vmem:[%s469 + $0x3c] sm:$0xf]
          %v742 = vunpack.c.l.bf16 %v726
          %v743 = vunpack.c.l.bf16 %v727
          %v744 = vunpack.c.l.bf16 %v728
          %v745 = vunpack.c.l.bf16 %v729
          %v746 = vunpack.c.l.bf16 %v730
          %v747 = vunpack.c.l.bf16 %v731
          %v748 = vunpack.c.l.bf16 %v732
          %v749 = vunpack.c.l.bf16 %v733
          %v750 = vunpack.c.l.bf16 %v734
          %v751 = vunpack.c.l.bf16 %v735
          %v752 = vunpack.c.l.bf16 %v736
          %v753 = vunpack.c.l.bf16 %v737
          %v754 = vunpack.c.l.bf16 %v738
          %v755 = vunpack.c.l.bf16 %v739
          %v756 = vunpack.c.l.bf16 %v740
          %v757 = vunpack.c.l.bf16 %v741
          %v758 = vld [vmem:[#allocation2] sm:$0xff]
          %v759 = vld [vmem:[#allocation2 + $0x8] sm:$0xff]
          %v760 = vld [vmem:[#allocation2 + $0x10] sm:$0xff]
          %v761 = vld [vmem:[#allocation2 + $0x18] sm:$0xff]
          %v762 = vld [vmem:[#allocation2 + $0x20] sm:$0xff]
          %v763 = vld [vmem:[#allocation2 + $0x28] sm:$0xff]
          %v764 = vld [vmem:[#allocation2 + $0x30] sm:$0xff]
          %v765 = vld [vmem:[#allocation2 + $0x38] sm:$0xff]
          %v766 = vld [vmem:[#allocation2 + $0x40] sm:$0xff]
          %v767 = vld [vmem:[#allocation2 + $0x48] sm:$0xff]
          %v768 = vld [vmem:[#allocation2 + $0x50] sm:$0xff]
          %v769 = vld [vmem:[#allocation2 + $0x58] sm:$0xff]
          %v770 = vld [vmem:[#allocation2 + $0x60] sm:$0xff]
          %v771 = vld [vmem:[#allocation2 + $0x68] sm:$0xff]
          %v772 = vld [vmem:[#allocation2 + $0x70] sm:$0xff]
          %v773 = vld [vmem:[#allocation2 + $0x78] sm:$0xff]
          %v774 = vld [vmem:[%s3] sm:$0x1]
          %v776 = vperm.slane %v774, 0
          %v778 = vmul.f32 %v776, %v742
          %v779 = vmul.f32 %v776, %v743
          %v780 = vmul.f32 %v776, %v744
          %v781 = vmul.f32 %v776, %v745
          %v782 = vmul.f32 %v776, %v746
          %v783 = vmul.f32 %v776, %v747
          %v784 = vmul.f32 %v776, %v748
          %v785 = vmul.f32 %v776, %v749
          %v786 = vmul.f32 %v776, %v750
          %v787 = vmul.f32 %v776, %v751
          %v788 = vmul.f32 %v776, %v752
          %v789 = vmul.f32 %v776, %v753
          %v790 = vmul.f32 %v776, %v754
          %v791 = vmul.f32 %v776, %v755
          %v792 = vmul.f32 %v776, %v756
          %v793 = vmul.f32 %v776, %v757
          %v794 = vadd.f32 %v758, %v778
          %v795 = vadd.f32 %v759, %v779
          %v796 = vadd.f32 %v760, %v780
          %v797 = vadd.f32 %v761, %v781
          %v798 = vadd.f32 %v762, %v782
          %v799 = vadd.f32 %v763, %v783
          %v800 = vadd.f32 %v764, %v784
          %v801 = vadd.f32 %v765, %v785
          %v802 = vadd.f32 %v766, %v786
          %v803 = vadd.f32 %v767, %v787
          %v804 = vadd.f32 %v768, %v788
          %v805 = vadd.f32 %v769, %v789
          %v806 = vadd.f32 %v770, %v790
          %v807 = vadd.f32 %v771, %v791
          %v808 = vadd.f32 %v772, %v792
          %v809 = vadd.f32 %v773, %v793
          %v810 = vpack.c.bf16 %v795, %v794
          %v811 = vpack.c.bf16 %v797, %v796
          %v812 = vpack.c.bf16 %v799, %v798
          %v813 = vpack.c.bf16 %v801, %v800
          %v814 = vpack.c.bf16 %v803, %v802
          %v815 = vpack.c.bf16 %v805, %v804
          %v816 = vpack.c.bf16 %v807, %v806
          %v817 = vpack.c.bf16 %v809, %v808
          %v818 = vld [vmem:[#allocation5] sm:$0xf]
          %v819 = vld [vmem:[#allocation5 + $0x4] sm:$0xf]
          %v820 = vld [vmem:[#allocation5 + $0x8] sm:$0xf]
          %v821 = vld [vmem:[#allocation5 + $0xc] sm:$0xf]
          %v822 = vld [vmem:[#allocation5 + $0x10] sm:$0xf]
          %v823 = vld [vmem:[#allocation5 + $0x14] sm:$0xf]
          %v824 = vld [vmem:[#allocation5 + $0x18] sm:$0xf]
          %v825 = vld [vmem:[#allocation5 + $0x1c] sm:$0xf]
          %v826 = vld [vmem:[#allocation5 + $0x20] sm:$0xf]
          %v827 = vld [vmem:[#allocation5 + $0x24] sm:$0xf]
          %v828 = vld [vmem:[#allocation5 + $0x28] sm:$0xf]
          %v829 = vld [vmem:[#allocation5 + $0x2c] sm:$0xf]
          %v830 = vld [vmem:[#allocation5 + $0x30] sm:$0xf]
          %v831 = vld [vmem:[#allocation5 + $0x34] sm:$0xf]
          %v832 = vld [vmem:[#allocation5 + $0x38] sm:$0xf]
          %v833 = vld [vmem:[#allocation5 + $0x3c] sm:$0xf]
          %v834 = vld [vmem:[%s5] sm:$0x1]
          %v836 = vperm.slane %v834, 0
          %v854 = vunpack.c.l.b16 %v818
          %v855 = vunpack.c.l.b16 %v819
          %v856 = vunpack.c.l.b16 %v820
          %v857 = vunpack.c.l.b16 %v821
          %v858 = vunpack.c.l.b16 %v822
          %v859 = vunpack.c.l.b16 %v823
          %v860 = vunpack.c.l.b16 %v824
          %v861 = vunpack.c.l.b16 %v825
          %v862 = vunpack.c.l.b16 %v826
          %v863 = vunpack.c.l.b16 %v827
          %v864 = vunpack.c.l.b16 %v828
          %v865 = vunpack.c.l.b16 %v829
          %v866 = vunpack.c.l.b16 %v830
          %v867 = vunpack.c.l.b16 %v831
          %v868 = vunpack.c.l.b16 %v832
          %v869 = vunpack.c.l.b16 %v833
          %v870 = vpack.c.b16 %v855, %v854
          %v871 = vpack.c.b16 %v857, %v856
          %v872 = vpack.c.b16 %v859, %v858
          %v873 = vpack.c.b16 %v861, %v860
          %v874 = vpack.c.b16 %v863, %v862
          %v875 = vpack.c.b16 %v865, %v864
          %v876 = vpack.c.b16 %v867, %v866
          %v877 = vpack.c.b16 %v869, %v868
          %886 = vmatpush.bf16.msra.mxu0 %v877
          %887 = vmatpush.bf16.msra.mxu0 %v876
          %888 = vmatpush.bf16.msra.mxu0 %v875
          %889 = vmatpush.bf16.msra.mxu0 %v874
          %890 = vmatpush.bf16.msra.mxu0 %v873
          %891 = vmatpush.bf16.msra.mxu0 %v872
          %892 = vmatpush.bf16.msra.mxu0 %v871
          %893 = vmatpush.bf16.msra.mxu0 %v870
          %894 = vmatmul.bf16.gmra.mxu0 %v810
          %v895 = vpop.f32.mrf.mxu0
          %v896 = vadd.f32 %v836, %v895
          %v897 = vpop.f32.mrf.mxu0
          %v898 = vadd.f32 %v836, %v897
          %899 = vmatmul.bf16.gmra.mxu0 %v811
          %v900 = vpop.f32.mrf.mxu0
          %v901 = vadd.f32 %v836, %v900
          %v902 = vpop.f32.mrf.mxu0
          %v903 = vadd.f32 %v836, %v902
          %904 = vmatmul.bf16.gmra.mxu0 %v812
          %v905 = vpop.f32.mrf.mxu0
          %v906 = vadd.f32 %v836, %v905
          %v907 = vpop.f32.mrf.mxu0
          %v908 = vadd.f32 %v836, %v907
          %909 = vmatmul.bf16.gmra.mxu0 %v813
          %v910 = vpop.f32.mrf.mxu0
          %v911 = vadd.f32 %v836, %v910
          %v912 = vpop.f32.mrf.mxu0
          %v913 = vadd.f32 %v836, %v912
          %914 = vmatmul.bf16.gmra.mxu0 %v814
          %v915 = vpop.f32.mrf.mxu0
          %v916 = vadd.f32 %v836, %v915
          %v917 = vpop.f32.mrf.mxu0
          %v918 = vadd.f32 %v836, %v917
          %919 = vmatmul.bf16.gmra.mxu0 %v815
          %v920 = vpop.f32.mrf.mxu0
          %v921 = vadd.f32 %v836, %v920
          %v922 = vpop.f32.mrf.mxu0
          %v923 = vadd.f32 %v836, %v922
          %924 = vmatmul.bf16.gmra.mxu0 %v816
          %v925 = vpop.f32.mrf.mxu0
          %v926 = vadd.f32 %v836, %v925
          %v927 = vpop.f32.mrf.mxu0
          %v928 = vadd.f32 %v836, %v927
          %929 = vmatmul.bf16.gmra.mxu0 %v817
          %v930 = vpop.f32.mrf.mxu0
          %v931 = vadd.f32 %v836, %v930
          %v932 = vpop.f32.mrf.mxu0
          %v933 = vadd.f32 %v836, %v932
          %934 = vdwg.mxu0
          %v935 = vmax.f32 %v896, 0.0
          %v936 = vmax.f32 %v898, 0.0
          %v937 = vmax.f32 %v901, 0.0
          %v938 = vmax.f32 %v903, 0.0
          %v939 = vmax.f32 %v906, 0.0
          %v940 = vmax.f32 %v908, 0.0
          %v941 = vmax.f32 %v911, 0.0
          %v942 = vmax.f32 %v913, 0.0
          %v943 = vmax.f32 %v916, 0.0
          %v944 = vmax.f32 %v918, 0.0
          %v945 = vmax.f32 %v921, 0.0
          %v946 = vmax.f32 %v923, 0.0
          %v947 = vmax.f32 %v926, 0.0
          %v948 = vmax.f32 %v928, 0.0
          %v949 = vmax.f32 %v931, 0.0
          %v950 = vmax.f32 %v933, 0.0
          %v951 = vpack.c.bf16 %v936, %v935
          %v952 = vpack.c.bf16 %v938, %v937
          %v953 = vpack.c.bf16 %v940, %v939
          %v954 = vpack.c.bf16 %v942, %v941
          %v955 = vpack.c.bf16 %v944, %v943
          %v956 = vpack.c.bf16 %v946, %v945
          %v957 = vpack.c.bf16 %v948, %v947
          %v958 = vpack.c.bf16 %v950, %v949
          %v959 = vld [vmem:[#allocation7] sm:$0xf]
          %v960 = vld [vmem:[#allocation7 + $0x4] sm:$0xf]
          %v961 = vld [vmem:[#allocation7 + $0x8] sm:$0xf]
          %v962 = vld [vmem:[#allocation7 + $0xc] sm:$0xf]
          %v963 = vld [vmem:[#allocation7 + $0x10] sm:$0xf]
          %v964 = vld [vmem:[#allocation7 + $0x14] sm:$0xf]
          %v965 = vld [vmem:[#allocation7 + $0x18] sm:$0xf]
          %v966 = vld [vmem:[#allocation7 + $0x1c] sm:$0xf]
          %v967 = vld [vmem:[#allocation7 + $0x20] sm:$0xf]
          %v968 = vld [vmem:[#allocation7 + $0x24] sm:$0xf]
          %v969 = vld [vmem:[#allocation7 + $0x28] sm:$0xf]
          %v970 = vld [vmem:[#allocation7 + $0x2c] sm:$0xf]
          %v971 = vld [vmem:[#allocation7 + $0x30] sm:$0xf]
          %v972 = vld [vmem:[#allocation7 + $0x34] sm:$0xf]
          %v973 = vld [vmem:[#allocation7 + $0x38] sm:$0xf]
          %v974 = vld [vmem:[#allocation7 + $0x3c] sm:$0xf]
          %v975 = vld [vmem:[%s7] sm:$0x1]
          %v977 = vperm.slane %v975, 0
          %v995 = vunpack.c.l.b16 %v959
          %v996 = vunpack.c.l.b16 %v960
          %v997 = vunpack.c.l.b16 %v961
          %v998 = vunpack.c.l.b16 %v962
          %v999 = vunpack.c.l.b16 %v963
          %v1000 = vunpack.c.l.b16 %v964
          %v1001 = vunpack.c.l.b16 %v965
          %v1002 = vunpack.c.l.b16 %v966
          %v1003 = vunpack.c.l.b16 %v967
          %v1004 = vunpack.c.l.b16 %v968
          %v1005 = vunpack.c.l.b16 %v969
          %v1006 = vunpack.c.l.b16 %v970
          %v1007 = vunpack.c.l.b16 %v971
          %v1008 = vunpack.c.l.b16 %v972
          %v1009 = vunpack.c.l.b16 %v973
          %v1010 = vunpack.c.l.b16 %v974
          %v1011 = vpack.c.b16 %v996, %v995
          %v1012 = vpack.c.b16 %v998, %v997
          %v1013 = vpack.c.b16 %v1000, %v999
          %v1014 = vpack.c.b16 %v1002, %v1001
          %v1015 = vpack.c.b16 %v1004, %v1003
          %v1016 = vpack.c.b16 %v1006, %v1005
          %v1017 = vpack.c.b16 %v1008, %v1007
          %v1018 = vpack.c.b16 %v1010, %v1009
          %1027 = vmatpush.bf16.msra.mxu0 %v1018
          %1028 = vmatpush.bf16.msra.mxu0 %v1017
          %1029 = vmatpush.bf16.msra.mxu0 %v1016
          %1030 = vmatpush.bf16.msra.mxu0 %v1015
          %1031 = vmatpush.bf16.msra.mxu0 %v1014
          %1032 = vmatpush.bf16.msra.mxu0 %v1013
          %1033 = vmatpush.bf16.msra.mxu0 %v1012
          %1034 = vmatpush.bf16.msra.mxu0 %v1011
          %1035 = vmatmul.bf16.gmra.mxu0 %v951
          %v1036 = vpop.f32.mrf.mxu0
          %v1037 = vadd.f32 %v977, %v1036
          %v1038 = vpop.f32.mrf.mxu0
          %v1039 = vadd.f32 %v977, %v1038
          %1040 = vmatmul.bf16.gmra.mxu0 %v952
          %v1041 = vpop.f32.mrf.mxu0
          %v1042 = vadd.f32 %v977, %v1041
          %v1043 = vpop.f32.mrf.mxu0
          %v1044 = vadd.f32 %v977, %v1043
          %1045 = vmatmul.bf16.gmra.mxu0 %v953
          %v1046 = vpop.f32.mrf.mxu0
          %v1047 = vadd.f32 %v977, %v1046
          %v1048 = vpop.f32.mrf.mxu0
          %v1049 = vadd.f32 %v977, %v1048
          %1050 = vmatmul.bf16.gmra.mxu0 %v954
          %v1051 = vpop.f32.mrf.mxu0
          %v1052 = vadd.f32 %v977, %v1051
          %v1053 = vpop.f32.mrf.mxu0
          %v1054 = vadd.f32 %v977, %v1053
          %1055 = vmatmul.bf16.gmra.mxu0 %v955
          %v1056 = vpop.f32.mrf.mxu0
          %v1057 = vadd.f32 %v977, %v1056
          %v1058 = vpop.f32.mrf.mxu0
          %v1059 = vadd.f32 %v977, %v1058
          %1060 = vmatmul.bf16.gmra.mxu0 %v956
          %v1061 = vpop.f32.mrf.mxu0
          %v1062 = vadd.f32 %v977, %v1061
          %v1063 = vpop.f32.mrf.mxu0
          %v1064 = vadd.f32 %v977, %v1063
          %1065 = vmatmul.bf16.gmra.mxu0 %v957
          %v1066 = vpop.f32.mrf.mxu0
          %v1067 = vadd.f32 %v977, %v1066
          %v1068 = vpop.f32.mrf.mxu0
          %v1069 = vadd.f32 %v977, %v1068
          %1070 = vmatmul.bf16.gmra.mxu0 %v958
          %v1071 = vpop.f32.mrf.mxu0
          %v1072 = vadd.f32 %v977, %v1071
          %v1073 = vpop.f32.mrf.mxu0
          %v1074 = vadd.f32 %v977, %v1073
          %1075 = vdwg.mxu0
          %v1076 = vld [vmem:[%s8] sm:$0x1]
          %v1078 = vperm.slane %v1076, 0
          %v1080 = vmul.f32 %v1037, %v1078
          %v1081 = vmul.f32 %v1039, %v1078
          %v1082 = vmul.f32 %v1042, %v1078
          %v1083 = vmul.f32 %v1044, %v1078
          %v1084 = vmul.f32 %v1047, %v1078
          %v1085 = vmul.f32 %v1049, %v1078
          %v1086 = vmul.f32 %v1052, %v1078
          %v1087 = vmul.f32 %v1054, %v1078
          %v1088 = vmul.f32 %v1057, %v1078
          %v1089 = vmul.f32 %v1059, %v1078
          %v1090 = vmul.f32 %v1062, %v1078
          %v1091 = vmul.f32 %v1064, %v1078
          %v1092 = vmul.f32 %v1067, %v1078
          %v1093 = vmul.f32 %v1069, %v1078
          %v1094 = vmul.f32 %v1072, %v1078
          %v1095 = vmul.f32 %v1074, %v1078
          %v1096 = vld [vmem:[%s9] sm:$0x1]
          %v1098 = vperm.slane %v1096, 0
          %v1100 = vadd.f32 %v1080, %v1098
          %v1101 = vadd.f32 %v1081, %v1098
          %v1102 = vadd.f32 %v1082, %v1098
          %v1103 = vadd.f32 %v1083, %v1098
          %v1104 = vadd.f32 %v1084, %v1098
          %v1105 = vadd.f32 %v1085, %v1098
          %v1106 = vadd.f32 %v1086, %v1098
          %v1107 = vadd.f32 %v1087, %v1098
          %v1108 = vadd.f32 %v1088, %v1098
          %v1109 = vadd.f32 %v1089, %v1098
          %v1110 = vadd.f32 %v1090, %v1098
          %v1111 = vadd.f32 %v1091, %v1098
          %v1112 = vadd.f32 %v1092, %v1098
          %v1113 = vadd.f32 %v1093, %v1098
          %v1114 = vadd.f32 %v1094, %v1098
          %v1115 = vadd.f32 %v1095, %v1098
          %v1116 = vmax.f32 %v1100, 0.0
          %v1117 = vmax.f32 %v1101, 0.0
          %v1118 = vmax.f32 %v1102, 0.0
          %v1119 = vmax.f32 %v1103, 0.0
          %v1120 = vmax.f32 %v1104, 0.0
          %v1121 = vmax.f32 %v1105, 0.0
          %v1122 = vmax.f32 %v1106, 0.0
          %v1123 = vmax.f32 %v1107, 0.0
          %v1124 = vmax.f32 %v1108, 0.0
          %v1125 = vmax.f32 %v1109, 0.0
          %v1126 = vmax.f32 %v1110, 0.0
          %v1127 = vmax.f32 %v1111, 0.0
          %v1128 = vmax.f32 %v1112, 0.0
          %v1129 = vmax.f32 %v1113, 0.0
          %v1130 = vmax.f32 %v1114, 0.0
          %v1131 = vmax.f32 %v1115, 0.0
          %v1132 = vadd.f32 %v1116, %v742
          %v1133 = vadd.f32 %v1117, %v743
          %v1134 = vadd.f32 %v1118, %v744
          %v1135 = vadd.f32 %v1119, %v745
          %v1136 = vadd.f32 %v1120, %v746
          %v1137 = vadd.f32 %v1121, %v747
          %v1138 = vadd.f32 %v1122, %v748
          %v1139 = vadd.f32 %v1123, %v749
          %v1140 = vadd.f32 %v1124, %v750
          %v1141 = vadd.f32 %v1125, %v751
          %v1142 = vadd.f32 %v1126, %v752
          %v1143 = vadd.f32 %v1127, %v753
          %v1144 = vadd.f32 %v1128, %v754
          %v1145 = vadd.f32 %v1129, %v755
          %v1146 = vadd.f32 %v1130, %v756
          %v1147 = vadd.f32 %v1131, %v757
          %v1148 = vpack.c.bf16 %v1132, %v1132
          %v1149 = vpack.c.bf16 %v1133, %v1133
          %v1150 = vpack.c.bf16 %v1134, %v1134
          %v1151 = vpack.c.bf16 %v1135, %v1135
          %v1152 = vpack.c.bf16 %v1136, %v1136
          %v1153 = vpack.c.bf16 %v1137, %v1137
          %v1154 = vpack.c.bf16 %v1138, %v1138
          %v1155 = vpack.c.bf16 %v1139, %v1139
          %v1156 = vpack.c.bf16 %v1140, %v1140
          %v1157 = vpack.c.bf16 %v1141, %v1141
          %v1158 = vpack.c.bf16 %v1142, %v1142
          %v1159 = vpack.c.bf16 %v1143, %v1143
          %v1160 = vpack.c.bf16 %v1144, %v1144
          %v1161 = vpack.c.bf16 %v1145, %v1145
          %v1162 = vpack.c.bf16 %v1146, %v1146
          %v1163 = vpack.c.bf16 %v1147, %v1147
          %1164 = vst [vmem:[%s475] sm:$0xf] %v1148
          %1165 = vst [vmem:[%s475 + $0x4] sm:$0xf] %v1149
          %1166 = vst [vmem:[%s475 + $0x8] sm:$0xf] %v1150
          %1167 = vst [vmem:[%s475 + $0xc] sm:$0xf] %v1151
          %1168 = vst [vmem:[%s475 + $0x10] sm:$0xf] %v1152
          %1169 = vst [vmem:[%s475 + $0x14] sm:$0xf] %v1153
          %1170 = vst [vmem:[%s475 + $0x18] sm:$0xf] %v1154
          %1171 = vst [vmem:[%s475 + $0x1c] sm:$0xf] %v1155
          %1172 = vst [vmem:[%s475 + $0x20] sm:$0xf] %v1156
          %1173 = vst [vmem:[%s475 + $0x24] sm:$0xf] %v1157
          %1174 = vst [vmem:[%s475 + $0x28] sm:$0xf] %v1158
          %1175 = vst [vmem:[%s475 + $0x2c] sm:$0xf] %v1159
          %1176 = vst [vmem:[%s475 + $0x30] sm:$0xf] %v1160
          %1177 = vst [vmem:[%s475 + $0x34] sm:$0xf] %v1161
          %1178 = vst [vmem:[%s475 + $0x38] sm:$0xf] %v1162
          %1179 = vst [vmem:[%s475 + $0x3c] sm:$0xf] %v1163
        $region80: #{gin_net_forward.6} parent=59 // pred_fallthru
          _
        %s1180 = smul.u32 16, %s29
        %p1181 = scmp.lt.s32.totalorder %s1180, 31
        %s1182 = scalar_select %p1181, %s1180, 31
        %s1183 = smul.addr %s1182, 4
        %s1184 = scalar_lea.vmem %s10, %s1183
        // Predicated region
        $region81: #{gin_net_forward.6} parent=59 // pred_check
          %p1185 = pneg %p282
        $region82: #{gin_net_forward.6} parent=59 // pred_check_branch
          %1187 = sbr.rel (%p1185) target = $region84
        $region83: #{gin_net_forward.6} parent=59 // pred_region
          %s1188 = smul.u32 16, %s29
        $region84: #{gin_net_forward.6} parent=59 // pred_fallthru
          _
      $region60: #{gin_net_forward.6} parent=5 // pred_fallthru
        _
      %p1189 = scmp.le.s32.totalorder 2, %s20
      // Predicated region
      $region85: #{gin_net_forward.6} parent=5 // pred_check
        %p1190 = pneg %p1189
      $region86: #{gin_net_forward.6} parent=5 // pred_check_branch
        %1192 = sbr.rel (%p1190) target = $region88
      $region87: #{gin_net_forward.6} parent=5 // pred_region
        %s1193 = ssub.s32 %s20, 2
        // Predicated region
        $region89: #{gin_net_forward.6} parent=87 // pred_check
          %p1194 = pneg %p288
        $region90: #{gin_net_forward.6} parent=87 // pred_check_branch
          %1196 = sbr.rel (%p1194) target = $region92
        $region91: #{gin_net_forward.6} parent=87 // pred_region
          %s1197 = smul.u32 16, %s31
          %p1198 = scmp.lt.s32.totalorder %s1197, 31
          %s1199 = scalar_select %p1198, %s1197, 31
          %s1200 = smul.addr %s1199, 4
          %s1201 = scalar_lea.vmem %s10, %s1200
        $region92: #{gin_net_forward.6} parent=87 // pred_fallthru
          _
      $region88: #{gin_net_forward.6} parent=5 // pred_fallthru
        _
    $region6: #{gin_net_forward.6} parent=1 // loop_footer
      %s24 = sadd.s32 1, %s20
    $region7: #{gin_net_forward.6} parent=1 // loop_footer_branch
      %19 = sbr.rel target = $region3
    $region8: #{gin_net_forward.6} parent=1 // loop_exit
      _
    %1202 = vsyncpa [#allocation4], 1
    %s1203 = scalar_lea.sflag [#allocation4], 1
    %1204 = vsyncpa %s1203, 1
    %1205 = vsyncpa [#allocation6], 1

// kernel: gin_net_forward.5
$region0: #{gin_net_forward.5}
  #allocation0 [shape = 'u32[]', space=smem, size = 0x4, offset = 0x4, fixed_abs, tag = 'smem constant byte address 0x4 - core index']
  #allocation1 [shape = 'u32[72,128]{1,0:T(1,128)}', space=vmem, size = 0x9000, scoped, tag = 'internal scratch']
  #allocation2 [shape = 'f32[128,128]{1,0:T(8,128)}', space=vmem, size = 0x10000, scoped, tag = 'scratch operand']
  %s0 = inlined_call_operand.hbm [shape: bf16[256,256], index: 0, kind: input, shape index: {}]
  %s1 = inlined_call_operand.vmem [shape: bf16[256,128], index: 1, kind: input, shape index: {}, may-alias: {1,2}]
  %s2 = inlined_call_operand.vmem [shape: bf16[256,128], index: 2, kind: input, shape index: {}, may-alias: {1,2}]
  %s3 = inlined_call_operand.vmem [shape: f32[1,128], index: 3, kind: input, shape index: {}]
  %s4 = inlined_call_operand.vmem [shape: bf16[128,128], index: 4, kind: input, shape index: {}]
  %s5 = inlined_call_operand.vmem [shape: f32[1,128], index: 5, kind: input, shape index: {}]
  %s6 = inlined_call_operand.vmem [shape: bf16[128,128], index: 6, kind: input, shape index: {}]
  %s7 = inlined_call_operand.vmem [shape: f32[1,128], index: 7, kind: input, shape index: {}]
  %s8 = inlined_call_operand.vmem [shape: f32[1,128], index: 8, kind: input, shape index: {}]
  %s9 = inlined_call_operand.vmem [shape: f32[1,128], index: 9, kind: input, shape index: {}]
  %s10 = inlined_call_operand.vmem [shape: bf16[256,128], index: 10, kind: output, shape index: {}]
  %s11 = sld [smem:[#allocation0]]
  $region85: #{gin_net_forward.5} parent=0
    _
  %s13 = ssub.s32 1, %s11
  %s14 = scalar_select 0, %s13, %s11
  $region1: #{gin_net_forward.5} parent=0
    #allocation3 [shape = 'u8[65536]{0}', space=vmem, size = 0x10000, scoped, tag = 'input window, operand 0']
    #allocation4 [shape = 's32[2]{0}', space=sflag, size = 0x8, scoped, tag = 'scoped memory for gin_net_forward.5']
    %15 = vsyncpa [#allocation4], 0
    %s16 = scalar_lea.sflag [#allocation4], 1
    %17 = vsyncpa %s16, 0
    loop: start=0, step=1, limit=6
    $region2: #{gin_net_forward.5} parent=1 // loop_pre_header
      _
    $region3: #{gin_net_forward.5} parent=1 // loop_header
      %s19 = sphi 0, %s23
      %p20 = scmp.ge.s32.totalorder %s19, 6
      %s26 = sphi 0, %s38
      %s27 = sphi 0, %s34
      %s28 = sphi 0, %s26
      %s29 = sphi 0, %s27
      %s30 = sphi 0, %s28
      %s31 = sphi 0, %s29
      %s43 = sphi 0, %s45
      %s46 = sphi 0, %s43
      %s47 = sphi 0, %s46
      %s63 = sphi 0, %s47
      %s69 = sphi 0, %s71
      %s72 = sphi 0, %s69
      %s73 = sphi 0, %s72
      %s89 = sphi 0, %s73
      %s95 = sphi 0, %s97
      %s98 = sphi 0, %s95
      %s99 = sphi 0, %s98
      %s115 = sphi 0, %s99
      %s119 = sphi 0, %s119
      %s121 = sphi 0, %s119
      %s122 = sphi 0, %s121
      %s136 = sphi 0, %s122
      %s140 = sphi 0, %s140
      %s142 = sphi 0, %s140
      %s143 = sphi 0, %s142
      %s157 = sphi 0, %s143
      %s161 = sphi 0, %s161
      %s163 = sphi 0, %s161
      %s164 = sphi 0, %s163
      %s178 = sphi 0, %s164
      %s182 = sphi 0, %s182
      %s184 = sphi 0, %s182
      %s185 = sphi 0, %s184
      %s199 = sphi 0, %s185
      %s203 = sphi 0, %s203
      %s205 = sphi 0, %s203
      %s206 = sphi 0, %s205
      %s220 = sphi 0, %s206
      %s224 = sphi 0, %s224
      %s226 = sphi 0, %s224
      %s227 = sphi 0, %s226
      %s241 = sphi 0, %s227
      %s245 = sphi 0, %s245
      %s247 = sphi 0, %s245
      %s248 = sphi 0, %s247
      %s262 = sphi 0, %s248
      %s268 = sphi 0, %s270
      %s271 = sphi 0, %s268
      %s272 = sphi 0, %s271
      %s288 = sphi 0, %s272
    $region4: #{gin_net_forward.5} parent=1 // loop_header_branch
      %22 = sbr.rel (%p20) target = $region8
    $region5: #{gin_net_forward.5} parent=1 // loop_body
      %s24 = ssub.s32 %s19, 1
      %s25 = ssub.s32 %s19, 2
      %s32 = sadd.s32 1, %s27
      %p33 = scmp.ge.s32.totalorder %s32, 2
      %s34 = scalar_select %p33, 0, %s32
      %s35 = sadd.s32 1, %s26
      %s36 = scalar_select %p33, %s35, %s26
      %p37 = scmp.ge.s32.totalorder %s36, 2
      %s38 = scalar_select %p37, 0, %s36
      %s39 = ssub.s32 %s26, %s38
      %s40 = ssub.s32 %s27, %s34
      %s41 = sor.u32 %s39, %s40
      %p42 = scmp.eq.s32.totalorder %s41, 0
      %s44 = sadd.s32 %s43, 1
      %s45 = scalar_select %p42, %s43, %s44
      %p48 = pneg %p42
      %p49 = scmp.eq.s32.totalorder %s19, 3
      %p50 = por %p48, %p49
      %p51 = scmp.ne.s32.totalorder %s43, %s46
      %p52 = scmp.eq.s32.totalorder %s19, 0
      %p53 = por %p51, %p52
      %p54 = scmp.ne.s32.totalorder %s43, %s46
      %p55 = scmp.eq.s32.totalorder %s24, 3
      %p56 = por %p54, %p55
      %p57 = scmp.ne.s32.totalorder %s46, %s47
      %p58 = scmp.eq.s32.totalorder %s24, 0
      %p59 = por %p57, %p58
      %p60 = scmp.ne.s32.totalorder %s46, %s47
      %p61 = scmp.eq.s32.totalorder %s25, 3
      %p62 = por %p60, %p61
      %p64 = scmp.ne.s32.totalorder %s47, %s63
      %p65 = scmp.eq.s32.totalorder %s25, 0
      %p66 = por %p64, %p65
      %s67 = ssub.s32 %s27, %s34
      %p68 = scmp.eq.s32.totalorder %s67, 0
      %s70 = sadd.s32 %s69, 1
      %s71 = scalar_select %p68, %s69, %s70
      %p74 = pneg %p68
      %p75 = scmp.eq.s32.totalorder %s19, 3
      %p76 = por %p74, %p75
      %p77 = scmp.ne.s32.totalorder %s69, %s72
      %p78 = scmp.eq.s32.totalorder %s19, 0
      %p79 = por %p77, %p78
      %p80 = scmp.ne.s32.totalorder %s69, %s72
      %p81 = scmp.eq.s32.totalorder %s24, 3
      %p82 = por %p80, %p81
      %p83 = scmp.ne.s32.totalorder %s72, %s73
      %p84 = scmp.eq.s32.totalorder %s24, 0
      %p85 = por %p83, %p84
      %p86 = scmp.ne.s32.totalorder %s72, %s73
      %p87 = scmp.eq.s32.totalorder %s25, 3
      %p88 = por %p86, %p87
      %p90 = scmp.ne.s32.totalorder %s73, %s89
      %p91 = scmp.eq.s32.totalorder %s25, 0
      %p92 = por %p90, %p91
      %s93 = ssub.s32 %s26, %s38
      %p94 = scmp.eq.s32.totalorder %s93, 0
      %s96 = sadd.s32 %s95, 1
      %s97 = scalar_select %p94, %s95, %s96
      %p100 = pneg %p94
      %p101 = scmp.eq.s32.totalorder %s19, 3
      %p102 = por %p100, %p101
      %p103 = scmp.ne.s32.totalorder %s95, %s98
      %p104 = scmp.eq.s32.totalorder %s19, 0
      %p105 = por %p103, %p104
      %p106 = scmp.ne.s32.totalorder %s95, %s98
      %p107 = scmp.eq.s32.totalorder %s24, 3
      %p108 = por %p106, %p107
      %p109 = scmp.ne.s32.totalorder %s98, %s99
      %p110 = scmp.eq.s32.totalorder %s24, 0
      %p111 = por %p109, %p110
      %p112 = scmp.ne.s32.totalorder %s98, %s99
      %p113 = scmp.eq.s32.totalorder %s25, 3
      %p114 = por %p112, %p113
      %p116 = scmp.ne.s32.totalorder %s99, %s115
      %p117 = scmp.eq.s32.totalorder %s25, 0
      %p118 = por %p116, %p117
      %s120 = sadd.s32 %s119, 1
      %p123 = scmp.eq.s32.totalorder %s19, 3
      %p124 = scmp.ne.s32.totalorder %s119, %s121
      %p125 = scmp.eq.s32.totalorder %s19, 0
      %p126 = por %p124, %p125
      %p127 = scmp.ne.s32.totalorder %s119, %s121
      %p128 = scmp.eq.s32.totalorder %s24, 3
      %p129 = por %p127, %p128
      %p130 = scmp.ne.s32.totalorder %s121, %s122
      %p131 = scmp.eq.s32.totalorder %s24, 0
      %p132 = por %p130, %p131
      %p133 = scmp.ne.s32.totalorder %s121, %s122
      %p134 = scmp.eq.s32.totalorder %s25, 3
      %p135 = por %p133, %p134
      %p137 = scmp.ne.s32.totalorder %s122, %s136
      %p138 = scmp.eq.s32.totalorder %s25, 0
      %p139 = por %p137, %p138
      %s141 = sadd.s32 %s140, 1
      %p144 = scmp.eq.s32.totalorder %s19, 3
      %p145 = scmp.ne.s32.totalorder %s140, %s142
      %p146 = scmp.eq.s32.totalorder %s19, 0
      %p147 = por %p145, %p146
      %p148 = scmp.ne.s32.totalorder %s140, %s142
      %p149 = scmp.eq.s32.totalorder %s24, 3
      %p150 = por %p148, %p149
      %p151 = scmp.ne.s32.totalorder %s142, %s143
      %p152 = scmp.eq.s32.totalorder %s24, 0
      %p153 = por %p151, %p152
      %p154 = scmp.ne.s32.totalorder %s142, %s143
      %p155 = scmp.eq.s32.totalorder %s25, 3
      %p156 = por %p154, %p155
      %p158 = scmp.ne.s32.totalorder %s143, %s157
      %p159 = scmp.eq.s32.totalorder %s25, 0
      %p160 = por %p158, %p159
      %s162 = sadd.s32 %s161, 1
      %p165 = scmp.eq.s32.totalorder %s19, 3
      %p166 = scmp.ne.s32.totalorder %s161, %s163
      %p167 = scmp.eq.s32.totalorder %s19, 0
      %p168 = por %p166, %p167
      %p169 = scmp.ne.s32.totalorder %s161, %s163
      %p170 = scmp.eq.s32.totalorder %s24, 3
      %p171 = por %p169, %p170
      %p172 = scmp.ne.s32.totalorder %s163, %s164
      %p173 = scmp.eq.s32.totalorder %s24, 0
      %p174 = por %p172, %p173
      %p175 = scmp.ne.s32.totalorder %s163, %s164
      %p176 = scmp.eq.s32.totalorder %s25, 3
      %p177 = por %p175, %p176
      %p179 = scmp.ne.s32.totalorder %s164, %s178
      %p180 = scmp.eq.s32.totalorder %s25, 0
      %p181 = por %p179, %p180
      %s183 = sadd.s32 %s182, 1
      %p186 = scmp.eq.s32.totalorder %s19, 3
      %p187 = scmp.ne.s32.totalorder %s182, %s184
      %p188 = scmp.eq.s32.totalorder %s19, 0
      %p189 = por %p187, %p188
      %p190 = scmp.ne.s32.totalorder %s182, %s184
      %p191 = scmp.eq.s32.totalorder %s24, 3
      %p192 = por %p190, %p191
      %p193 = scmp.ne.s32.totalorder %s184, %s185
      %p194 = scmp.eq.s32.totalorder %s24, 0
      %p195 = por %p193, %p194
      %p196 = scmp.ne.s32.totalorder %s184, %s185
      %p197 = scmp.eq.s32.totalorder %s25, 3
      %p198 = por %p196, %p197
      %p200 = scmp.ne.s32.totalorder %s185, %s199
      %p201 = scmp.eq.s32.totalorder %s25, 0
      %p202 = por %p200, %p201
      %s204 = sadd.s32 %s203, 1
      %p207 = scmp.eq.s32.totalorder %s19, 3
      %p208 = scmp.ne.s32.totalorder %s203, %s205
      %p209 = scmp.eq.s32.totalorder %s19, 0
      %p210 = por %p208, %p209
      %p211 = scmp.ne.s32.totalorder %s203, %s205
      %p212 = scmp.eq.s32.totalorder %s24, 3
      %p213 = por %p211, %p212
      %p214 = scmp.ne.s32.totalorder %s205, %s206
      %p215 = scmp.eq.s32.totalorder %s24, 0
      %p216 = por %p214, %p215
      %p217 = scmp.ne.s32.totalorder %s205, %s206
      %p218 = scmp.eq.s32.totalorder %s25, 3
      %p219 = por %p217, %p218
      %p221 = scmp.ne.s32.totalorder %s206, %s220
      %p222 = scmp.eq.s32.totalorder %s25, 0
      %p223 = por %p221, %p222
      %s225 = sadd.s32 %s224, 1
      %p228 = scmp.eq.s32.totalorder %s19, 3
      %p229 = scmp.ne.s32.totalorder %s224, %s226
      %p230 = scmp.eq.s32.totalorder %s19, 0
      %p231 = por %p229, %p230
      %p232 = scmp.ne.s32.totalorder %s224, %s226
      %p233 = scmp.eq.s32.totalorder %s24, 3
      %p234 = por %p232, %p233
      %p235 = scmp.ne.s32.totalorder %s226, %s227
      %p236 = scmp.eq.s32.totalorder %s24, 0
      %p237 = por %p235, %p236
      %p238 = scmp.ne.s32.totalorder %s226, %s227
      %p239 = scmp.eq.s32.totalorder %s25, 3
      %p240 = por %p238, %p239
      %p242 = scmp.ne.s32.totalorder %s227, %s241
      %p243 = scmp.eq.s32.totalorder %s25, 0
      %p244 = por %p242, %p243
      %s246 = sadd.s32 %s245, 1
      %p249 = scmp.eq.s32.totalorder %s19, 3
      %p250 = scmp.ne.s32.totalorder %s245, %s247
      %p251 = scmp.eq.s32.totalorder %s19, 0
      %p252 = por %p250, %p251
      %p253 = scmp.ne.s32.totalorder %s245, %s247
      %p254 = scmp.eq.s32.totalorder %s24, 3
      %p255 = por %p253, %p254
      %p256 = scmp.ne.s32.totalorder %s247, %s248
      %p257 = scmp.eq.s32.totalorder %s24, 0
      %p258 = por %p256, %p257
      %p259 = scmp.ne.s32.totalorder %s247, %s248
      %p260 = scmp.eq.s32.totalorder %s25, 3
      %p261 = por %p259, %p260
      %p263 = scmp.ne.s32.totalorder %s248, %s262
      %p264 = scmp.eq.s32.totalorder %s25, 0
      %p265 = por %p263, %p264
      %s266 = ssub.s32 %s26, %s38
      %p267 = scmp.eq.s32.totalorder %s266, 0
      %s269 = sadd.s32 %s268, 1
      %s270 = scalar_select %p267, %s268, %s269
      %p273 = pneg %p267
      %p274 = scmp.eq.s32.totalorder %s19, 3
      %p275 = por %p273, %p274
      %p276 = scmp.ne.s32.totalorder %s268, %s271
      %p277 = scmp.eq.s32.totalorder %s19, 0
      %p278 = por %p276, %p277
      %p279 = scmp.ne.s32.totalorder %s268, %s271
      %p280 = scmp.eq.s32.totalorder %s24, 3
      %p281 = por %p279, %p280
      %p282 = scmp.ne.s32.totalorder %s271, %s272
      %p283 = scmp.eq.s32.totalorder %s24, 0
      %p284 = por %p282, %p283
      %p285 = scmp.ne.s32.totalorder %s271, %s272
      %p286 = scmp.eq.s32.totalorder %s25, 3
      %p287 = por %p285, %p286
      %p289 = scmp.ne.s32.totalorder %s272, %s288
      %p290 = scmp.eq.s32.totalorder %s25, 0
      %p291 = por %p289, %p290
      %p292 = scmp.le.s32.totalorder 1, %s19
      %p293 = scmp.lt.s32.totalorder %s19, 5
      %p294 = pnand %p292, %p293
      %p295 = pneg %p294
      // Predicated region
      $region9: #{gin_net_forward.5} parent=5 // pred_check
        _
      $region10: #{gin_net_forward.5} parent=5 // pred_check_branch
        %297 = sbr.rel (%p294) target = $region12
      $region11: #{gin_net_forward.5} parent=5 // pred_region
        %s298 = ssub.s32 %s19, 1
        // Predicated region
        $region13: #{gin_net_forward.5} parent=11 // pred_check
          %p299 = pneg %p132
        $region14: #{gin_net_forward.5} parent=11 // pred_check_branch
          %301 = sbr.rel (%p299) target = $region16
        $region15: #{gin_net_forward.5} parent=11 // pred_region
          _
        $region16: #{gin_net_forward.5} parent=11 // pred_fallthru
          _
        // Predicated region
        $region17: #{gin_net_forward.5} parent=11 // pred_check
          %p302 = pneg %p153
        $region18: #{gin_net_forward.5} parent=11 // pred_check_branch
          %304 = sbr.rel (%p302) target = $region20
        $region19: #{gin_net_forward.5} parent=11 // pred_region
          _
        $region20: #{gin_net_forward.5} parent=11 // pred_fallthru
          _
        // Predicated region
        $region21: #{gin_net_forward.5} parent=11 // pred_check
          %p305 = pneg %p174
        $region22: #{gin_net_forward.5} parent=11 // pred_check_branch
          %307 = sbr.rel (%p305) target = $region24
        $region23: #{gin_net_forward.5} parent=11 // pred_region
          _
        $region24: #{gin_net_forward.5} parent=11 // pred_fallthru
          _
        // Predicated region
        $region25: #{gin_net_forward.5} parent=11 // pred_check
          %p308 = pneg %p195
        $region26: #{gin_net_forward.5} parent=11 // pred_check_branch
          %310 = sbr.rel (%p308) target = $region28
        $region27: #{gin_net_forward.5} parent=11 // pred_region
          _
        $region28: #{gin_net_forward.5} parent=11 // pred_fallthru
          _
        // Predicated region
        $region29: #{gin_net_forward.5} parent=11 // pred_check
          %p311 = pneg %p216
        $region30: #{gin_net_forward.5} parent=11 // pred_check_branch
          %313 = sbr.rel (%p311) target = $region32
        $region31: #{gin_net_forward.5} parent=11 // pred_region
          _
        $region32: #{gin_net_forward.5} parent=11 // pred_fallthru
          _
        // Predicated region
        $region33: #{gin_net_forward.5} parent=11 // pred_check
          %p314 = pneg %p237
        $region34: #{gin_net_forward.5} parent=11 // pred_check_branch
          %316 = sbr.rel (%p314) target = $region36
        $region35: #{gin_net_forward.5} parent=11 // pred_region
          _
        $region36: #{gin_net_forward.5} parent=11 // pred_fallthru
          _
        // Predicated region
        $region37: #{gin_net_forward.5} parent=11 // pred_check
          %p317 = pneg %p258
        $region38: #{gin_net_forward.5} parent=11 // pred_check_branch
          %319 = sbr.rel (%p317) target = $region40
        $region39: #{gin_net_forward.5} parent=11 // pred_region
          _
        $region40: #{gin_net_forward.5} parent=11 // pred_fallthru
          _
      $region12: #{gin_net_forward.5} parent=5 // pred_fallthru
        _
      %p320 = scmp.lt.s32.totalorder %s19, 4
      // Predicated region
      $region41: #{gin_net_forward.5} parent=5 // pred_check
        %p321 = pneg %p320
      $region42: #{gin_net_forward.5} parent=5 // pred_check_branch
        %323 = sbr.rel (%p321) target = $region44
      $region43: #{gin_net_forward.5} parent=5 // pred_region
        // Predicated region
        $region45: #{gin_net_forward.5} parent=43 // pred_check
          %p324 = pneg %p53
        $region46: #{gin_net_forward.5} parent=43 // pred_check_branch
          %326 = sbr.rel (%p324) target = $region48
        $region47: #{gin_net_forward.5} parent=43 // pred_region
          %s327 = sand.u32 %s43, 1
          %s328 = scalar_lea.sflag [#allocation4], %s327
          %s329 = sand.u32 %s43, 1
          %s330 = smul.addr %s329, 64
          %s331 = scalar_lea.vmem [#allocation3], %s330
          %s332 = smul.u32 16, %s26
          %334 = vsyncadd %s328, 0
          %s335 = smul.addr %s332, 2
          %s336 = sadd.s32 %s27, %s335
          %s337 = smul.addr %s336, 4
          %s338 = scalar_lea.hbm %s0, %s337
          %s339 = sshll.u32 %s338, 4
          %s340 = int_to_ptr.hbm [resolvable:$true] %s339
          %s341 = sshll.u32 %s331, 4
          %s342 = int_to_ptr.vmem [resolvable:$true] %s341
          %347 = dma.hbm_to_vmem [thread:$0]  %s340, 1024, %s342, %s328, 128, 64, 4
        $region48: #{gin_net_forward.5} parent=43 // pred_fallthru
          _
        // Predicated region
        $region49: #{gin_net_forward.5} parent=43 // pred_check
          %p348 = pneg %p79
        $region50: #{gin_net_forward.5} parent=43 // pred_check_branch
          %350 = sbr.rel (%p348) target = $region52
        $region51: #{gin_net_forward.5} parent=43 // pred_region
          %s351 = smul.u32 16, %s27
          %p352 = scmp.lt.s32.totalorder %s351, 31
          %s353 = scalar_select %p352, %s351, 31
          %s354 = smul.addr %s353, 4
          %s355 = scalar_lea.vmem %s1, %s354
          %s356 = smul.u32 16, %s27
        $region52: #{gin_net_forward.5} parent=43 // pred_fallthru
          _
        // Predicated region
        $region53: #{gin_net_forward.5} parent=43 // pred_check
          %p357 = pneg %p105
        $region54: #{gin_net_forward.5} parent=43 // pred_check_branch
          %359 = sbr.rel (%p357) target = $region56
        $region55: #{gin_net_forward.5} parent=43 // pred_region
          %s360 = smul.u32 16, %s26
          %p361 = scmp.lt.s32.totalorder %s360, 31
          %s362 = scalar_select %p361, %s360, 31
          %s363 = smul.addr %s362, 4
          %s364 = scalar_lea.vmem %s2, %s363
          %s365 = smul.u32 16, %s26
        $region56: #{gin_net_forward.5} parent=43 // pred_fallthru
          _
      $region44: #{gin_net_forward.5} parent=5 // pred_fallthru
        _
      %p366 = scmp.le.s32.totalorder 1, %s19
      %p367 = scmp.lt.s32.totalorder %s19, 5
      %p368 = pnand %p366, %p367
      %p369 = pneg %p368
      // Predicated region
      $region57: #{gin_net_forward.5} parent=5 // pred_check
        _
      $region58: #{gin_net_forward.5} parent=5 // pred_check_branch
        %371 = sbr.rel (%p368) target = $region60
      $region59: #{gin_net_forward.5} parent=5 // pred_region
        %s372 = ssub.s32 %s19, 1
        %s373 = sand.u32 %s46, 1
        %s374 = scalar_lea.sflag [#allocation4], %s373
        %s375 = sand.u32 %s46, 1
        %s376 = smul.addr %s375, 64
        %s377 = scalar_lea.vmem [#allocation3], %s376
        // Predicated region
        $region61: #{gin_net_forward.5} parent=59 // pred_check
          %p378 = pneg %p59
        $region62: #{gin_net_forward.5} parent=59 // pred_check_branch
          %380 = sbr.rel (%p378) target = $region64
        $region63: #{gin_net_forward.5} parent=59 // pred_region
          %382 = dma.done %s374, 1024
        $region64: #{gin_net_forward.5} parent=59 // pred_fallthru
          _
        %s383 = sand.u32 %s46, 1
        %s384 = scalar_lea.sflag [#allocation4], %s383
        %s385 = sand.u32 %s46, 1
        %s386 = smul.addr %s385, 64
        %s387 = scalar_lea.vmem [#allocation3], %s386
        %p388 = pneg %p59
        %p389 = pneg %p56
        %s390 = smul.u32 16, %s29
        %p391 = scmp.lt.s32.totalorder %s390, 31
        %s392 = scalar_select %p391, %s390, 31
        %s393 = smul.addr %s392, 4
        %s394 = scalar_lea.vmem %s1, %s393
        %p395 = pneg %p85
        %p396 = pneg %p82
        %s397 = smul.u32 16, %s28
        %p398 = scmp.lt.s32.totalorder %s397, 31
        %s399 = scalar_select %p398, %s397, 31
        %s400 = smul.addr %s399, 4
        %s401 = scalar_lea.vmem %s2, %s400
        %p402 = pneg %p111
        %p403 = pneg %p108
        %p404 = pneg %p132
        %p405 = pneg %p129
        %p406 = pneg %p153
        %p407 = pneg %p150
        %p408 = pneg %p174
        %p409 = pneg %p171
        %p410 = pneg %p195
        %p411 = pneg %p192
        %p412 = pneg %p216
        %p413 = pneg %p213
        %p414 = pneg %p237
        %p415 = pneg %p234
        %p416 = pneg %p258
        %p417 = pneg %p255
        %p418 = pneg %p284
        %p419 = pneg %p281
        %s420 = smul.u32 16, %s28
        %p421 = scmp.lt.s32.totalorder %s420, 31
        %s422 = scalar_select %p421, %s420, 31
        %s423 = smul.addr %s422, 4
        %s424 = scalar_lea.vmem %s10, %s423
        %s425 = smul.u32 16, %s28
        %s426 = smul.u32 16, %s29
        %p427 = scmp.lt.s32.totalorder %s426, 31
        %s428 = scalar_select %p427, %s426, 31
        %s429 = smul.addr %s428, 4
        %s430 = scalar_lea.vmem %s1, %s429
        %s431 = smul.u32 16, %s29
        %s432 = smul.u32 16, %s28
        %p433 = scmp.lt.s32.totalorder %s432, 31
        %s434 = scalar_select %p433, %s432, 31
        %s435 = smul.addr %s434, 4
        %s436 = scalar_lea.vmem %s2, %s435
        %s437 = smul.u32 16, %s28
        %s438 = smul.u32 16, %s28
        %p439 = scmp.lt.s32.totalorder %s438, 31
        %s440 = scalar_select %p439, %s438, 31
        %s441 = smul.addr %s440, 4
        %s442 = scalar_lea.vmem %s10, %s441
        %s443 = smul.u32 16, %s28
        %p444 = scmp.eq.s32.totalorder %s29, 0
        // Predicated region
        $region65: #{gin_net_forward.5} parent=59 // pred_check
          %p445 = pneg %p444
        $region66: #{gin_net_forward.5} parent=59 // pred_check_branch
          %447 = sbr.rel (%p445) target = $region68
        $region67: #{gin_net_forward.5} parent=59 // pred_region
          %448 = vst [vmem:[#allocation2] sm:$0xff] 0.0
          %449 = vst [vmem:[#allocation2 + $0x8] sm:$0xff] 0.0
          %450 = vst [vmem:[#allocation2 + $0x10] sm:$0xff] 0.0
          %451 = vst [vmem:[#allocation2 + $0x18] sm:$0xff] 0.0
          %452 = vst [vmem:[#allocation2 + $0x20] sm:$0xff] 0.0
          %453 = vst [vmem:[#allocation2 + $0x28] sm:$0xff] 0.0
          %454 = vst [vmem:[#allocation2 + $0x30] sm:$0xff] 0.0
          %455 = vst [vmem:[#allocation2 + $0x38] sm:$0xff] 0.0
          %456 = vst [vmem:[#allocation2 + $0x40] sm:$0xff] 0.0
          %457 = vst [vmem:[#allocation2 + $0x48] sm:$0xff] 0.0
          %458 = vst [vmem:[#allocation2 + $0x50] sm:$0xff] 0.0
          %459 = vst [vmem:[#allocation2 + $0x58] sm:$0xff] 0.0
          %460 = vst [vmem:[#allocation2 + $0x60] sm:$0xff] 0.0
          %461 = vst [vmem:[#allocation2 + $0x68] sm:$0xff] 0.0
          %462 = vst [vmem:[#allocation2 + $0x70] sm:$0xff] 0.0
          %463 = vst [vmem:[#allocation2 + $0x78] sm:$0xff] 0.0
        $region68: #{gin_net_forward.5} parent=59 // pred_fallthru
          _
        %v464 = vld [vmem:[#allocation2] sm:$0xff]
        %v465 = vld [vmem:[#allocation2 + $0x8] sm:$0xff]
        %v466 = vld [vmem:[#allocation2 + $0x10] sm:$0xff]
        %v467 = vld [vmem:[#allocation2 + $0x18] sm:$0xff]
        %v468 = vld [vmem:[#allocation2 + $0x20] sm:$0xff]
        %v469 = vld [vmem:[#allocation2 + $0x28] sm:$0xff]
        %v470 = vld [vmem:[#allocation2 + $0x30] sm:$0xff]
        %v471 = vld [vmem:[#allocation2 + $0x38] sm:$0xff]
        %v472 = vld [vmem:[#allocation2 + $0x40] sm:$0xff]
        %v473 = vld [vmem:[#allocation2 + $0x48] sm:$0xff]
        %v474 = vld [vmem:[#allocation2 + $0x50] sm:$0xff]
        %v475 = vld [vmem:[#allocation2 + $0x58] sm:$0xff]
        %v476 = vld [vmem:[#allocation2 + $0x60] sm:$0xff]
        %v477 = vld [vmem:[#allocation2 + $0x68] sm:$0xff]
        %v478 = vld [vmem:[#allocation2 + $0x70] sm:$0xff]
        %v479 = vld [vmem:[#allocation2 + $0x78] sm:$0xff]
        %v480 = vld [vmem:[%s377] sm:$0xf]
        %v481 = vld [vmem:[%s377 + $0x4] sm:$0xf]
        %v482 = vld [vmem:[%s377 + $0x8] sm:$0xf]
        %v483 = vld [vmem:[%s377 + $0xc] sm:$0xf]
        %v484 = vld [vmem:[%s377 + $0x10] sm:$0xf]
        %v485 = vld [vmem:[%s377 + $0x14] sm:$0xf]
        %v486 = vld [vmem:[%s377 + $0x18] sm:$0xf]
        %v487 = vld [vmem:[%s377 + $0x1c] sm:$0xf]
        %v488 = vld [vmem:[%s377 + $0x20] sm:$0xf]
        %v489 = vld [vmem:[%s377 + $0x24] sm:$0xf]
        %v490 = vld [vmem:[%s377 + $0x28] sm:$0xf]
        %v491 = vld [vmem:[%s377 + $0x2c] sm:$0xf]
        %v492 = vld [vmem:[%s377 + $0x30] sm:$0xf]
        %v493 = vld [vmem:[%s377 + $0x34] sm:$0xf]
        %v494 = vld [vmem:[%s377 + $0x38] sm:$0xf]
        %v495 = vld [vmem:[%s377 + $0x3c] sm:$0xf]
        %v496 = vld [vmem:[%s430] sm:$0xf]
        %v497 = vld [vmem:[%s430 + $0x4] sm:$0xf]
        %v498 = vld [vmem:[%s430 + $0x8] sm:$0xf]
        %v499 = vld [vmem:[%s430 + $0xc] sm:$0xf]
        %v500 = vld [vmem:[%s430 + $0x10] sm:$0xf]
        %v501 = vld [vmem:[%s430 + $0x14] sm:$0xf]
        %v502 = vld [vmem:[%s430 + $0x18] sm:$0xf]
        %v503 = vld [vmem:[%s430 + $0x1c] sm:$0xf]
        %v504 = vld [vmem:[%s430 + $0x20] sm:$0xf]
        %v505 = vld [vmem:[%s430 + $0x24] sm:$0xf]
        %v506 = vld [vmem:[%s430 + $0x28] sm:$0xf]
        %v507 = vld [vmem:[%s430 + $0x2c] sm:$0xf]
        %v508 = vld [vmem:[%s430 + $0x30] sm:$0xf]
        %v509 = vld [vmem:[%s430 + $0x34] sm:$0xf]
        %v510 = vld [vmem:[%s430 + $0x38] sm:$0xf]
        %v511 = vld [vmem:[%s430 + $0x3c] sm:$0xf]
        %v528 = vunpack.c.l.b16 %v480
        %v529 = vunpack.c.l.b16 %v481
        %v530 = vunpack.c.l.b16 %v482
        %v531 = vunpack.c.l.b16 %v483
        %v532 = vunpack.c.l.b16 %v484
        %v533 = vunpack.c.l.b16 %v485
        %v534 = vunpack.c.l.b16 %v486
        %v535 = vunpack.c.l.b16 %v487
        %v536 = vunpack.c.l.b16 %v488
        %v537 = vunpack.c.l.b16 %v489
        %v538 = vunpack.c.l.b16 %v490
        %v539 = vunpack.c.l.b16 %v491
        %v540 = vunpack.c.l.b16 %v492
        %v541 = vunpack.c.l.b16 %v493
        %v542 = vunpack.c.l.b16 %v494
        %v543 = vunpack.c.l.b16 %v495
        %v544 = vpack.c.b16 %v529, %v528
        %v545 = vpack.c.b16 %v531, %v530
        %v546 = vpack.c.b16 %v533, %v532
        %v547 = vpack.c.b16 %v535, %v534
        %v548 = vpack.c.b16 %v537, %v536
        %v549 = vpack.c.b16 %v539, %v538
        %v550 = vpack.c.b16 %v541, %v540
        %v551 = vpack.c.b16 %v543, %v542
        %v576 = vunpack.c.l.b16 %v496
        %v577 = vunpack.c.l.b16 %v497
        %v578 = vunpack.c.l.b16 %v498
        %v579 = vunpack.c.l.b16 %v499
        %v580 = vunpack.c.l.b16 %v500
        %v581 = vunpack.c.l.b16 %v501
        %v582 = vunpack.c.l.b16 %v502
        %v583 = vunpack.c.l.b16 %v503
        %v584 = vunpack.c.l.b16 %v504
        %v585 = vunpack.c.l.b16 %v505
        %v586 = vunpack.c.l.b16 %v506
        %v587 = vunpack.c.l.b16 %v507
        %v588 = vunpack.c.l.b16 %v508
        %v589 = vunpack.c.l.b16 %v509
        %v590 = vunpack.c.l.b16 %v510
        %v591 = vunpack.c.l.b16 %v511
        %v592 = vpack.c.b16 %v577, %v576
        %v593 = vpack.c.b16 %v579, %v578
        %v594 = vpack.c.b16 %v581, %v580
        %v595 = vpack.c.b16 %v583, %v582
        %v596 = vpack.c.b16 %v585, %v584
        %v597 = vpack.c.b16 %v587, %v586
        %v598 = vpack.c.b16 %v589, %v588
        %v599 = vpack.c.b16 %v591, %v590
        %608 = vmatpush.bf16.msra.mxu0 %v599
        %609 = vmatpush.bf16.msra.mxu0 %v598
        %610 = vmatpush.bf16.msra.mxu0 %v597
        %611 = vmatpush.bf16.msra.mxu0 %v596
        %612 = vmatpush.bf16.msra.mxu0 %v595
        %613 = vmatpush.bf16.msra.mxu0 %v594
        %614 = vmatpush.bf16.msra.mxu0 %v593
        %615 = vmatpush.bf16.msra.mxu0 %v592
        %616 = vmatmul.bf16.gmra.mxu0 %v544
        %v617 = vpop.f32.mrf.mxu0
        %v618 = vadd.f32 0.0, %v617
        %v619 = vpop.f32.mrf.mxu0
        %v620 = vadd.f32 0.0, %v619
        %621 = vmatmul.bf16.gmra.mxu0 %v545
        %v622 = vpop.f32.mrf.mxu0
        %v623 = vadd.f32 0.0, %v622
        %v624 = vpop.f32.mrf.mxu0
        %v625 = vadd.f32 0.0, %v624
        %626 = vmatmul.bf16.gmra.mxu0 %v546
        %v627 = vpop.f32.mrf.mxu0
        %v628 = vadd.f32 0.0, %v627
        %v629 = vpop.f32.mrf.mxu0
        %v630 = vadd.f32 0.0, %v629
        %631 = vmatmul.bf16.gmra.mxu0 %v547
        %v632 = vpop.f32.mrf.mxu0
        %v633 = vadd.f32 0.0, %v632
        %v634 = vpop.f32.mrf.mxu0
        %v635 = vadd.f32 0.0, %v634
        %636 = vmatmul.bf16.gmra.mxu0 %v548
        %v637 = vpop.f32.mrf.mxu0
        %v638 = vadd.f32 0.0, %v637
        %v639 = vpop.f32.mrf.mxu0
        %v640 = vadd.f32 0.0, %v639
        %641 = vmatmul.bf16.gmra.mxu0 %v549
        %v642 = vpop.f32.mrf.mxu0
        %v643 = vadd.f32 0.0, %v642
        %v644 = vpop.f32.mrf.mxu0
        %v645 = vadd.f32 0.0, %v644
        %646 = vmatmul.bf16.gmra.mxu0 %v550
        %v647 = vpop.f32.mrf.mxu0
        %v648 = vadd.f32 0.0, %v647
        %v649 = vpop.f32.mrf.mxu0
        %v650 = vadd.f32 0.0, %v649
        %651 = vmatmul.bf16.gmra.mxu0 %v551
        %v652 = vpop.f32.mrf.mxu0
        %v653 = vadd.f32 0.0, %v652
        %v654 = vpop.f32.mrf.mxu0
        %v655 = vadd.f32 0.0, %v654
        %656 = vdwg.mxu0
        %v657 = vadd.f32 %v464, %v618
        %v658 = vadd.f32 %v465, %v620
        %v659 = vadd.f32 %v466, %v623
        %v660 = vadd.f32 %v467, %v625
        %v661 = vadd.f32 %v468, %v628
        %v662 = vadd.f32 %v469, %v630
        %v663 = vadd.f32 %v470, %v633
        %v664 = vadd.f32 %v471, %v635
        %v665 = vadd.f32 %v472, %v638
        %v666 = vadd.f32 %v473, %v640
        %v667 = vadd.f32 %v474, %v643
        %v668 = vadd.f32 %v475, %v645
        %v669 = vadd.f32 %v476, %v648
        %v670 = vadd.f32 %v477, %v650
        %v671 = vadd.f32 %v478, %v653
        %v672 = vadd.f32 %v479, %v655
        %673 = vst [vmem:[#allocation2] sm:$0xff] %v657
        %674 = vst [vmem:[#allocation2 + $0x8] sm:$0xff] %v658
        %675 = vst [vmem:[#allocation2 + $0x10] sm:$0xff] %v659
        %676 = vst [vmem:[#allocation2 + $0x18] sm:$0xff] %v660
        %677 = vst [vmem:[#allocation2 + $0x20] sm:$0xff] %v661
        %678 = vst [vmem:[#allocation2 + $0x28] sm:$0xff] %v662
        %679 = vst [vmem:[#allocation2 + $0x30] sm:$0xff] %v663
        %680 = vst [vmem:[#allocation2 + $0x38] sm:$0xff] %v664
        %681 = vst [vmem:[#allocation2 + $0x40] sm:$0xff] %v665
        %682 = vst [vmem:[#allocation2 + $0x48] sm:$0xff] %v666
        %683 = vst [vmem:[#allocation2 + $0x50] sm:$0xff] %v667
        %684 = vst [vmem:[#allocation2 + $0x58] sm:$0xff] %v668
        %685 = vst [vmem:[#allocation2 + $0x60] sm:$0xff] %v669
        %686 = vst [vmem:[#allocation2 + $0x68] sm:$0xff] %v670
        %687 = vst [vmem:[#allocation2 + $0x70] sm:$0xff] %v671
        %688 = vst [vmem:[#allocation2 + $0x78] sm:$0xff] %v672
        %p689 = scmp.eq.s32.totalorder %s29, 1
        // Predicated region
        $region69: #{gin_net_forward.5} parent=59 // pred_check
          %p690 = pneg %p689
        $region70: #{gin_net_forward.5} parent=59 // pred_check_branch
          %692 = sbr.rel (%p690) target = $region72
        $region71: #{gin_net_forward.5} parent=59 // pred_region
          %v693 = vld [vmem:[%s436] sm:$0xf]
          %v694 = vld [vmem:[%s436 + $0x4] sm:$0xf]
          %v695 = vld [vmem:[%s436 + $0x8] sm:$0xf]
          %v696 = vld [vmem:[%s436 + $0xc] sm:$0xf]
          %v697 = vld [vmem:[%s436 + $0x10] sm:$0xf]
          %v698 = vld [vmem:[%s436 + $0x14] sm:$0xf]
          %v699 = vld [vmem:[%s436 + $0x18] sm:$0xf]
          %v700 = vld [vmem:[%s436 + $0x1c] sm:$0xf]
          %v701 = vld [vmem:[%s436 + $0x20] sm:$0xf]
          %v702 = vld [vmem:[%s436 + $0x24] sm:$0xf]
          %v703 = vld [vmem:[%s436 + $0x28] sm:$0xf]
          %v704 = vld [vmem:[%s436 + $0x2c] sm:$0xf]
          %v705 = vld [vmem:[%s436 + $0x30] sm:$0xf]
          %v706 = vld [vmem:[%s436 + $0x34] sm:$0xf]
          %v707 = vld [vmem:[%s436 + $0x38] sm:$0xf]
          %v708 = vld [vmem:[%s436 + $0x3c] sm:$0xf]
          %v709 = vunpack.c.l.bf16 %v693
          %v710 = vunpack.c.l.bf16 %v694
          %v711 = vunpack.c.l.bf16 %v695
          %v712 = vunpack.c.l.bf16 %v696
          %v713 = vunpack.c.l.bf16 %v697
          %v714 = vunpack.c.l.bf16 %v698
          %v715 = vunpack.c.l.bf16 %v699
          %v716 = vunpack.c.l.bf16 %v700
          %v717 = vunpack.c.l.bf16 %v701
          %v718 = vunpack.c.l.bf16 %v702
          %v719 = vunpack.c.l.bf16 %v703
          %v720 = vunpack.c.l.bf16 %v704
          %v721 = vunpack.c.l.bf16 %v705
          %v722 = vunpack.c.l.bf16 %v706
          %v723 = vunpack.c.l.bf16 %v707
          %v724 = vunpack.c.l.bf16 %v708
          %v725 = vld [vmem:[#allocation2] sm:$0xff]
          %v726 = vld [vmem:[#allocation2 + $0x8] sm:$0xff]
          %v727 = vld [vmem:[#allocation2 + $0x10] sm:$0xff]
          %v728 = vld [vmem:[#allocation2 + $0x18] sm:$0xff]
          %v729 = vld [vmem:[#allocation2 + $0x20] sm:$0xff]
          %v730 = vld [vmem:[#allocation2 + $0x28] sm:$0xff]
          %v731 = vld [vmem:[#allocation2 + $0x30] sm:$0xff]
          %v732 = vld [vmem:[#allocation2 + $0x38] sm:$0xff]
          %v733 = vld [vmem:[#allocation2 + $0x40] sm:$0xff]
          %v734 = vld [vmem:[#allocation2 + $0x48] sm:$0xff]
          %v735 = vld [vmem:[#allocation2 + $0x50] sm:$0xff]
          %v736 = vld [vmem:[#allocation2 + $0x58] sm:$0xff]
          %v737 = vld [vmem:[#allocation2 + $0x60] sm:$0xff]
          %v738 = vld [vmem:[#allocation2 + $0x68] sm:$0xff]
          %v739 = vld [vmem:[#allocation2 + $0x70] sm:$0xff]
          %v740 = vld [vmem:[#allocation2 + $0x78] sm:$0xff]
          %v741 = vld [vmem:[%s3] sm:$0x1]
          %v743 = vperm.slane %v741, 0
          %v745 = vmul.f32 %v743, %v709
          %v746 = vmul.f32 %v743, %v710
          %v747 = vmul.f32 %v743, %v711
          %v748 = vmul.f32 %v743, %v712
          %v749 = vmul.f32 %v743, %v713
          %v750 = vmul.f32 %v743, %v714
          %v751 = vmul.f32 %v743, %v715
          %v752 = vmul.f32 %v743, %v716
          %v753 = vmul.f32 %v743, %v717
          %v754 = vmul.f32 %v743, %v718
          %v755 = vmul.f32 %v743, %v719
          %v756 = vmul.f32 %v743, %v720
          %v757 = vmul.f32 %v743, %v721
          %v758 = vmul.f32 %v743, %v722
          %v759 = vmul.f32 %v743, %v723
          %v760 = vmul.f32 %v743, %v724
          %v761 = vadd.f32 %v725, %v745
          %v762 = vadd.f32 %v726, %v746
          %v763 = vadd.f32 %v727, %v747
          %v764 = vadd.f32 %v728, %v748
          %v765 = vadd.f32 %v729, %v749
          %v766 = vadd.f32 %v730, %v750
          %v767 = vadd.f32 %v731, %v751
          %v768 = vadd.f32 %v732, %v752
          %v769 = vadd.f32 %v733, %v753
          %v770 = vadd.f32 %v734, %v754
          %v771 = vadd.f32 %v735, %v755
          %v772 = vadd.f32 %v736, %v756
          %v773 = vadd.f32 %v737, %v757
          %v774 = vadd.f32 %v738, %v758
          %v775 = vadd.f32 %v739, %v759
          %v776 = vadd.f32 %v740, %v760
          %v777 = vpack.c.bf16 %v762, %v761
          %v778 = vpack.c.bf16 %v764, %v763
          %v779 = vpack.c.bf16 %v766, %v765
          %v780 = vpack.c.bf16 %v768, %v767
          %v781 = vpack.c.bf16 %v770, %v769
          %v782 = vpack.c.bf16 %v772, %v771
          %v783 = vpack.c.bf16 %v774, %v773
          %v784 = vpack.c.bf16 %v776, %v775
          %v785 = vld [vmem:[%s4] sm:$0xf]
          %v786 = vld [vmem:[%s4 + $0x4] sm:$0xf]
          %v787 = vld [vmem:[%s4 + $0x8] sm:$0xf]
          %v788 = vld [vmem:[%s4 + $0xc] sm:$0xf]
          %v789 = vld [vmem:[%s4 + $0x10] sm:$0xf]
          %v790 = vld [vmem:[%s4 + $0x14] sm:$0xf]
          %v791 = vld [vmem:[%s4 + $0x18] sm:$0xf]
          %v792 = vld [vmem:[%s4 + $0x1c] sm:$0xf]
          %v793 = vld [vmem:[%s4 + $0x20] sm:$0xf]
          %v794 = vld [vmem:[%s4 + $0x24] sm:$0xf]
          %v795 = vld [vmem:[%s4 + $0x28] sm:$0xf]
          %v796 = vld [vmem:[%s4 + $0x2c] sm:$0xf]
          %v797 = vld [vmem:[%s4 + $0x30] sm:$0xf]
          %v798 = vld [vmem:[%s4 + $0x34] sm:$0xf]
          %v799 = vld [vmem:[%s4 + $0x38] sm:$0xf]
          %v800 = vld [vmem:[%s4 + $0x3c] sm:$0xf]
          %v801 = vld [vmem:[%s5] sm:$0x1]
          %v803 = vperm.slane %v801, 0
          %v821 = vunpack.c.l.b16 %v785
          %v822 = vunpack.c.l.b16 %v786
          %v823 = vunpack.c.l.b16 %v787
          %v824 = vunpack.c.l.b16 %v788
          %v825 = vunpack.c.l.b16 %v789
          %v826 = vunpack.c.l.b16 %v790
          %v827 = vunpack.c.l.b16 %v791
          %v828 = vunpack.c.l.b16 %v792
          %v829 = vunpack.c.l.b16 %v793
          %v830 = vunpack.c.l.b16 %v794
          %v831 = vunpack.c.l.b16 %v795
          %v832 = vunpack.c.l.b16 %v796
          %v833 = vunpack.c.l.b16 %v797
          %v834 = vunpack.c.l.b16 %v798
          %v835 = vunpack.c.l.b16 %v799
          %v836 = vunpack.c.l.b16 %v800
          %v837 = vpack.c.b16 %v822, %v821
          %v838 = vpack.c.b16 %v824, %v823
          %v839 = vpack.c.b16 %v826, %v825
          %v840 = vpack.c.b16 %v828, %v827
          %v841 = vpack.c.b16 %v830, %v829
          %v842 = vpack.c.b16 %v832, %v831
          %v843 = vpack.c.b16 %v834, %v833
          %v844 = vpack.c.b16 %v836, %v835
          %853 = vmatpush.bf16.msra.mxu0 %v844
          %854 = vmatpush.bf16.msra.mxu0 %v843
          %855 = vmatpush.bf16.msra.mxu0 %v842
          %856 = vmatpush.bf16.msra.mxu0 %v841
          %857 = vmatpush.bf16.msra.mxu0 %v840
          %858 = vmatpush.bf16.msra.mxu0 %v839
          %859 = vmatpush.bf16.msra.mxu0 %v838
          %860 = vmatpush.bf16.msra.mxu0 %v837
          %861 = vmatmul.bf16.gmra.mxu0 %v777
          %v862 = vpop.f32.mrf.mxu0
          %v863 = vadd.f32 %v803, %v862
          %v864 = vpop.f32.mrf.mxu0
          %v865 = vadd.f32 %v803, %v864
          %866 = vmatmul.bf16.gmra.mxu0 %v778
          %v867 = vpop.f32.mrf.mxu0
          %v868 = vadd.f32 %v803, %v867
          %v869 = vpop.f32.mrf.mxu0
          %v870 = vadd.f32 %v803, %v869
          %871 = vmatmul.bf16.gmra.mxu0 %v779
          %v872 = vpop.f32.mrf.mxu0
          %v873 = vadd.f32 %v803, %v872
          %v874 = vpop.f32.mrf.mxu0
          %v875 = vadd.f32 %v803, %v874
          %876 = vmatmul.bf16.gmra.mxu0 %v780
          %v877 = vpop.f32.mrf.mxu0
          %v878 = vadd.f32 %v803, %v877
          %v879 = vpop.f32.mrf.mxu0
          %v880 = vadd.f32 %v803, %v879
          %881 = vmatmul.bf16.gmra.mxu0 %v781
          %v882 = vpop.f32.mrf.mxu0
          %v883 = vadd.f32 %v803, %v882
          %v884 = vpop.f32.mrf.mxu0
          %v885 = vadd.f32 %v803, %v884
          %886 = vmatmul.bf16.gmra.mxu0 %v782
          %v887 = vpop.f32.mrf.mxu0
          %v888 = vadd.f32 %v803, %v887
          %v889 = vpop.f32.mrf.mxu0
          %v890 = vadd.f32 %v803, %v889
          %891 = vmatmul.bf16.gmra.mxu0 %v783
          %v892 = vpop.f32.mrf.mxu0
          %v893 = vadd.f32 %v803, %v892
          %v894 = vpop.f32.mrf.mxu0
          %v895 = vadd.f32 %v803, %v894
          %896 = vmatmul.bf16.gmra.mxu0 %v784
          %v897 = vpop.f32.mrf.mxu0
          %v898 = vadd.f32 %v803, %v897
          %v899 = vpop.f32.mrf.mxu0
          %v900 = vadd.f32 %v803, %v899
          %901 = vdwg.mxu0
          %v902 = vmax.f32 %v863, 0.0
          %v903 = vmax.f32 %v865, 0.0
          %v904 = vmax.f32 %v868, 0.0
          %v905 = vmax.f32 %v870, 0.0
          %v906 = vmax.f32 %v873, 0.0
          %v907 = vmax.f32 %v875, 0.0
          %v908 = vmax.f32 %v878, 0.0
          %v909 = vmax.f32 %v880, 0.0
          %v910 = vmax.f32 %v883, 0.0
          %v911 = vmax.f32 %v885, 0.0
          %v912 = vmax.f32 %v888, 0.0
          %v913 = vmax.f32 %v890, 0.0
          %v914 = vmax.f32 %v893, 0.0
          %v915 = vmax.f32 %v895, 0.0
          %v916 = vmax.f32 %v898, 0.0
          %v917 = vmax.f32 %v900, 0.0
          %v918 = vpack.c.bf16 %v903, %v902
          %v919 = vpack.c.bf16 %v905, %v904
          %v920 = vpack.c.bf16 %v907, %v906
          %v921 = vpack.c.bf16 %v909, %v908
          %v922 = vpack.c.bf16 %v911, %v910
          %v923 = vpack.c.bf16 %v913, %v912
          %v924 = vpack.c.bf16 %v915, %v914
          %v925 = vpack.c.bf16 %v917, %v916
          %v926 = vld [vmem:[%s6] sm:$0xf]
          %v927 = vld [vmem:[%s6 + $0x4] sm:$0xf]
          %v928 = vld [vmem:[%s6 + $0x8] sm:$0xf]
          %v929 = vld [vmem:[%s6 + $0xc] sm:$0xf]
          %v930 = vld [vmem:[%s6 + $0x10] sm:$0xf]
          %v931 = vld [vmem:[%s6 + $0x14] sm:$0xf]
          %v932 = vld [vmem:[%s6 + $0x18] sm:$0xf]
          %v933 = vld [vmem:[%s6 + $0x1c] sm:$0xf]
          %v934 = vld [vmem:[%s6 + $0x20] sm:$0xf]
          %v935 = vld [vmem:[%s6 + $0x24] sm:$0xf]
          %v936 = vld [vmem:[%s6 + $0x28] sm:$0xf]
          %v937 = vld [vmem:[%s6 + $0x2c] sm:$0xf]
          %v938 = vld [vmem:[%s6 + $0x30] sm:$0xf]
          %v939 = vld [vmem:[%s6 + $0x34] sm:$0xf]
          %v940 = vld [vmem:[%s6 + $0x38] sm:$0xf]
          %v941 = vld [vmem:[%s6 + $0x3c] sm:$0xf]
          %v942 = vld [vmem:[%s7] sm:$0x1]
          %v944 = vperm.slane %v942, 0
          %v962 = vunpack.c.l.b16 %v926
          %v963 = vunpack.c.l.b16 %v927
          %v964 = vunpack.c.l.b16 %v928
          %v965 = vunpack.c.l.b16 %v929
          %v966 = vunpack.c.l.b16 %v930
          %v967 = vunpack.c.l.b16 %v931
          %v968 = vunpack.c.l.b16 %v932
          %v969 = vunpack.c.l.b16 %v933
          %v970 = vunpack.c.l.b16 %v934
          %v971 = vunpack.c.l.b16 %v935
          %v972 = vunpack.c.l.b16 %v936
          %v973 = vunpack.c.l.b16 %v937
          %v974 = vunpack.c.l.b16 %v938
          %v975 = vunpack.c.l.b16 %v939
          %v976 = vunpack.c.l.b16 %v940
          %v977 = vunpack.c.l.b16 %v941
          %v978 = vpack.c.b16 %v963, %v962
          %v979 = vpack.c.b16 %v965, %v964
          %v980 = vpack.c.b16 %v967, %v966
          %v981 = vpack.c.b16 %v969, %v968
          %v982 = vpack.c.b16 %v971, %v970
          %v983 = vpack.c.b16 %v973, %v972
          %v984 = vpack.c.b16 %v975, %v974
          %v985 = vpack.c.b16 %v977, %v976
          %994 = vmatpush.bf16.msra.mxu0 %v985
          %995 = vmatpush.bf16.msra.mxu0 %v984
          %996 = vmatpush.bf16.msra.mxu0 %v983
          %997 = vmatpush.bf16.msra.mxu0 %v982
          %998 = vmatpush.bf16.msra.mxu0 %v981
          %999 = vmatpush.bf16.msra.mxu0 %v980
          %1000 = vmatpush.bf16.msra.mxu0 %v979
          %1001 = vmatpush.bf16.msra.mxu0 %v978
          %1002 = vmatmul.bf16.gmra.mxu0 %v918
          %v1003 = vpop.f32.mrf.mxu0
          %v1004 = vadd.f32 %v944, %v1003
          %v1005 = vpop.f32.mrf.mxu0
          %v1006 = vadd.f32 %v944, %v1005
          %1007 = vmatmul.bf16.gmra.mxu0 %v919
          %v1008 = vpop.f32.mrf.mxu0
          %v1009 = vadd.f32 %v944, %v1008
          %v1010 = vpop.f32.mrf.mxu0
          %v1011 = vadd.f32 %v944, %v1010
          %1012 = vmatmul.bf16.gmra.mxu0 %v920
          %v1013 = vpop.f32.mrf.mxu0
          %v1014 = vadd.f32 %v944, %v1013
          %v1015 = vpop.f32.mrf.mxu0
          %v1016 = vadd.f32 %v944, %v1015
          %1017 = vmatmul.bf16.gmra.mxu0 %v921
          %v1018 = vpop.f32.mrf.mxu0
          %v1019 = vadd.f32 %v944, %v1018
          %v1020 = vpop.f32.mrf.mxu0
          %v1021 = vadd.f32 %v944, %v1020
          %1022 = vmatmul.bf16.gmra.mxu0 %v922
          %v1023 = vpop.f32.mrf.mxu0
          %v1024 = vadd.f32 %v944, %v1023
          %v1025 = vpop.f32.mrf.mxu0
          %v1026 = vadd.f32 %v944, %v1025
          %1027 = vmatmul.bf16.gmra.mxu0 %v923
          %v1028 = vpop.f32.mrf.mxu0
          %v1029 = vadd.f32 %v944, %v1028
          %v1030 = vpop.f32.mrf.mxu0
          %v1031 = vadd.f32 %v944, %v1030
          %1032 = vmatmul.bf16.gmra.mxu0 %v924
          %v1033 = vpop.f32.mrf.mxu0
          %v1034 = vadd.f32 %v944, %v1033
          %v1035 = vpop.f32.mrf.mxu0
          %v1036 = vadd.f32 %v944, %v1035
          %1037 = vmatmul.bf16.gmra.mxu0 %v925
          %v1038 = vpop.f32.mrf.mxu0
          %v1039 = vadd.f32 %v944, %v1038
          %v1040 = vpop.f32.mrf.mxu0
          %v1041 = vadd.f32 %v944, %v1040
          %1042 = vdwg.mxu0
          %v1043 = vld [vmem:[%s8] sm:$0x1]
          %v1045 = vperm.slane %v1043, 0
          %v1047 = vmul.f32 %v1004, %v1045
          %v1048 = vmul.f32 %v1006, %v1045
          %v1049 = vmul.f32 %v1009, %v1045
          %v1050 = vmul.f32 %v1011, %v1045
          %v1051 = vmul.f32 %v1014, %v1045
          %v1052 = vmul.f32 %v1016, %v1045
          %v1053 = vmul.f32 %v1019, %v1045
          %v1054 = vmul.f32 %v1021, %v1045
          %v1055 = vmul.f32 %v1024, %v1045
          %v1056 = vmul.f32 %v1026, %v1045
          %v1057 = vmul.f32 %v1029, %v1045
          %v1058 = vmul.f32 %v1031, %v1045
          %v1059 = vmul.f32 %v1034, %v1045
          %v1060 = vmul.f32 %v1036, %v1045
          %v1061 = vmul.f32 %v1039, %v1045
          %v1062 = vmul.f32 %v1041, %v1045
          %v1063 = vld [vmem:[%s9] sm:$0x1]
          %v1065 = vperm.slane %v1063, 0
          %v1067 = vadd.f32 %v1047, %v1065
          %v1068 = vadd.f32 %v1048, %v1065
          %v1069 = vadd.f32 %v1049, %v1065
          %v1070 = vadd.f32 %v1050, %v1065
          %v1071 = vadd.f32 %v1051, %v1065
          %v1072 = vadd.f32 %v1052, %v1065
          %v1073 = vadd.f32 %v1053, %v1065
          %v1074 = vadd.f32 %v1054, %v1065
          %v1075 = vadd.f32 %v1055, %v1065
          %v1076 = vadd.f32 %v1056, %v1065
          %v1077 = vadd.f32 %v1057, %v1065
          %v1078 = vadd.f32 %v1058, %v1065
          %v1079 = vadd.f32 %v1059, %v1065
          %v1080 = vadd.f32 %v1060, %v1065
          %v1081 = vadd.f32 %v1061, %v1065
          %v1082 = vadd.f32 %v1062, %v1065
          %v1083 = vmax.f32 %v1067, 0.0
          %v1084 = vmax.f32 %v1068, 0.0
          %v1085 = vmax.f32 %v1069, 0.0
          %v1086 = vmax.f32 %v1070, 0.0
          %v1087 = vmax.f32 %v1071, 0.0
          %v1088 = vmax.f32 %v1072, 0.0
          %v1089 = vmax.f32 %v1073, 0.0
          %v1090 = vmax.f32 %v1074, 0.0
          %v1091 = vmax.f32 %v1075, 0.0
          %v1092 = vmax.f32 %v1076, 0.0
          %v1093 = vmax.f32 %v1077, 0.0
          %v1094 = vmax.f32 %v1078, 0.0
          %v1095 = vmax.f32 %v1079, 0.0
          %v1096 = vmax.f32 %v1080, 0.0
          %v1097 = vmax.f32 %v1081, 0.0
          %v1098 = vmax.f32 %v1082, 0.0
          %v1099 = vadd.f32 %v1083, %v709
          %v1100 = vadd.f32 %v1084, %v710
          %v1101 = vadd.f32 %v1085, %v711
          %v1102 = vadd.f32 %v1086, %v712
          %v1103 = vadd.f32 %v1087, %v713
          %v1104 = vadd.f32 %v1088, %v714
          %v1105 = vadd.f32 %v1089, %v715
          %v1106 = vadd.f32 %v1090, %v716
          %v1107 = vadd.f32 %v1091, %v717
          %v1108 = vadd.f32 %v1092, %v718
          %v1109 = vadd.f32 %v1093, %v719
          %v1110 = vadd.f32 %v1094, %v720
          %v1111 = vadd.f32 %v1095, %v721
          %v1112 = vadd.f32 %v1096, %v722
          %v1113 = vadd.f32 %v1097, %v723
          %v1114 = vadd.f32 %v1098, %v724
          %v1115 = vpack.c.bf16 %v1099, %v1099
          %v1116 = vpack.c.bf16 %v1100, %v1100
          %v1117 = vpack.c.bf16 %v1101, %v1101
          %v1118 = vpack.c.bf16 %v1102, %v1102
          %v1119 = vpack.c.bf16 %v1103, %v1103
          %v1120 = vpack.c.bf16 %v1104, %v1104
          %v1121 = vpack.c.bf16 %v1105, %v1105
          %v1122 = vpack.c.bf16 %v1106, %v1106
          %v1123 = vpack.c.bf16 %v1107, %v1107
          %v1124 = vpack.c.bf16 %v1108, %v1108
          %v1125 = vpack.c.bf16 %v1109, %v1109
          %v1126 = vpack.c.bf16 %v1110, %v1110
          %v1127 = vpack.c.bf16 %v1111, %v1111
          %v1128 = vpack.c.bf16 %v1112, %v1112
          %v1129 = vpack.c.bf16 %v1113, %v1113
          %v1130 = vpack.c.bf16 %v1114, %v1114
          %1131 = vst [vmem:[%s442] sm:$0xf] %v1115
          %1132 = vst [vmem:[%s442 + $0x4] sm:$0xf] %v1116
          %1133 = vst [vmem:[%s442 + $0x8] sm:$0xf] %v1117
          %1134 = vst [vmem:[%s442 + $0xc] sm:$0xf] %v1118
          %1135 = vst [vmem:[%s442 + $0x10] sm:$0xf] %v1119
          %1136 = vst [vmem:[%s442 + $0x14] sm:$0xf] %v1120
          %1137 = vst [vmem:[%s442 + $0x18] sm:$0xf] %v1121
          %1138 = vst [vmem:[%s442 + $0x1c] sm:$0xf] %v1122
          %1139 = vst [vmem:[%s442 + $0x20] sm:$0xf] %v1123
          %1140 = vst [vmem:[%s442 + $0x24] sm:$0xf] %v1124
          %1141 = vst [vmem:[%s442 + $0x28] sm:$0xf] %v1125
          %1142 = vst [vmem:[%s442 + $0x2c] sm:$0xf] %v1126
          %1143 = vst [vmem:[%s442 + $0x30] sm:$0xf] %v1127
          %1144 = vst [vmem:[%s442 + $0x34] sm:$0xf] %v1128
          %1145 = vst [vmem:[%s442 + $0x38] sm:$0xf] %v1129
          %1146 = vst [vmem:[%s442 + $0x3c] sm:$0xf] %v1130
        $region72: #{gin_net_forward.5} parent=59 // pred_fallthru
          _
        %s1147 = smul.u32 16, %s28
        %p1148 = scmp.lt.s32.totalorder %s1147, 31
        %s1149 = scalar_select %p1148, %s1147, 31
        %s1150 = smul.addr %s1149, 4
        %s1151 = scalar_lea.vmem %s10, %s1150
        // Predicated region
        $region73: #{gin_net_forward.5} parent=59 // pred_check
          %p1152 = pneg %p281
        $region74: #{gin_net_forward.5} parent=59 // pred_check_branch
          %1154 = sbr.rel (%p1152) target = $region76
        $region75: #{gin_net_forward.5} parent=59 // pred_region
          %s1155 = smul.u32 16, %s28
        $region76: #{gin_net_forward.5} parent=59 // pred_fallthru
          _
      $region60: #{gin_net_forward.5} parent=5 // pred_fallthru
        _
      %p1156 = scmp.le.s32.totalorder 2, %s19
      // Predicated region
      $region77: #{gin_net_forward.5} parent=5 // pred_check
        %p1157 = pneg %p1156
      $region78: #{gin_net_forward.5} parent=5 // pred_check_branch
        %1159 = sbr.rel (%p1157) target = $region80
      $region79: #{gin_net_forward.5} parent=5 // pred_region
        %s1160 = ssub.s32 %s19, 2
        // Predicated region
        $region81: #{gin_net_forward.5} parent=79 // pred_check
          %p1161 = pneg %p287
        $region82: #{gin_net_forward.5} parent=79 // pred_check_branch
          %1163 = sbr.rel (%p1161) target = $region84
        $region83: #{gin_net_forward.5} parent=79 // pred_region
          %s1164 = smul.u32 16, %s30
          %p1165 = scmp.lt.s32.totalorder %s1164, 31
          %s1166 = scalar_select %p1165, %s1164, 31
          %s1167 = smul.addr %s1166, 4
          %s1168 = scalar_lea.vmem %s10, %s1167
        $region84: #{gin_net_forward.5} parent=79 // pred_fallthru
          _
      $region80: #{gin_net_forward.5} parent=5 // pred_fallthru
        _
    $region6: #{gin_net_forward.5} parent=1 // loop_footer
      %s23 = sadd.s32 1, %s19
    $region7: #{gin_net_forward.5} parent=1 // loop_footer_branch
      %18 = sbr.rel target = $region3
    $region8: #{gin_net_forward.5} parent=1 // loop_exit
      _
    %1169 = vsyncpa [#allocation4], 1
    %s1170 = scalar_lea.sflag [#allocation4], 1
    %1171 = vsyncpa %s1170, 1

// kernel: gin_net_forward.7
$region0: #{gin_net_forward.7}
  #allocation0 [shape = 'u32[]', space=smem, size = 0x4, offset = 0x4, fixed_abs, tag = 'smem constant byte address 0x4 - core index']
  #allocation1 [shape = 'u32[72,128]{1,0:T(1,128)}', space=vmem, size = 0x9000, scoped, tag = 'internal scratch']
  %s0 = inlined_call_operand.vmem [shape: bf16[8,256], index: 0, kind: input, shape index: {}]
  %s1 = inlined_call_operand.vmem [shape: bf16[256,384], index: 1, kind: input, shape index: {}]
  %s2 = inlined_call_operand.vmem [shape: bf16[384,128], index: 2, kind: input, shape index: {}]
  %s3 = inlined_call_operand.vmem [shape: f32[1,128], index: 3, kind: input, shape index: {}]
  %s4 = inlined_call_operand.vmem [shape: f32[8,128], index: 4, kind: output, shape index: {}]
  %s5 = sld [smem:[#allocation0]]
  $region26: #{gin_net_forward.7} parent=0
    _
  %s7 = ssub.s32 1, %s5
  %s8 = scalar_select 0, %s7, %s5
  // Predicated region
  $region2: #{gin_net_forward.7} parent=0 // pred_check
    _
  $region3: #{gin_net_forward.7} parent=0 // pred_check_branch
    %10 = sbr.rel (0) target = $region5
  $region4: #{gin_net_forward.7} parent=0 // pred_region
    _
  $region5: #{gin_net_forward.7} parent=0 // pred_fallthru
    _
  // Predicated region
  $region6: #{gin_net_forward.7} parent=0 // pred_check
    _
  $region7: #{gin_net_forward.7} parent=0 // pred_check_branch
    %12 = sbr.rel (0) target = $region9
  $region8: #{gin_net_forward.7} parent=0 // pred_region
    _
  $region9: #{gin_net_forward.7} parent=0 // pred_fallthru
    _
  // Predicated region
  $region10: #{gin_net_forward.7} parent=0 // pred_check
    _
  $region11: #{gin_net_forward.7} parent=0 // pred_check_branch
    %14 = sbr.rel (0) target = $region13
  $region12: #{gin_net_forward.7} parent=0 // pred_region
    _
  $region13: #{gin_net_forward.7} parent=0 // pred_fallthru
    _
  // Predicated region
  $region14: #{gin_net_forward.7} parent=0 // pred_check
    _
  $region15: #{gin_net_forward.7} parent=0 // pred_check_branch
    %16 = sbr.rel (0) target = $region17
  $region16: #{gin_net_forward.7} parent=0 // pred_region
    _
  $region17: #{gin_net_forward.7} parent=0 // pred_fallthru
    _
  %v17 = vld [vmem:[%s0] sm:$0xff]
  %v18 = vld [vmem:[%s1] sm:$0xff]
  %v19 = vld [vmem:[%s1 + $0x8] sm:$0xf]
  %v20 = vld [vmem:[%s1 + $0xc] sm:$0xff]
  %v21 = vld [vmem:[%s1 + $0x14] sm:$0xf]
  %v22 = vld [vmem:[%s1 + $0x18] sm:$0xff]
  %v23 = vld [vmem:[%s1 + $0x20] sm:$0xf]
  %v24 = vld [vmem:[%s1 + $0x24] sm:$0xff]
  %v25 = vld [vmem:[%s1 + $0x2c] sm:$0xf]
  %v26 = vld [vmem:[%s1 + $0x30] sm:$0xff]
  %v27 = vld [vmem:[%s1 + $0x38] sm:$0xf]
  %v28 = vld [vmem:[%s1 + $0x3c] sm:$0xff]
  %v29 = vld [vmem:[%s1 + $0x44] sm:$0xf]
  %v30 = vld [vmem:[%s1 + $0x48] sm:$0xff]
  %v31 = vld [vmem:[%s1 + $0x50] sm:$0xf]
  %v32 = vld [vmem:[%s1 + $0x54] sm:$0xff]
  %v33 = vld [vmem:[%s1 + $0x5c] sm:$0xf]
  %v34 = vld [vmem:[%s1 + $0x60] sm:$0xff]
  %v35 = vld [vmem:[%s1 + $0x68] sm:$0xf]
  %v36 = vld [vmem:[%s1 + $0x6c] sm:$0xff]
  %v37 = vld [vmem:[%s1 + $0x74] sm:$0xf]
  %v38 = vld [vmem:[%s1 + $0x78] sm:$0xff]
  %v39 = vld [vmem:[%s1 + $0x80] sm:$0xf]
  %v40 = vld [vmem:[%s1 + $0x84] sm:$0xff]
  %v41 = vld [vmem:[%s1 + $0x8c] sm:$0xf]
  %v42 = vld [vmem:[%s1 + $0x90] sm:$0xff]
  %v43 = vld [vmem:[%s1 + $0x98] sm:$0xf]
  %v44 = vld [vmem:[%s1 + $0x9c] sm:$0xff]
  %v45 = vld [vmem:[%s1 + $0xa4] sm:$0xf]
  %v46 = vld [vmem:[%s1 + $0xa8] sm:$0xff]
  %v47 = vld [vmem:[%s1 + $0xb0] sm:$0xf]
  %v48 = vld [vmem:[%s1 + $0xb4] sm:$0xff]
  %v49 = vld [vmem:[%s1 + $0xbc] sm:$0xf]
  %v50 = vld [vmem:[%s1 + $0xc0] sm:$0xff]
  %v51 = vld [vmem:[%s1 + $0xc8] sm:$0xf]
  %v52 = vld [vmem:[%s1 + $0xcc] sm:$0xff]
  %v53 = vld [vmem:[%s1 + $0xd4] sm:$0xf]
  %v54 = vld [vmem:[%s1 + $0xd8] sm:$0xff]
  %v55 = vld [vmem:[%s1 + $0xe0] sm:$0xf]
  %v56 = vld [vmem:[%s1 + $0xe4] sm:$0xff]
  %v57 = vld [vmem:[%s1 + $0xec] sm:$0xf]
  %v58 = vld [vmem:[%s1 + $0xf0] sm:$0xff]
  %v59 = vld [vmem:[%s1 + $0xf8] sm:$0xf]
  %v60 = vld [vmem:[%s1 + $0xfc] sm:$0xff]
  %v61 = vld [vmem:[%s1 + $0x104] sm:$0xf]
  %v62 = vld [vmem:[%s1 + $0x108] sm:$0xff]
  %v63 = vld [vmem:[%s1 + $0x110] sm:$0xf]
  %v64 = vld [vmem:[%s1 + $0x114] sm:$0xff]
  %v65 = vld [vmem:[%s1 + $0x11c] sm:$0xf]
  %v66 = vld [vmem:[%s1 + $0x120] sm:$0xff]
  %v67 = vld [vmem:[%s1 + $0x128] sm:$0xf]
  %v68 = vld [vmem:[%s1 + $0x12c] sm:$0xff]
  %v69 = vld [vmem:[%s1 + $0x134] sm:$0xf]
  %v70 = vld [vmem:[%s1 + $0x138] sm:$0xff]
  %v71 = vld [vmem:[%s1 + $0x140] sm:$0xf]
  %v72 = vld [vmem:[%s1 + $0x144] sm:$0xff]
  %v73 = vld [vmem:[%s1 + $0x14c] sm:$0xf]
  %v74 = vld [vmem:[%s1 + $0x150] sm:$0xff]
  %v75 = vld [vmem:[%s1 + $0x158] sm:$0xf]
  %v76 = vld [vmem:[%s1 + $0x15c] sm:$0xff]
  %v77 = vld [vmem:[%s1 + $0x164] sm:$0xf]
  %v78 = vld [vmem:[%s1 + $0x168] sm:$0xff]
  %v79 = vld [vmem:[%s1 + $0x170] sm:$0xf]
  %v80 = vld [vmem:[%s1 + $0x174] sm:$0xff]
  %v81 = vld [vmem:[%s1 + $0x17c] sm:$0xf]
  %v83 = vunpack.c.l.b16 %v17
  %v84 = vunpack.c.h.b16 %v17
  %v85 = vpack.c.b16 %v83, %v83
  %v86 = vpack.c.b16 %v84, %v84
  %v153 = vunpack.c.l.b16 %v18
  %v154 = vunpack.c.h.b16 %v18
  %v155 = vunpack.c.l.b16 %v19
  %v156 = vunpack.c.l.b16 %v20
  %v157 = vunpack.c.h.b16 %v20
  %v158 = vunpack.c.l.b16 %v21
  %v159 = vunpack.c.l.b16 %v22
  %v160 = vunpack.c.h.b16 %v22
  %v161 = vunpack.c.l.b16 %v23
  %v162 = vunpack.c.l.b16 %v24
  %v163 = vunpack.c.h.b16 %v24
  %v164 = vunpack.c.l.b16 %v25
  %v165 = vunpack.c.l.b16 %v26
  %v166 = vunpack.c.h.b16 %v26
  %v167 = vunpack.c.l.b16 %v27
  %v168 = vunpack.c.l.b16 %v28
  %v169 = vunpack.c.h.b16 %v28
  %v170 = vunpack.c.l.b16 %v29
  %v171 = vunpack.c.l.b16 %v30
  %v172 = vunpack.c.h.b16 %v30
  %v173 = vunpack.c.l.b16 %v31
  %v174 = vunpack.c.l.b16 %v32
  %v175 = vunpack.c.h.b16 %v32
  %v176 = vunpack.c.l.b16 %v33
  %v177 = vunpack.c.l.b16 %v34
  %v178 = vunpack.c.h.b16 %v34
  %v179 = vunpack.c.l.b16 %v35
  %v180 = vunpack.c.l.b16 %v36
  %v181 = vunpack.c.h.b16 %v36
  %v182 = vunpack.c.l.b16 %v37
  %v183 = vunpack.c.l.b16 %v38
  %v184 = vunpack.c.h.b16 %v38
  %v185 = vunpack.c.l.b16 %v39
  %v186 = vunpack.c.l.b16 %v40
  %v187 = vunpack.c.h.b16 %v40
  %v188 = vunpack.c.l.b16 %v41
  %v189 = vunpack.c.l.b16 %v42
  %v190 = vunpack.c.h.b16 %v42
  %v191 = vunpack.c.l.b16 %v43
  %v192 = vunpack.c.l.b16 %v44
  %v193 = vunpack.c.h.b16 %v44
  %v194 = vunpack.c.l.b16 %v45
  %v195 = vunpack.c.l.b16 %v46
  %v196 = vunpack.c.h.b16 %v46
  %v197 = vunpack.c.l.b16 %v47
  %v198 = vunpack.c.l.b16 %v48
  %v199 = vunpack.c.h.b16 %v48
  %v200 = vunpack.c.l.b16 %v49
  %v201 = vunpack.c.l.b16 %v50
  %v202 = vunpack.c.h.b16 %v50
  %v203 = vunpack.c.l.b16 %v51
  %v204 = vunpack.c.l.b16 %v52
  %v205 = vunpack.c.h.b16 %v52
  %v206 = vunpack.c.l.b16 %v53
  %v207 = vunpack.c.l.b16 %v54
  %v208 = vunpack.c.h.b16 %v54
  %v209 = vunpack.c.l.b16 %v55
  %v210 = vunpack.c.l.b16 %v56
  %v211 = vunpack.c.h.b16 %v56
  %v212 = vunpack.c.l.b16 %v57
  %v213 = vunpack.c.l.b16 %v58
  %v214 = vunpack.c.h.b16 %v58
  %v215 = vunpack.c.l.b16 %v59
  %v216 = vunpack.c.l.b16 %v60
  %v217 = vunpack.c.h.b16 %v60
  %v218 = vunpack.c.l.b16 %v61
  %v219 = vunpack.c.l.b16 %v62
  %v220 = vunpack.c.h.b16 %v62
  %v221 = vunpack.c.l.b16 %v63
  %v222 = vunpack.c.l.b16 %v64
  %v223 = vunpack.c.h.b16 %v64
  %v224 = vunpack.c.l.b16 %v65
  %v225 = vunpack.c.l.b16 %v66
  %v226 = vunpack.c.h.b16 %v66
  %v227 = vunpack.c.l.b16 %v67
  %v228 = vunpack.c.l.b16 %v68
  %v229 = vunpack.c.h.b16 %v68
  %v230 = vunpack.c.l.b16 %v69
  %v231 = vunpack.c.l.b16 %v70
  %v232 = vunpack.c.h.b16 %v70
  %v233 = vunpack.c.l.b16 %v71
  %v234 = vunpack.c.l.b16 %v72
  %v235 = vunpack.c.h.b16 %v72
  %v236 = vunpack.c.l.b16 %v73
  %v237 = vunpack.c.l.b16 %v74
  %v238 = vunpack.c.h.b16 %v74
  %v239 = vunpack.c.l.b16 %v75
  %v240 = vunpack.c.l.b16 %v76
  %v241 = vunpack.c.h.b16 %v76
  %v242 = vunpack.c.l.b16 %v77
  %v243 = vunpack.c.l.b16 %v78
  %v244 = vunpack.c.h.b16 %v78
  %v245 = vunpack.c.l.b16 %v79
  %v246 = vunpack.c.l.b16 %v80
  %v247 = vunpack.c.h.b16 %v80
  %v248 = vunpack.c.l.b16 %v81
  %v249 = vpack.c.b16 %v156, %v153
  %v250 = vpack.c.b16 %v157, %v154
  %v251 = vpack.c.b16 %v158, %v155
  %v252 = vpack.c.b16 %v162, %v159
  %v253 = vpack.c.b16 %v163, %v160
  %v254 = vpack.c.b16 %v164, %v161
  %v255 = vpack.c.b16 %v168, %v165
  %v256 = vpack.c.b16 %v169, %v166
  %v257 = vpack.c.b16 %v170, %v167
  %v258 = vpack.c.b16 %v174, %v171
  %v259 = vpack.c.b16 %v175, %v172
  %v260 = vpack.c.b16 %v176, %v173
  %v261 = vpack.c.b16 %v180, %v177
  %v262 = vpack.c.b16 %v181, %v178
  %v263 = vpack.c.b16 %v182, %v179
  %v264 = vpack.c.b16 %v186, %v183
  %v265 = vpack.c.b16 %v187, %v184
  %v266 = vpack.c.b16 %v188, %v185
  %v267 = vpack.c.b16 %v192, %v189
  %v268 = vpack.c.b16 %v193, %v190
  %v269 = vpack.c.b16 %v194, %v191
  %v270 = vpack.c.b16 %v198, %v195
  %v271 = vpack.c.b16 %v199, %v196
  %v272 = vpack.c.b16 %v200, %v197
  %v273 = vpack.c.b16 %v204, %v201
  %v274 = vpack.c.b16 %v205, %v202
  %v275 = vpack.c.b16 %v206, %v203
  %v276 = vpack.c.b16 %v210, %v207
  %v277 = vpack.c.b16 %v211, %v208
  %v278 = vpack.c.b16 %v212, %v209
  %v279 = vpack.c.b16 %v216, %v213
  %v280 = vpack.c.b16 %v217, %v214
  %v281 = vpack.c.b16 %v218, %v215
  %v282 = vpack.c.b16 %v222, %v219
  %v283 = vpack.c.b16 %v223, %v220
  %v284 = vpack.c.b16 %v224, %v221
  %v285 = vpack.c.b16 %v228, %v225
  %v286 = vpack.c.b16 %v229, %v226
  %v287 = vpack.c.b16 %v230, %v227
  %v288 = vpack.c.b16 %v234, %v231
  %v289 = vpack.c.b16 %v235, %v232
  %v290 = vpack.c.b16 %v236, %v233
  %v291 = vpack.c.b16 %v240, %v237
  %v292 = vpack.c.b16 %v241, %v238
  %v293 = vpack.c.b16 %v242, %v239
  %v294 = vpack.c.b16 %v246, %v243
  %v295 = vpack.c.b16 %v247, %v244
  %v296 = vpack.c.b16 %v248, %v245
  %345 = vmatpush.bf16.msra.mxu0 %v270
  %346 = vmatpush.bf16.msra.mxu0 %v267
  %347 = vmatpush.bf16.msra.mxu0 %v264
  %348 = vmatpush.bf16.msra.mxu0 %v261
  %349 = vmatpush.bf16.msra.mxu0 %v258
  %350 = vmatpush.bf16.msra.mxu0 %v255
  %351 = vmatpush.bf16.msra.mxu0 %v252
  %352 = vmatpush.bf16.msra.mxu0 %v249
  %353 = vmatmul.bf16.gmra.mxu0 %v85
  %v354 = vpop.f32.mrf.mxu0
  %v355 = vadd.f32 0.0, %v354
  %v356 = vpop.f32.mrf.mxu0
  %357 = vdwg.mxu0
  %358 = vmatpush.bf16.msra.mxu0 %v294
  %359 = vmatpush.bf16.msra.mxu0 %v291
  %360 = vmatpush.bf16.msra.mxu0 %v288
  %361 = vmatpush.bf16.msra.mxu0 %v285
  %362 = vmatpush.bf16.msra.mxu0 %v282
  %363 = vmatpush.bf16.msra.mxu0 %v279
  %364 = vmatpush.bf16.msra.mxu0 %v276
  %365 = vmatpush.bf16.msra.mxu0 %v273
  %366 = vmatmul.bf16.gmra.mxu0 %v86
  %v367 = vpop.f32.mrf.mxu0
  %v368 = vadd.f32 %v355, %v367
  %v369 = vpop.f32.mrf.mxu0
  %370 = vdwg.mxu0
  %371 = vmatpush.bf16.msra.mxu0 %v271
  %372 = vmatpush.bf16.msra.mxu0 %v268
  %373 = vmatpush.bf16.msra.mxu0 %v265
  %374 = vmatpush.bf16.msra.mxu0 %v262
  %375 = vmatpush.bf16.msra.mxu0 %v259
  %376 = vmatpush.bf16.msra.mxu0 %v256
  %377 = vmatpush.bf16.msra.mxu0 %v253
  %378 = vmatpush.bf16.msra.mxu0 %v250
  %379 = vmatmul.bf16.gmra.mxu0 %v85
  %v380 = vpop.f32.mrf.mxu0
  %v381 = vadd.f32 0.0, %v380
  %v382 = vpop.f32.mrf.mxu0
  %383 = vdwg.mxu0
  %384 = vmatpush.bf16.msra.mxu0 %v295
  %385 = vmatpush.bf16.msra.mxu0 %v292
  %386 = vmatpush.bf16.msra.mxu0 %v289
  %387 = vmatpush.bf16.msra.mxu0 %v286
  %388 = vmatpush.bf16.msra.mxu0 %v283
  %389 = vmatpush.bf16.msra.mxu0 %v280
  %390 = vmatpush.bf16.msra.mxu0 %v277
  %391 = vmatpush.bf16.msra.mxu0 %v274
  %392 = vmatmul.bf16.gmra.mxu0 %v86
  %v393 = vpop.f32.mrf.mxu0
  %v394 = vadd.f32 %v381, %v393
  %v395 = vpop.f32.mrf.mxu0
  %396 = vdwg.mxu0
  %397 = vmatpush.bf16.msra.mxu0 %v272
  %398 = vmatpush.bf16.msra.mxu0 %v269
  %399 = vmatpush.bf16.msra.mxu0 %v266
  %400 = vmatpush.bf16.msra.mxu0 %v263
  %401 = vmatpush.bf16.msra.mxu0 %v260
  %402 = vmatpush.bf16.msra.mxu0 %v257
  %403 = vmatpush.bf16.msra.mxu0 %v254
  %404 = vmatpush.bf16.msra.mxu0 %v251
  %405 = vmatmul.bf16.gmra.mxu0 %v85
  %v406 = vpop.f32.mrf.mxu0
  %v407 = vadd.f32 0.0, %v406
  %v408 = vpop.f32.mrf.mxu0
  %409 = vdwg.mxu0
  %410 = vmatpush.bf16.msra.mxu0 %v296
  %411 = vmatpush.bf16.msra.mxu0 %v293
  %412 = vmatpush.bf16.msra.mxu0 %v290
  %413 = vmatpush.bf16.msra.mxu0 %v287
  %414 = vmatpush.bf16.msra.mxu0 %v284
  %415 = vmatpush.bf16.msra.mxu0 %v281
  %416 = vmatpush.bf16.msra.mxu0 %v278
  %417 = vmatpush.bf16.msra.mxu0 %v275
  %418 = vmatmul.bf16.gmra.mxu0 %v86
  %v419 = vpop.f32.mrf.mxu0
  %v420 = vadd.f32 %v407, %v419
  %v421 = vpop.f32.mrf.mxu0
  %422 = vdwg.mxu0
  %v423 = vpack.c.bf16 %v368, %v368
  %v424 = vpack.c.bf16 %v394, %v394
  %v425 = vpack.c.bf16 %v420, %v420
  %v426 = vld [vmem:[%s2] sm:$0xf]
  %v427 = vld [vmem:[%s2 + $0x4] sm:$0xf]
  %v428 = vld [vmem:[%s2 + $0x8] sm:$0xf]
  %v429 = vld [vmem:[%s2 + $0xc] sm:$0xf]
  %v430 = vld [vmem:[%s2 + $0x10] sm:$0xf]
  %v431 = vld [vmem:[%s2 + $0x14] sm:$0xf]
  %v432 = vld [vmem:[%s2 + $0x18] sm:$0xf]
  %v433 = vld [vmem:[%s2 + $0x1c] sm:$0xf]
  %v434 = vld [vmem:[%s2 + $0x20] sm:$0xf]
  %v435 = vld [vmem:[%s2 + $0x24] sm:$0xf]
  %v436 = vld [vmem:[%s2 + $0x28] sm:$0xf]
  %v437 = vld [vmem:[%s2 + $0x2c] sm:$0xf]
  %v438 = vld [vmem:[%s2 + $0x30] sm:$0xf]
  %v439 = vld [vmem:[%s2 + $0x34] sm:$0xf]
  %v440 = vld [vmem:[%s2 + $0x38] sm:$0xf]
  %v441 = vld [vmem:[%s2 + $0x3c] sm:$0xf]
  %v442 = vld [vmem:[%s2 + $0x40] sm:$0xf]
  %v443 = vld [vmem:[%s2 + $0x44] sm:$0xf]
  %v444 = vld [vmem:[%s2 + $0x48] sm:$0xf]
  %v445 = vld [vmem:[%s2 + $0x4c] sm:$0xf]
  %v446 = vld [vmem:[%s2 + $0x50] sm:$0xf]
  %v447 = vld [vmem:[%s2 + $0x54] sm:$0xf]
  %v448 = vld [vmem:[%s2 + $0x58] sm:$0xf]
  %v449 = vld [vmem:[%s2 + $0x5c] sm:$0xf]
  %v450 = vld [vmem:[%s2 + $0x60] sm:$0xf]
  %v451 = vld [vmem:[%s2 + $0x64] sm:$0xf]
  %v452 = vld [vmem:[%s2 + $0x68] sm:$0xf]
  %v453 = vld [vmem:[%s2 + $0x6c] sm:$0xf]
  %v454 = vld [vmem:[%s2 + $0x70] sm:$0xf]
  %v455 = vld [vmem:[%s2 + $0x74] sm:$0xf]
  %v456 = vld [vmem:[%s2 + $0x78] sm:$0xf]
  %v457 = vld [vmem:[%s2 + $0x7c] sm:$0xf]
  %v458 = vld [vmem:[%s2 + $0x80] sm:$0xf]
  %v459 = vld [vmem:[%s2 + $0x84] sm:$0xf]
  %v460 = vld [vmem:[%s2 + $0x88] sm:$0xf]
  %v461 = vld [vmem:[%s2 + $0x8c] sm:$0xf]
  %v462 = vld [vmem:[%s2 + $0x90] sm:$0xf]
  %v463 = vld [vmem:[%s2 + $0x94] sm:$0xf]
  %v464 = vld [vmem:[%s2 + $0x98] sm:$0xf]
  %v465 = vld [vmem:[%s2 + $0x9c] sm:$0xf]
  %v466 = vld [vmem:[%s2 + $0xa0] sm:$0xf]
  %v467 = vld [vmem:[%s2 + $0xa4] sm:$0xf]
  %v468 = vld [vmem:[%s2 + $0xa8] sm:$0xf]
  %v469 = vld [vmem:[%s2 + $0xac] sm:$0xf]
  %v470 = vld [vmem:[%s2 + $0xb0] sm:$0xf]
  %v471 = vld [vmem:[%s2 + $0xb4] sm:$0xf]
  %v472 = vld [vmem:[%s2 + $0xb8] sm:$0xf]
  %v473 = vld [vmem:[%s2 + $0xbc] sm:$0xf]
  %v474 = vld [vmem:[%s3] sm:$0x1]
  %v476 = vperm.slane %v474, 0
  %v526 = vunpack.c.l.b16 %v426
  %v527 = vunpack.c.l.b16 %v427
  %v528 = vunpack.c.l.b16 %v428
  %v529 = vunpack.c.l.b16 %v429
  %v530 = vunpack.c.l.b16 %v430
  %v531 = vunpack.c.l.b16 %v431
  %v532 = vunpack.c.l.b16 %v432
  %v533 = vunpack.c.l.b16 %v433
  %v534 = vunpack.c.l.b16 %v434
  %v535 = vunpack.c.l.b16 %v435
  %v536 = vunpack.c.l.b16 %v436
  %v537 = vunpack.c.l.b16 %v437
  %v538 = vunpack.c.l.b16 %v438
  %v539 = vunpack.c.l.b16 %v439
  %v540 = vunpack.c.l.b16 %v440
  %v541 = vunpack.c.l.b16 %v441
  %v542 = vunpack.c.l.b16 %v442
  %v543 = vunpack.c.l.b16 %v443
  %v544 = vunpack.c.l.b16 %v444
  %v545 = vunpack.c.l.b16 %v445
  %v546 = vunpack.c.l.b16 %v446
  %v547 = vunpack.c.l.b16 %v447
  %v548 = vunpack.c.l.b16 %v448
  %v549 = vunpack.c.l.b16 %v449
  %v550 = vunpack.c.l.b16 %v450
  %v551 = vunpack.c.l.b16 %v451
  %v552 = vunpack.c.l.b16 %v452
  %v553 = vunpack.c.l.b16 %v453
  %v554 = vunpack.c.l.b16 %v454
  %v555 = vunpack.c.l.b16 %v455
  %v556 = vunpack.c.l.b16 %v456
  %v557 = vunpack.c.l.b16 %v457
  %v558 = vunpack.c.l.b16 %v458
  %v559 = vunpack.c.l.b16 %v459
  %v560 = vunpack.c.l.b16 %v460
  %v561 = vunpack.c.l.b16 %v461
  %v562 = vunpack.c.l.b16 %v462
  %v563 = vunpack.c.l.b16 %v463
  %v564 = vunpack.c.l.b16 %v464
  %v565 = vunpack.c.l.b16 %v465
  %v566 = vunpack.c.l.b16 %v466
  %v567 = vunpack.c.l.b16 %v467
  %v568 = vunpack.c.l.b16 %v468
  %v569 = vunpack.c.l.b16 %v469
  %v570 = vunpack.c.l.b16 %v470
  %v571 = vunpack.c.l.b16 %v471
  %v572 = vunpack.c.l.b16 %v472
  %v573 = vunpack.c.l.b16 %v473
  %v574 = vpack.c.b16 %v527, %v526
  %v575 = vpack.c.b16 %v529, %v528
  %v576 = vpack.c.b16 %v531, %v530
  %v577 = vpack.c.b16 %v533, %v532
  %v578 = vpack.c.b16 %v535, %v534
  %v579 = vpack.c.b16 %v537, %v536
  %v580 = vpack.c.b16 %v539, %v538
  %v581 = vpack.c.b16 %v541, %v540
  %v582 = vpack.c.b16 %v543, %v542
  %v583 = vpack.c.b16 %v545, %v544
  %v584 = vpack.c.b16 %v547, %v546
  %v585 = vpack.c.b16 %v549, %v548
  %v586 = vpack.c.b16 %v551, %v550
  %v587 = vpack.c.b16 %v553, %v552
  %v588 = vpack.c.b16 %v555, %v554
  %v589 = vpack.c.b16 %v557, %v556
  %v590 = vpack.c.b16 %v559, %v558
  %v591 = vpack.c.b16 %v561, %v560
  %v592 = vpack.c.b16 %v563, %v562
  %v593 = vpack.c.b16 %v565, %v564
  %v594 = vpack.c.b16 %v567, %v566
  %v595 = vpack.c.b16 %v569, %v568
  %v596 = vpack.c.b16 %v571, %v570
  %v597 = vpack.c.b16 %v573, %v572
  %622 = vmatpush.bf16.msra.mxu0 %v581
  %623 = vmatpush.bf16.msra.mxu0 %v580
  %624 = vmatpush.bf16.msra.mxu0 %v579
  %625 = vmatpush.bf16.msra.mxu0 %v578
  %626 = vmatpush.bf16.msra.mxu0 %v577
  %627 = vmatpush.bf16.msra.mxu0 %v576
  %628 = vmatpush.bf16.msra.mxu0 %v575
  %629 = vmatpush.bf16.msra.mxu0 %v574
  %630 = vmatmul.bf16.gmra.mxu0 %v423
  %v631 = vpop.f32.mrf.mxu0
  %v632 = vadd.f32 %v476, %v631
  %v633 = vpop.f32.mrf.mxu0
  %634 = vdwg.mxu0
  %635 = vmatpush.bf16.msra.mxu0 %v589
  %636 = vmatpush.bf16.msra.mxu0 %v588
  %637 = vmatpush.bf16.msra.mxu0 %v587
  %638 = vmatpush.bf16.msra.mxu0 %v586
  %639 = vmatpush.bf16.msra.mxu0 %v585
  %640 = vmatpush.bf16.msra.mxu0 %v584
  %641 = vmatpush.bf16.msra.mxu0 %v583
  %642 = vmatpush.bf16.msra.mxu0 %v582
  %643 = vmatmul.bf16.gmra.mxu0 %v424
  %v644 = vpop.f32.mrf.mxu0
  %v645 = vadd.f32 %v632, %v644
  %v646 = vpop.f32.mrf.mxu0
  %647 = vdwg.mxu0
  %648 = vmatpush.bf16.msra.mxu0 %v597
  %649 = vmatpush.bf16.msra.mxu0 %v596
  %650 = vmatpush.bf16.msra.mxu0 %v595
  %651 = vmatpush.bf16.msra.mxu0 %v594
  %652 = vmatpush.bf16.msra.mxu0 %v593
  %653 = vmatpush.bf16.msra.mxu0 %v592
  %654 = vmatpush.bf16.msra.mxu0 %v591
  %655 = vmatpush.bf16.msra.mxu0 %v590
  %656 = vmatmul.bf16.gmra.mxu0 %v425
  %v657 = vpop.f32.mrf.mxu0
  %v658 = vadd.f32 %v645, %v657
  %v659 = vpop.f32.mrf.mxu0
  %660 = vdwg.mxu0
  %661 = vst [vmem:[%s4] sm:$0xff] %v658
  // Predicated region
  $region18: #{gin_net_forward.7} parent=0 // pred_check
    _
  $region19: #{gin_net_forward.7} parent=0 // pred_check_branch
    %663 = sbr.rel (0) target = $region21
  $region20: #{gin_net_forward.7} parent=0 // pred_region
    _
  $region21: #{gin_net_forward.7} parent=0 // pred_fallthru
    _
  // Predicated region
  $region22: #{gin_net_forward.7} parent=0 // pred_check
    _
  $region23: #{gin_net_forward.7} parent=0 // pred_check_branch
    %665 = sbr.rel (0) target = $region25
  $region24: #{gin_net_forward.7} parent=0 // pred_region
    _
  $region25: #{gin_net_forward.7} parent=0 // pred_fallthru
    _

</llo_original>
